<compile_context>
chip_gen: v6e
topology: v6e:2x2x1
jax: 0.10.0
libtpu: 0.0.40
codegen_flags: <defaults>
</compile_context>

<pallas_src>
import numpy as np

import jax
import jax.numpy as jnp
from jax import lax
from jax.experimental import pallas as pl
from jax.experimental.pallas import tpu as pltpu


# ---------------------------------------------------------------------------
# Host-side (static, numpy) building blocks.
# ---------------------------------------------------------------------------

def _interp_pad_matrix(n_in, pad_before, n_total):
    """(n_total, n_in) matrix: bilinear 2x upsample (align_corners=True) of n_in samples
    embedded at row offset `pad_before`; all other rows are zero (== F.pad value=0)."""
    n_up = 2 * n_in
    m = np.zeros((n_total, n_in), dtype=np.float32)
    if n_in == 1:
        m[pad_before:pad_before + n_up, 0] = 1.0
        return m
    pos = np.arange(n_up, dtype=np.float64) * (n_in - 1) / (n_up - 1)
    lo = np.clip(np.floor(pos).astype(np.int64), 0, n_in - 2)
    frac = (pos - lo).astype(np.float32)
    rows = pad_before + np.arange(n_up)
    m[rows, lo] += 1.0 - frac
    m[rows, lo + 1] += frac
    return m


def _reflect_index(n, pad):
    """Source index for each position of a length n+2*pad 'reflect'-padded axis."""
    idx = np.arange(-pad, n + pad)
    idx = np.abs(idx)
    idx = np.where(idx > n - 1, 2 * (n - 1) - idx, idx)
    return idx


def _dh_stack(h, pad=3):
    """(7h, h) stack of 0/1 selectors: block dy picks rows reflect(i+dy) of the image."""
    rh = _reflect_index(h, pad)
    k = 2 * pad + 1
    m = np.zeros((k * h, h), dtype=np.float32)
    rows = np.arange(h)
    for dy in range(k):
        m[dy * h + rows, rh[rows + dy]] = 1.0
    return m


def _sw_stack(w, pad=3):
    """(7, w, w) stack of 0/1 selectors: Sw[dx, src, out] = [src == reflect(out+dx)]."""
    rw = _reflect_index(w, pad)
    k = 2 * pad + 1
    s = np.zeros((k, w, w), dtype=np.float32)
    cols = np.arange(w)
    for dx in range(k):
        s[dx, rw[cols + dx], cols] = 1.0
    return s


# ---------------------------------------------------------------------------
# Fused kernel: one batch element per grid step, everything in (H, C*W) layout.
# ---------------------------------------------------------------------------

def _up_kernel(x1_ref, x2_ref, uh_ref, kup_ref, ups_ref,
               kg_ref, bg_ref, kl1_ref, bl1_ref, kl2_ref, bl2_ref,
               kca_ref, kcb_ref, bc_ref,
               dh_ref, mw_ref, t1_ref, kp1_ref, bp1_ref, kp2_ref, t2_ref,
               o_ref):
    f32 = jnp.float32
    H = o_ref.shape[1]

    def dot(a, b):
        return jnp.dot(a, b, preferred_element_type=f32)

    def gelu(v):
        # TODO(synk): PyTorch nn.GELU() defaults to the exact erf form; the tanh
        # approximation (max abs deviation ~1e-3) is used to stay on Mosaic-supported
        # transcendentals.  The in-script reference uses the same approximation.
        return jax.nn.gelu(v, approximate=True)

    x1t = x1_ref[0].astype(f32)                          # (H1, C*W1)
    x2t = x2_ref[0].astype(f32)                          # (H,  C*W)

    # Stage 1: BatchNorm (folded) + bilinear 2x upsample + zero pad == two MXU dots
    # plus a precomputed additive plane (the BN shift pushed through upsample+pad).
    x1_up = dot(uh_ref[...], dot(x1t, kup_ref[...])) + ups_ref[...]      # (H, C*W)

    # Stage 2: gating fusion with x2 (all channel mixes are single dots).
    g1 = dot(x1_up, kg_ref[0]) + bg_ref[0]
    g2 = dot(x1_up, kg_ref[1]) + bg_ref[1]
    g3 = dot(x1_up, kg_ref[2]) + bg_ref[2]
    l1 = dot(g1 + x2t, kl1_ref[...]) + bl1_ref[...]
    x2g = jax.nn.sigmoid(l1) * x2t + jax.nn.sigmoid(g2) * jnp.tanh(g3)
    x2o = dot(x2g, kl2_ref[...]) + bl2_ref[...]

    # Stage 3: 1x1 conv over torch.cat([x2, x1], dim=1) == two dots (split weight).
    y = dot(x2o, kca_ref[...]) + dot(x1_up, kcb_ref[...]) + bc_ref[...]  # (H, dim*W)

    # Stage 4: ConvNeXt block.
    # Depthwise 7x7 reflect conv = 1 dot (stacked dy-shift/reflect selector) + 7 dots
    # against block-diagonal banded weight matrices (dx taps + W-reflect + BN1 scale).
    l_all = dot(dh_ref[...], y)                          # (7H, dim*W)
    acc = dot(l_all[0:H, :], mw_ref[0])
    for dy in range(1, 7):
        acc = acc + dot(l_all[dy * H:(dy + 1) * H, :], mw_ref[dy])
    z = acc + t1_ref[...]                                # + dw bias + BatchNorm1 (folded)
    hid = gelu(dot(z, kp1_ref[...]) + bp1_ref[...])      # pwconv1 + GELU
    q = dot(hid, kp2_ref[...]) + t2_ref[...]             # pwconv2 + BatchNorm2 (folded)
    o_ref[0] = gelu(y + q).astype(o_ref.dtype)           # GELU(residual + x)


# ---------------------------------------------------------------------------
# Wrapper: layout plumbing + kron'd weight construction (all outside the kernel).
# ---------------------------------------------------------------------------

def up_forward(x1, x2, params, eps=1e-5):
    """x1: (B, C, H1, W1), x2: (B, C, H, W) with C = in_channels // 2."""
    B, C, H1, W1 = x1.shape
    B2, C2, H, W = x2.shape
    assert B2 == B and C2 == C
    dim = params['w_c1x1'].shape[0]                      # out_channels
    hidden = params['w_pw1'].shape[0]                    # 4 * dim
    diff_y, diff_x = H - 2 * H1, W - 2 * W1
    assert diff_y >= 0 and diff_x >= 0, "x2 must be at least as large as the upsampled x1"
    assert H >= 4 and W >= 4, "reflect pad of 3 needs spatial size >= 4"

    f32 = jnp.float32
    eye_w = jnp.eye(W, dtype=f32)

    def fold_bn(g, b, m, v):
        a = g / jnp.sqrt(v + eps)
        return a.astype(f32), (b - m * a).astype(f32)

    bn_a, bn_b = fold_bn(params['bn_gamma'], params['bn_beta'],
                         params['bn_mean'], params['bn_var'])
    n1_a, n1_b = fold_bn(params['n1_gamma'], params['n1_beta'],
                         params['n1_mean'], params['n1_var'])
    n2_a, n2_b = fold_bn(params['n2_gamma'], params['n2_beta'],
                         params['n2_mean'], params['n2_var'])

    def klin(wmat):
        # Channel Linear in the (H, C*W) lane-interleaved layout: right-multiply
        # by kron(W^T, I_W) of shape (Cin*W, Cout*W).
        return jnp.kron(wmat.astype(f32).T, eye_w)

    def lvec(v):
        # Per-channel vector -> lane vector in the interleaved layout, shape (1, C*W).
        return jnp.repeat(v.astype(f32), W)[None, :]

    # Stage-1 operators (static upsample structure x traced BN parameters).
    uh_np = _interp_pad_matrix(H1, diff_y // 2, H)       # (H, H1)
    uw_np = _interp_pad_matrix(W1, diff_x // 2, W)       # (W, W1)
    uh = jnp.asarray(uh_np)
    kup = jnp.kron(jnp.diag(bn_a), jnp.asarray(uw_np.T))                 # (C*W1, C*W)
    ups = jnp.einsum('h,c,w->hcw', jnp.asarray(uh_np.sum(1)), bn_b,
                     jnp.asarray(uw_np.sum(1))).reshape(H, C * W)        # (H, C*W)

    # Stage-2/3 channel-mixing operators.
    wg = params['w_gate'].astype(f32)
    bg_full = params['b_gate'].astype(f32)
    kg = jnp.stack([klin(wg[k * C:(k + 1) * C]) for k in range(3)])      # (3, C*W, C*W)
    bg = jnp.stack([jnp.repeat(bg_full[k * C:(k + 1) * C], W)
                    for k in range(3)])[:, None, :]                      # (3, 1, C*W)
    kl1, bl1 = klin(params['w_lin1']), lvec(params['b_lin1'])
    kl2, bl2 = klin(params['w_lin2']), lvec(params['b_lin2'])
    kca = klin(params['w_c1x1'][:, :C])                                  # x2 half
    kcb = klin(params['w_c1x1'][:, C:])                                  # x1 half
    bc = lvec(params['b_c1x1'])

    # Stage-4 depthwise operators: reflect pad + 7x7 taps as (1 + 7) matrices.
    dh = jnp.asarray(_dh_stack(H, 3))                                    # (7H, H)
    sw = jnp.asarray(_sw_stack(W, 3))                                    # (7, W, W)
    wdw = params['w_dw'].reshape(dim, 7, 7).astype(f32)
    cw = jnp.einsum('odx,xsw->odsw', wdw, sw)                            # (dim, 7, W, W)
    cw = cw * n1_a[:, None, None, None]                                  # fold BN1 scale
    mw = jnp.einsum('odsw,op->dospw', cw, jnp.eye(dim, dtype=f32))
    mw = mw.reshape(7, dim * W, dim * W)                                 # block-diag / dy
    t1 = lvec(params['b_dw'] * n1_a + n1_b)
    kp1, bp1 = klin(params['w_pw1']), lvec(params['b_pw1'])
    kp2 = klin(params['w_pw2'] * n2_a[:, None])                          # fold BN2 scale
    t2 = lvec(params['b_pw2'] * n2_a + n2_b)

    # Lane-interleaved inputs: element [b, h, c*W + w] = x[b, c, h, w] (wrapper plumbing).
    x1t = jnp.transpose(x1, (0, 2, 1, 3)).reshape(B, H1, C * W1).astype(f32)
    x2t = jnp.transpose(x2, (0, 2, 1, 3)).reshape(B, H, C * W).astype(f32)

    def wspec(shape):
        zeros = (0,) * len(shape)
        return pl.BlockSpec(shape, lambda n, z=zeros: z)

    in_specs = [
        pl.BlockSpec((1, H1, C * W1), lambda n: (n, 0, 0)),   # x1t
        pl.BlockSpec((1, H, C * W), lambda n: (n, 0, 0)),     # x2t
        wspec((H, H1)),                                       # uh
        wspec((C * W1, C * W)),                               # kup
        wspec((H, C * W)),                                    # ups
        wspec((3, C * W, C * W)),                             # kg
        wspec((3, 1, C * W)),                                 # bg
        wspec((C * W, C * W)), wspec((1, C * W)),             # kl1, bl1
        wspec((C * W, C * W)), wspec((1, C * W)),             # kl2, bl2
        wspec((C * W, dim * W)), wspec((C * W, dim * W)),     # kca, kcb
        wspec((1, dim * W)),                                  # bc
        wspec((7 * H, H)),                                    # dh
        wspec((7, dim * W, dim * W)),                         # mw
        wspec((1, dim * W)),                                  # t1
        wspec((dim * W, hidden * W)), wspec((1, hidden * W)), # kp1, bp1
        wspec((hidden * W, dim * W)), wspec((1, dim * W)),    # kp2, t2
    ]

    out_t = pl.pallas_call(
        _up_kernel,
        out_shape=jax.ShapeDtypeStruct((B, H, dim * W), jnp.float32),
        grid_spec=pltpu.PrefetchScalarGridSpec(
            num_scalar_prefetch=0,
            grid=(B,),
            in_specs=in_specs,
            out_specs=pl.BlockSpec((1, H, dim * W), lambda n: (n, 0, 0)),
        ),
        compiler_params=pltpu.CompilerParams(
            dimension_semantics=("parallel",),
            vmem_limit_bytes=32 * 1024 * 1024,
        ),
    )(x1t, x2t, uh, kup, ups, kg, bg, kl1, bl1, kl2, bl2,
      kca, kcb, bc, dh, mw, t1, kp1, bp1, kp2, t2)

    # (B, H, dim*W) -> (B, dim, H, W): small wrapper-side reshape/transpose.
    return jnp.transpose(out_t.reshape(B, H, dim, W), (0, 2, 1, 3))


# ---------------------------------------------------------------------------
# Pure-JAX reference (independent computation path) and parameter init.
# ---------------------------------------------------------------------------

def _reference_forward(x1, x2, p, eps=1e-5):
    B, C, H1, W1 = x1.shape
    H, W = x2.shape[2], x2.shape[3]
    dim = p['w_c1x1'].shape[0]
    gelu = lambda v: jax.nn.gelu(v, approximate=True)

    def fold_bn(g, b, m, v):
        a = g / jnp.sqrt(v + eps)
        return a, b - m * a

    a0, b0 = fold_bn(p['bn_gamma'], p['bn_beta'], p['bn_mean'], p['bn_var'])
    x1n = x1 * a0[None, :, None, None] + b0[None, :, None, None]

    # Bilinear 2x upsample, align_corners=True (gather + lerp path).
    h, w = H1, W1
    ph = jnp.arange(2 * h, dtype=jnp.float32) * (h - 1) / (2 * h - 1)
    pw = jnp.arange(2 * w, dtype=jnp.float32) * (w - 1) / (2 * w - 1)
    lo_h = jnp.clip(jnp.floor(ph).astype(jnp.int32), 0, h - 2)
    lo_w = jnp.clip(jnp.floor(pw).astype(jnp.int32), 0, w - 2)
    fh = ph - lo_h.astype(jnp.float32)
    fw = pw - lo_w.astype(jnp.float32)
    t = (x1n[:, :, lo_h, :] * (1 - fh)[None, None, :, None]
         + x1n[:, :, lo_h + 1, :] * fh[None, None, :, None])
    up = (t[:, :, :, lo_w] * (1 - fw)[None, None, None, :]
          + t[:, :, :, lo_w + 1] * fw[None, None, None, :])
    dy, dx = H - 2 * h, W - 2 * w
    up = jnp.pad(up, ((0, 0), (0, 0), (dy // 2, dy - dy // 2), (dx // 2, dx - dx // 2)))

    gate = jnp.einsum('nchw,kc->nkhw', up, p['w_gate']) + p['b_gate'][None, :, None, None]
    g1, g2, g3 = gate[:, 0:C], gate[:, C:2 * C], gate[:, 2 * C:3 * C]
    l1 = jnp.einsum('nchw,kc->nkhw', g1 + x2, p['w_lin1']) + p['b_lin1'][None, :, None, None]
    x2n = jax.nn.sigmoid(l1) * x2 + jax.nn.sigmoid(g2) * jnp.tanh(g3)
    x2l = jnp.einsum('nchw,kc->nkhw', x2n, p['w_lin2']) + p['b_lin2'][None, :, None, None]

    cat = jnp.concatenate([x2l, up], axis=1)
    y = jnp.einsum('nchw,oc->nohw', cat, p['w_c1x1']) + p['b_c1x1'][None, :, None, None]

    a1, b1 = fold_bn(p['n1_gamma'], p['n1_beta'], p['n1_mean'], p['n1_var'])
    a2, b2 = fold_bn(p['n2_gamma'], p['n2_beta'], p['n2_mean'], p['n2_var'])

    ypad = jnp.pad(y, ((0, 0), (0, 0), (3, 3), (3, 3)), mode='reflect')
    dw = lax.conv_general_dilated(
        ypad, p['w_dw'].reshape(dim, 1, 7, 7), (1, 1), 'VALID',
        feature_group_count=dim, dimension_numbers=('NCHW', 'OIHW', 'NCHW'))
    dw = dw + p['b_dw'][None, :, None, None]
    z = dw * a1[None, :, None, None] + b1[None, :, None, None]
    hid = gelu(jnp.einsum('nchw,kc->nkhw', z, p['w_pw1']) + p['b_pw1'][None, :, None, None])
    pw2 = jnp.einsum('nchw,kc->nkhw', hid, p['w_pw2']) + p['b_pw2'][None, :, None, None]
    q = pw2 * a2[None, :, None, None] + b2[None, :, None, None]
    return gelu(y + q)


def _init_params(key, in_channels, out_channels):
    C = in_channels // 2
    dim = out_channels
    keys = iter(jax.random.split(key, 32))

    def nrm(shape, scale):
        return scale * jax.random.normal(next(keys), shape, dtype=jnp.float32)

    p = {}

    def bn(prefix, n):
        p[prefix + '_gamma'] = 1.0 + 0.1 * jax.random.normal(next(keys), (n,), jnp.float32)
        p[prefix + '_beta'] = 0.1 * jax.random.normal(next(keys), (n,), jnp.float32)
        p[prefix + '_mean'] = 0.1 * jax.random.normal(next(keys), (n,), jnp.float32)
        p[prefix + '_var'] = 1.0 + 0.1 * jnp.abs(jax.random.normal(next(keys), (n,), jnp.float32))

    bn('bn', C)                                          # Up.norm
    p['w_gate'] = nrm((3 * C, C), 0.3); p['b_gate'] = nrm((3 * C,), 0.1)
    p['w_lin1'] = nrm((C, C), 0.3);     p['b_lin1'] = nrm((C,), 0.1)
    p['w_lin2'] = nrm((C, C), 0.3);     p['b_lin2'] = nrm((C,), 0.1)
    p['w_c1x1'] = nrm((dim, 2 * C), 0.3); p['b_c1x1'] = nrm((dim,), 0.1)
    p['w_dw'] = nrm((dim, 7, 7), 0.1);  p['b_dw'] = nrm((dim,), 0.1)
    bn('n1', dim)                                        # Conv.norm1
    p['w_pw1'] = nrm((4 * dim, dim), 0.2); p['b_pw1'] = nrm((4 * dim,), 0.1)
    p['w_pw2'] = nrm((dim, 4 * dim), 0.2); p['b_pw2'] = nrm((dim,), 0.1)
    bn('n2', dim)                                        # Conv.norm2
    return p


if __name__ == "__main__":
    B = 2
    in_channels, out_channels = 8, 8
    C = in_channels // 2                  # 4
    H1 = W1 = 8                           # x1 spatial; upsampled 2x -> 16
    H = W = 16                            # x2 spatial

    key = jax.random.PRNGKey(0)
    k_x1, k_x2, k_p = jax.random.split(key, 3)
    x1 = jax.random.normal(k_x1, (B, C, H1, W1), dtype=jnp.float32)
    x2 = jax.random.normal(k_x2, (B, C, H, W), dtype=jnp.float32)
    params = _init_params(k_p, in_channels, out_channels)

    out = up_forward(x1, x2, params)
    out = jax.block_until_ready(out)

    ref = _reference_forward(x1, x2, params)
    assert out.shape == (B, out_channels, H, W), out.shape
    max_err = float(jnp.max(jnp.abs(out - ref)))
    assert jnp.allclose(out, ref, atol=2e-3, rtol=2e-3), \
        f"mismatch vs reference, max abs err {max_err}"

    print("KERNEL_OK")
</pallas_src>

<mosaic_0001>
module attributes {stable_mosaic.version = 11 : i64} {
  func.func @_up_kernel(%arg0: i32, %arg1: memref<1x8x32xf32, #tpu.memory_space<vmem>>, %arg2: memref<1x16x64xf32, #tpu.memory_space<vmem>>, %arg3: memref<16x8xf32, #tpu.memory_space<vmem>>, %arg4: memref<32x64xf32, #tpu.memory_space<vmem>>, %arg5: memref<16x64xf32, #tpu.memory_space<vmem>>, %arg6: memref<3x64x64xf32, #tpu.memory_space<vmem>>, %arg7: memref<3x1x64xf32, #tpu.memory_space<vmem>>, %arg8: memref<64x64xf32, #tpu.memory_space<vmem>>, %arg9: memref<1x64xf32, #tpu.memory_space<vmem>>, %arg10: memref<64x64xf32, #tpu.memory_space<vmem>>, %arg11: memref<1x64xf32, #tpu.memory_space<vmem>>, %arg12: memref<64x128xf32, #tpu.memory_space<vmem>>, %arg13: memref<64x128xf32, #tpu.memory_space<vmem>>, %arg14: memref<1x128xf32, #tpu.memory_space<vmem>>, %arg15: memref<112x16xf32, #tpu.memory_space<vmem>>, %arg16: memref<7x128x128xf32, #tpu.memory_space<vmem>>, %arg17: memref<1x128xf32, #tpu.memory_space<vmem>>, %arg18: memref<128x512xf32, #tpu.memory_space<vmem>>, %arg19: memref<1x512xf32, #tpu.memory_space<vmem>>, %arg20: memref<512x128xf32, #tpu.memory_space<vmem>>, %arg21: memref<1x128xf32, #tpu.memory_space<vmem>>, %arg22: memref<1x16x128xf32, #tpu.memory_space<vmem>>) attributes {dimension_semantics = [#tpu.dimension_semantics<parallel>], iteration_bounds = array<i64: 2>, scalar_prefetch = 0 : i64, scratch_operands = 0 : i64, tpu.core_type = #tpu.core_type<tc>, window_params = [{transform_indices = @transform_0, window_bounds = array<i64: 1, 8, 32>}, {transform_indices = @transform_1, window_bounds = array<i64: 1, 16, 64>}, {pipeline_mode = #tpu.pipeline_mode<synchronous>, transform_indices = @transform_2, window_bounds = array<i64: 16, 8>}, {pipeline_mode = #tpu.pipeline_mode<synchronous>, transform_indices = @transform_3, window_bounds = array<i64: 32, 64>}, {pipeline_mode = #tpu.pipeline_mode<synchronous>, transform_indices = @transform_4, window_bounds = array<i64: 16, 64>}, {pipeline_mode = #tpu.pipeline_mode<synchronous>, transform_indices = @transform_5, window_bounds = array<i64: 3, 64, 64>}, {pipeline_mode = #tpu.pipeline_mode<synchronous>, transform_indices = @transform_6, window_bounds = array<i64: 3, 1, 64>}, {pipeline_mode = #tpu.pipeline_mode<synchronous>, transform_indices = @transform_7, window_bounds = array<i64: 64, 64>}, {pipeline_mode = #tpu.pipeline_mode<synchronous>, transform_indices = @transform_8, window_bounds = array<i64: 1, 64>}, {pipeline_mode = #tpu.pipeline_mode<synchronous>, transform_indices = @transform_9, window_bounds = array<i64: 64, 64>}, {pipeline_mode = #tpu.pipeline_mode<synchronous>, transform_indices = @transform_10, window_bounds = array<i64: 1, 64>}, {pipeline_mode = #tpu.pipeline_mode<synchronous>, transform_indices = @transform_11, window_bounds = array<i64: 64, 128>}, {pipeline_mode = #tpu.pipeline_mode<synchronous>, transform_indices = @transform_12, window_bounds = array<i64: 64, 128>}, {pipeline_mode = #tpu.pipeline_mode<synchronous>, transform_indices = @transform_13, window_bounds = array<i64: 1, 128>}, {pipeline_mode = #tpu.pipeline_mode<synchronous>, transform_indices = @transform_14, window_bounds = array<i64: 112, 16>}, {pipeline_mode = #tpu.pipeline_mode<synchronous>, transform_indices = @transform_15, window_bounds = array<i64: 7, 128, 128>}, {pipeline_mode = #tpu.pipeline_mode<synchronous>, transform_indices = @transform_16, window_bounds = array<i64: 1, 128>}, {pipeline_mode = #tpu.pipeline_mode<synchronous>, transform_indices = @transform_17, window_bounds = array<i64: 128, 512>}, {pipeline_mode = #tpu.pipeline_mode<synchronous>, transform_indices = @transform_18, window_bounds = array<i64: 1, 512>}, {pipeline_mode = #tpu.pipeline_mode<synchronous>, transform_indices = @transform_19, window_bounds = array<i64: 512, 128>}, {pipeline_mode = #tpu.pipeline_mode<synchronous>, transform_indices = @transform_20, window_bounds = array<i64: 1, 128>}, {transform_indices = @transform_21, window_bounds = array<i64: 1, 16, 128>}]} {
    %c0 = arith.constant 0 : index
    %c0_0 = arith.constant 0 : index
    %c0_1 = arith.constant 0 : index
    %0 = vector.load %arg1[%c0, %c0_0, %c0_1] : memref<1x8x32xf32, #tpu.memory_space<vmem>>, vector<1x8x32xf32>
    %1 = vector.shape_cast %0 : vector<1x8x32xf32> to vector<8x32xf32>
    %c0_2 = arith.constant 0 : index
    %c0_3 = arith.constant 0 : index
    %c0_4 = arith.constant 0 : index
    %2 = vector.load %arg2[%c0_2, %c0_3, %c0_4] : memref<1x16x64xf32, #tpu.memory_space<vmem>>, vector<1x16x64xf32>
    %3 = vector.shape_cast %2 : vector<1x16x64xf32> to vector<16x64xf32>
    %c0_5 = arith.constant 0 : index
    %c0_6 = arith.constant 0 : index
    %4 = vector.load %arg3[%c0_5, %c0_6] : memref<16x8xf32, #tpu.memory_space<vmem>>, vector<16x8xf32>
    %c0_7 = arith.constant 0 : index
    %c0_8 = arith.constant 0 : index
    %5 = vector.load %arg4[%c0_7, %c0_8] : memref<32x64xf32, #tpu.memory_space<vmem>>, vector<32x64xf32>
    %cst = arith.constant dense<0.000000e+00> : vector<8x64xf32>
    %6 = tpu.matmul %1, %5, %cst {dimension_numbers = #tpu.dot_dimension_numbers<[1], [0], [0], [1], [0, 0, 1, 1], [], []>} : vector<8x32xf32>, vector<32x64xf32>, vector<8x64xf32> -> vector<8x64xf32>
    %cst_9 = arith.constant dense<0.000000e+00> : vector<16x64xf32>
    %7 = tpu.matmul %4, %6, %cst_9 {dimension_numbers = #tpu.dot_dimension_numbers<[1], [0], [0], [1], [0, 0, 1, 1], [], []>} : vector<16x8xf32>, vector<8x64xf32>, vector<16x64xf32> -> vector<16x64xf32>
    %c0_10 = arith.constant 0 : index
    %c0_11 = arith.constant 0 : index
    %8 = vector.load %arg5[%c0_10, %c0_11] : memref<16x64xf32, #tpu.memory_space<vmem>>, vector<16x64xf32>
    %9 = arith.addf %7, %8 : vector<16x64xf32>
    %c0_12 = arith.constant 0 : index
    %c0_13 = arith.constant 0 : index
    %c0_14 = arith.constant 0 : index
    %10 = vector.load %arg6[%c0_12, %c0_13, %c0_14] : memref<3x64x64xf32, #tpu.memory_space<vmem>>, vector<1x64x64xf32>
    %11 = vector.shape_cast %10 : vector<1x64x64xf32> to vector<64x64xf32>
    %cst_15 = arith.constant dense<0.000000e+00> : vector<16x64xf32>
    %12 = tpu.matmul %9, %11, %cst_15 {dimension_numbers = #tpu.dot_dimension_numbers<[1], [0], [0], [1], [0, 0, 1, 1], [], []>} : vector<16x64xf32>, vector<64x64xf32>, vector<16x64xf32> -> vector<16x64xf32>
    %c0_16 = arith.constant 0 : index
    %c0_17 = arith.constant 0 : index
    %c0_18 = arith.constant 0 : index
    %13 = vector.load %arg7[%c0_16, %c0_17, %c0_18] : memref<3x1x64xf32, #tpu.memory_space<vmem>>, vector<1x1x64xf32>
    %14 = vector.shape_cast %13 : vector<1x1x64xf32> to vector<1x64xf32>
    %15 = vector.broadcast %14 : vector<1x64xf32> to vector<16x64xf32>
    %16 = arith.addf %12, %15 : vector<16x64xf32>
    %c1 = arith.constant 1 : index
    %c0_19 = arith.constant 0 : index
    %c0_20 = arith.constant 0 : index
    %17 = vector.load %arg6[%c1, %c0_19, %c0_20] : memref<3x64x64xf32, #tpu.memory_space<vmem>>, vector<1x64x64xf32>
    %18 = vector.shape_cast %17 : vector<1x64x64xf32> to vector<64x64xf32>
    %cst_21 = arith.constant dense<0.000000e+00> : vector<16x64xf32>
    %19 = tpu.matmul %9, %18, %cst_21 {dimension_numbers = #tpu.dot_dimension_numbers<[1], [0], [0], [1], [0, 0, 1, 1], [], []>} : vector<16x64xf32>, vector<64x64xf32>, vector<16x64xf32> -> vector<16x64xf32>
    %c1_22 = arith.constant 1 : index
    %c0_23 = arith.constant 0 : index
    %c0_24 = arith.constant 0 : index
    %20 = vector.load %arg7[%c1_22, %c0_23, %c0_24] : memref<3x1x64xf32, #tpu.memory_space<vmem>>, vector<1x1x64xf32>
    %21 = vector.shape_cast %20 : vector<1x1x64xf32> to vector<1x64xf32>
    %22 = vector.broadcast %21 : vector<1x64xf32> to vector<16x64xf32>
    %23 = arith.addf %19, %22 : vector<16x64xf32>
    %c2 = arith.constant 2 : index
    %c0_25 = arith.constant 0 : index
    %c0_26 = arith.constant 0 : index
    %24 = vector.load %arg6[%c2, %c0_25, %c0_26] : memref<3x64x64xf32, #tpu.memory_space<vmem>>, vector<1x64x64xf32>
    %25 = vector.shape_cast %24 : vector<1x64x64xf32> to vector<64x64xf32>
    %cst_27 = arith.constant dense<0.000000e+00> : vector<16x64xf32>
    %26 = tpu.matmul %9, %25, %cst_27 {dimension_numbers = #tpu.dot_dimension_numbers<[1], [0], [0], [1], [0, 0, 1, 1], [], []>} : vector<16x64xf32>, vector<64x64xf32>, vector<16x64xf32> -> vector<16x64xf32>
    %c2_28 = arith.constant 2 : index
    %c0_29 = arith.constant 0 : index
    %c0_30 = arith.constant 0 : index
    %27 = vector.load %arg7[%c2_28, %c0_29, %c0_30] : memref<3x1x64xf32, #tpu.memory_space<vmem>>, vector<1x1x64xf32>
    %28 = vector.shape_cast %27 : vector<1x1x64xf32> to vector<1x64xf32>
    %29 = vector.broadcast %28 : vector<1x64xf32> to vector<16x64xf32>
    %30 = arith.addf %26, %29 : vector<16x64xf32>
    %31 = arith.addf %16, %3 : vector<16x64xf32>
    %c0_31 = arith.constant 0 : index
    %c0_32 = arith.constant 0 : index
    %32 = vector.load %arg8[%c0_31, %c0_32] : memref<64x64xf32, #tpu.memory_space<vmem>>, vector<64x64xf32>
    %cst_33 = arith.constant dense<0.000000e+00> : vector<16x64xf32>
    %33 = tpu.matmul %31, %32, %cst_33 {dimension_numbers = #tpu.dot_dimension_numbers<[1], [0], [0], [1], [0, 0, 1, 1], [], []>} : vector<16x64xf32>, vector<64x64xf32>, vector<16x64xf32> -> vector<16x64xf32>
    %c0_34 = arith.constant 0 : index
    %c0_35 = arith.constant 0 : index
    %34 = vector.load %arg9[%c0_34, %c0_35] : memref<1x64xf32, #tpu.memory_space<vmem>>, vector<1x64xf32>
    %35 = vector.broadcast %34 : vector<1x64xf32> to vector<16x64xf32>
    %36 = arith.addf %33, %35 : vector<16x64xf32>
    %37 = arith.negf %36 : vector<16x64xf32>
    %38 = math.exp %37 : vector<16x64xf32>
    %cst_36 = arith.constant 1.000000e+00 : f32
    %39 = vector.broadcast %cst_36 : f32 to vector<16x64xf32>
    %40 = arith.addf %39, %38 : vector<16x64xf32>
    %41 = arith.divf %39, %40 : vector<16x64xf32>
    %42 = arith.mulf %41, %3 : vector<16x64xf32>
    %43 = arith.negf %23 : vector<16x64xf32>
    %44 = math.exp %43 : vector<16x64xf32>
    %cst_37 = arith.constant 1.000000e+00 : f32
    %45 = vector.broadcast %cst_37 : f32 to vector<16x64xf32>
    %46 = arith.addf %45, %44 : vector<16x64xf32>
    %47 = arith.divf %45, %46 : vector<16x64xf32>
    %48 = math.tanh %30 : vector<16x64xf32>
    %49 = arith.mulf %47, %48 : vector<16x64xf32>
    %50 = arith.addf %42, %49 : vector<16x64xf32>
    %c0_38 = arith.constant 0 : index
    %c0_39 = arith.constant 0 : index
    %51 = vector.load %arg10[%c0_38, %c0_39] : memref<64x64xf32, #tpu.memory_space<vmem>>, vector<64x64xf32>
    %cst_40 = arith.constant dense<0.000000e+00> : vector<16x64xf32>
    %52 = tpu.matmul %50, %51, %cst_40 {dimension_numbers = #tpu.dot_dimension_numbers<[1], [0], [0], [1], [0, 0, 1, 1], [], []>} : vector<16x64xf32>, vector<64x64xf32>, vector<16x64xf32> -> vector<16x64xf32>
    %c0_41 = arith.constant 0 : index
    %c0_42 = arith.constant 0 : index
    %53 = vector.load %arg11[%c0_41, %c0_42] : memref<1x64xf32, #tpu.memory_space<vmem>>, vector<1x64xf32>
    %54 = vector.broadcast %53 : vector<1x64xf32> to vector<16x64xf32>
    %55 = arith.addf %52, %54 : vector<16x64xf32>
    %c0_43 = arith.constant 0 : index
    %c0_44 = arith.constant 0 : index
    %56 = vector.load %arg12[%c0_43, %c0_44] : memref<64x128xf32, #tpu.memory_space<vmem>>, vector<64x128xf32>
    %cst_45 = arith.constant dense<0.000000e+00> : vector<16x128xf32>
    %57 = tpu.matmul %55, %56, %cst_45 {dimension_numbers = #tpu.dot_dimension_numbers<[1], [0], [0], [1], [0, 0, 1, 1], [], []>} : vector<16x64xf32>, vector<64x128xf32>, vector<16x128xf32> -> vector<16x128xf32>
    %c0_46 = arith.constant 0 : index
    %c0_47 = arith.constant 0 : index
    %58 = vector.load %arg13[%c0_46, %c0_47] : memref<64x128xf32, #tpu.memory_space<vmem>>, vector<64x128xf32>
    %cst_48 = arith.constant dense<0.000000e+00> : vector<16x128xf32>
    %59 = tpu.matmul %9, %58, %cst_48 {dimension_numbers = #tpu.dot_dimension_numbers<[1], [0], [0], [1], [0, 0, 1, 1], [], []>} : vector<16x64xf32>, vector<64x128xf32>, vector<16x128xf32> -> vector<16x128xf32>
    %60 = arith.addf %57, %59 : vector<16x128xf32>
    %c0_49 = arith.constant 0 : index
    %c0_50 = arith.constant 0 : index
    %61 = vector.load %arg14[%c0_49, %c0_50] : memref<1x128xf32, #tpu.memory_space<vmem>>, vector<1x128xf32>
    %62 = vector.broadcast %61 : vector<1x128xf32> to vector<16x128xf32>
    %63 = arith.addf %60, %62 : vector<16x128xf32>
    %c0_51 = arith.constant 0 : index
    %c0_52 = arith.constant 0 : index
    %64 = vector.load %arg15[%c0_51, %c0_52] : memref<112x16xf32, #tpu.memory_space<vmem>>, vector<112x16xf32>
    %cst_53 = arith.constant dense<0.000000e+00> : vector<112x128xf32>
    %65 = tpu.matmul %64, %63, %cst_53 {dimension_numbers = #tpu.dot_dimension_numbers<[1], [0], [0], [1], [0, 0, 1, 1], [], []>} : vector<112x16xf32>, vector<16x128xf32>, vector<112x128xf32> -> vector<112x128xf32>
    %66 = vector.extract_strided_slice %65 {offsets = [0, 0], sizes = [16, 128], strides = [1, 1]} : vector<112x128xf32> to vector<16x128xf32>
    %c0_54 = arith.constant 0 : index
    %c0_55 = arith.constant 0 : index
    %c0_56 = arith.constant 0 : index
    %67 = vector.load %arg16[%c0_54, %c0_55, %c0_56] : memref<7x128x128xf32, #tpu.memory_space<vmem>>, vector<1x128x128xf32>
    %68 = vector.shape_cast %67 : vector<1x128x128xf32> to vector<128x128xf32>
    %cst_57 = arith.constant dense<0.000000e+00> : vector<16x128xf32>
    %69 = tpu.matmul %66, %68, %cst_57 {dimension_numbers = #tpu.dot_dimension_numbers<[1], [0], [0], [1], [0, 0, 1, 1], [], []>} : vector<16x128xf32>, vector<128x128xf32>, vector<16x128xf32> -> vector<16x128xf32>
    %70 = vector.extract_strided_slice %65 {offsets = [16, 0], sizes = [16, 128], strides = [1, 1]} : vector<112x128xf32> to vector<16x128xf32>
    %c1_58 = arith.constant 1 : index
    %c0_59 = arith.constant 0 : index
    %c0_60 = arith.constant 0 : index
    %71 = vector.load %arg16[%c1_58, %c0_59, %c0_60] : memref<7x128x128xf32, #tpu.memory_space<vmem>>, vector<1x128x128xf32>
    %72 = vector.shape_cast %71 : vector<1x128x128xf32> to vector<128x128xf32>
    %cst_61 = arith.constant dense<0.000000e+00> : vector<16x128xf32>
    %73 = tpu.matmul %70, %72, %cst_61 {dimension_numbers = #tpu.dot_dimension_numbers<[1], [0], [0], [1], [0, 0, 1, 1], [], []>} : vector<16x128xf32>, vector<128x128xf32>, vector<16x128xf32> -> vector<16x128xf32>
    %74 = arith.addf %69, %73 : vector<16x128xf32>
    %75 = vector.extract_strided_slice %65 {offsets = [32, 0], sizes = [16, 128], strides = [1, 1]} : vector<112x128xf32> to vector<16x128xf32>
    %c2_62 = arith.constant 2 : index
    %c0_63 = arith.constant 0 : index
    %c0_64 = arith.constant 0 : index
    %76 = vector.load %arg16[%c2_62, %c0_63, %c0_64] : memref<7x128x128xf32, #tpu.memory_space<vmem>>, vector<1x128x128xf32>
    %77 = vector.shape_cast %76 : vector<1x128x128xf32> to vector<128x128xf32>
    %cst_65 = arith.constant dense<0.000000e+00> : vector<16x128xf32>
    %78 = tpu.matmul %75, %77, %cst_65 {dimension_numbers = #tpu.dot_dimension_numbers<[1], [0], [0], [1], [0, 0, 1, 1], [], []>} : vector<16x128xf32>, vector<128x128xf32>, vector<16x128xf32> -> vector<16x128xf32>
    %79 = arith.addf %74, %78 : vector<16x128xf32>
    %80 = vector.extract_strided_slice %65 {offsets = [48, 0], sizes = [16, 128], strides = [1, 1]} : vector<112x128xf32> to vector<16x128xf32>
    %c3 = arith.constant 3 : index
    %c0_66 = arith.constant 0 : index
    %c0_67 = arith.constant 0 : index
    %81 = vector.load %arg16[%c3, %c0_66, %c0_67] : memref<7x128x128xf32, #tpu.memory_space<vmem>>, vector<1x128x128xf32>
    %82 = vector.shape_cast %81 : vector<1x128x128xf32> to vector<128x128xf32>
    %cst_68 = arith.constant dense<0.000000e+00> : vector<16x128xf32>
    %83 = tpu.matmul %80, %82, %cst_68 {dimension_numbers = #tpu.dot_dimension_numbers<[1], [0], [0], [1], [0, 0, 1, 1], [], []>} : vector<16x128xf32>, vector<128x128xf32>, vector<16x128xf32> -> vector<16x128xf32>
    %84 = arith.addf %79, %83 : vector<16x128xf32>
    %85 = vector.extract_strided_slice %65 {offsets = [64, 0], sizes = [16, 128], strides = [1, 1]} : vector<112x128xf32> to vector<16x128xf32>
    %c4 = arith.constant 4 : index
    %c0_69 = arith.constant 0 : index
    %c0_70 = arith.constant 0 : index
    %86 = vector.load %arg16[%c4, %c0_69, %c0_70] : memref<7x128x128xf32, #tpu.memory_space<vmem>>, vector<1x128x128xf32>
    %87 = vector.shape_cast %86 : vector<1x128x128xf32> to vector<128x128xf32>
    %cst_71 = arith.constant dense<0.000000e+00> : vector<16x128xf32>
    %88 = tpu.matmul %85, %87, %cst_71 {dimension_numbers = #tpu.dot_dimension_numbers<[1], [0], [0], [1], [0, 0, 1, 1], [], []>} : vector<16x128xf32>, vector<128x128xf32>, vector<16x128xf32> -> vector<16x128xf32>
    %89 = arith.addf %84, %88 : vector<16x128xf32>
    %90 = vector.extract_strided_slice %65 {offsets = [80, 0], sizes = [16, 128], strides = [1, 1]} : vector<112x128xf32> to vector<16x128xf32>
    %c5 = arith.constant 5 : index
    %c0_72 = arith.constant 0 : index
    %c0_73 = arith.constant 0 : index
    %91 = vector.load %arg16[%c5, %c0_72, %c0_73] : memref<7x128x128xf32, #tpu.memory_space<vmem>>, vector<1x128x128xf32>
    %92 = vector.shape_cast %91 : vector<1x128x128xf32> to vector<128x128xf32>
    %cst_74 = arith.constant dense<0.000000e+00> : vector<16x128xf32>
    %93 = tpu.matmul %90, %92, %cst_74 {dimension_numbers = #tpu.dot_dimension_numbers<[1], [0], [0], [1], [0, 0, 1, 1], [], []>} : vector<16x128xf32>, vector<128x128xf32>, vector<16x128xf32> -> vector<16x128xf32>
    %94 = arith.addf %89, %93 : vector<16x128xf32>
    %95 = vector.extract_strided_slice %65 {offsets = [96, 0], sizes = [16, 128], strides = [1, 1]} : vector<112x128xf32> to vector<16x128xf32>
    %c6 = arith.constant 6 : index
    %c0_75 = arith.constant 0 : index
    %c0_76 = arith.constant 0 : index
    %96 = vector.load %arg16[%c6, %c0_75, %c0_76] : memref<7x128x128xf32, #tpu.memory_space<vmem>>, vector<1x128x128xf32>
    %97 = vector.shape_cast %96 : vector<1x128x128xf32> to vector<128x128xf32>
    %cst_77 = arith.constant dense<0.000000e+00> : vector<16x128xf32>
    %98 = tpu.matmul %95, %97, %cst_77 {dimension_numbers = #tpu.dot_dimension_numbers<[1], [0], [0], [1], [0, 0, 1, 1], [], []>} : vector<16x128xf32>, vector<128x128xf32>, vector<16x128xf32> -> vector<16x128xf32>
    %99 = arith.addf %94, %98 : vector<16x128xf32>
    %c0_78 = arith.constant 0 : index
    %c0_79 = arith.constant 0 : index
    %100 = vector.load %arg17[%c0_78, %c0_79] : memref<1x128xf32, #tpu.memory_space<vmem>>, vector<1x128xf32>
    %101 = vector.broadcast %100 : vector<1x128xf32> to vector<16x128xf32>
    %102 = arith.addf %99, %101 : vector<16x128xf32>
    %c0_80 = arith.constant 0 : index
    %c0_81 = arith.constant 0 : index
    %103 = vector.load %arg18[%c0_80, %c0_81] : memref<128x512xf32, #tpu.memory_space<vmem>>, vector<128x512xf32>
    %cst_82 = arith.constant dense<0.000000e+00> : vector<16x512xf32>
    %104 = tpu.matmul %102, %103, %cst_82 {dimension_numbers = #tpu.dot_dimension_numbers<[1], [0], [0], [1], [0, 0, 1, 1], [], []>} : vector<16x128xf32>, vector<128x512xf32>, vector<16x512xf32> -> vector<16x512xf32>
    %c0_83 = arith.constant 0 : index
    %c0_84 = arith.constant 0 : index
    %105 = vector.load %arg19[%c0_83, %c0_84] : memref<1x512xf32, #tpu.memory_space<vmem>>, vector<1x512xf32>
    %106 = vector.broadcast %105 : vector<1x512xf32> to vector<16x512xf32>
    %107 = arith.addf %104, %106 : vector<16x512xf32>
    %108 = arith.mulf %107, %107 : vector<16x512xf32>
    %109 = arith.mulf %107, %108 : vector<16x512xf32>
    %cst_85 = arith.constant 4.471500e-02 : f32
    %110 = vector.broadcast %cst_85 : f32 to vector<16x512xf32>
    %111 = arith.mulf %110, %109 : vector<16x512xf32>
    %112 = arith.addf %107, %111 : vector<16x512xf32>
    %cst_86 = arith.constant 0.797884583 : f32
    %113 = vector.broadcast %cst_86 : f32 to vector<16x512xf32>
    %114 = arith.mulf %113, %112 : vector<16x512xf32>
    %115 = math.tanh %114 : vector<16x512xf32>
    %cst_87 = arith.constant 1.000000e+00 : f32
    %116 = vector.broadcast %cst_87 : f32 to vector<16x512xf32>
    %117 = arith.addf %116, %115 : vector<16x512xf32>
    %cst_88 = arith.constant 5.000000e-01 : f32
    %118 = vector.broadcast %cst_88 : f32 to vector<16x512xf32>
    %119 = arith.mulf %118, %117 : vector<16x512xf32>
    %120 = arith.mulf %107, %119 : vector<16x512xf32>
    %c0_89 = arith.constant 0 : index
    %c0_90 = arith.constant 0 : index
    %121 = vector.load %arg20[%c0_89, %c0_90] : memref<512x128xf32, #tpu.memory_space<vmem>>, vector<512x128xf32>
    %cst_91 = arith.constant dense<0.000000e+00> : vector<16x128xf32>
    %122 = tpu.matmul %120, %121, %cst_91 {dimension_numbers = #tpu.dot_dimension_numbers<[1], [0], [0], [1], [0, 0, 1, 1], [], []>} : vector<16x512xf32>, vector<512x128xf32>, vector<16x128xf32> -> vector<16x128xf32>
    %c0_92 = arith.constant 0 : index
    %c0_93 = arith.constant 0 : index
    %123 = vector.load %arg21[%c0_92, %c0_93] : memref<1x128xf32, #tpu.memory_space<vmem>>, vector<1x128xf32>
    %124 = vector.broadcast %123 : vector<1x128xf32> to vector<16x128xf32>
    %125 = arith.addf %122, %124 : vector<16x128xf32>
    %126 = arith.addf %63, %125 : vector<16x128xf32>
    %127 = arith.mulf %126, %126 : vector<16x128xf32>
    %128 = arith.mulf %126, %127 : vector<16x128xf32>
    %cst_94 = arith.constant 4.471500e-02 : f32
    %129 = vector.broadcast %cst_94 : f32 to vector<16x128xf32>
    %130 = arith.mulf %129, %128 : vector<16x128xf32>
    %131 = arith.addf %126, %130 : vector<16x128xf32>
    %cst_95 = arith.constant 0.797884583 : f32
    %132 = vector.broadcast %cst_95 : f32 to vector<16x128xf32>
    %133 = arith.mulf %132, %131 : vector<16x128xf32>
    %134 = math.tanh %133 : vector<16x128xf32>
    %cst_96 = arith.constant 1.000000e+00 : f32
    %135 = vector.broadcast %cst_96 : f32 to vector<16x128xf32>
    %136 = arith.addf %135, %134 : vector<16x128xf32>
    %cst_97 = arith.constant 5.000000e-01 : f32
    %137 = vector.broadcast %cst_97 : f32 to vector<16x128xf32>
    %138 = arith.mulf %137, %136 : vector<16x128xf32>
    %139 = arith.mulf %126, %138 : vector<16x128xf32>
    %c0_98 = arith.constant 0 : index
    %c0_99 = arith.constant 0 : index
    %c0_100 = arith.constant 0 : index
    %140 = vector.load %arg22[%c0_98, %c0_99, %c0_100] : memref<1x16x128xf32, #tpu.memory_space<vmem>>, vector<1x16x128xf32>
    %141 = vector.shape_cast %140 : vector<1x16x128xf32> to vector<16x128xf32>
    %142 = vector.shape_cast %139 : vector<16x128xf32> to vector<1x16x128xf32>
    tpu.vector_store %arg22[%c0_98, %c0_99, %c0_100], %142 {strides = array<i32>} : memref<1x16x128xf32, #tpu.memory_space<vmem>>, vector<1x16x128xf32>,
    return
  }
  func.func @transform_0(%arg0: i32) -> (i32, i32, i32) {
    %c0_i32 = arith.constant 0 : i32
    %c0_i32_0 = arith.constant 0 : i32
    %c0_i32_1 = arith.constant 0 : i32
    return %arg0, %c0_i32, %c0_i32_0 : i32, i32, i32
  }
  func.func @transform_1(%arg0: i32) -> (i32, i32, i32) {
    %c0_i32 = arith.constant 0 : i32
    %c0_i32_0 = arith.constant 0 : i32
    %c0_i32_1 = arith.constant 0 : i32
    return %arg0, %c0_i32, %c0_i32_0 : i32, i32, i32
  }
  func.func @transform_2(%arg0: i32) -> (i32, i32) {
    %c0_i32 = arith.constant 0 : i32
    %c0_i32_0 = arith.constant 0 : i32
    %c0_i32_1 = arith.constant 0 : i32
    return %c0_i32, %c0_i32_0 : i32, i32
  }
  func.func @transform_3(%arg0: i32) -> (i32, i32) {
    %c0_i32 = arith.constant 0 : i32
    %c0_i32_0 = arith.constant 0 : i32
    %c0_i32_1 = arith.constant 0 : i32
    return %c0_i32, %c0_i32_0 : i32, i32
  }
  func.func @transform_4(%arg0: i32) -> (i32, i32) {
    %c0_i32 = arith.constant 0 : i32
    %c0_i32_0 = arith.constant 0 : i32
    %c0_i32_1 = arith.constant 0 : i32
    return %c0_i32, %c0_i32_0 : i32, i32
  }
  func.func @transform_5(%arg0: i32) -> (i32, i32, i32) {
    %c0_i32 = arith.constant 0 : i32
    %c0_i32_0 = arith.constant 0 : i32
    %c0_i32_1 = arith.constant 0 : i32
    %c0_i32_2 = arith.constant 0 : i32
    return %c0_i32, %c0_i32_0, %c0_i32_1 : i32, i32, i32
  }
  func.func @transform_6(%arg0: i32) -> (i32, i32, i32) {
    %c0_i32 = arith.constant 0 : i32
    %c0_i32_0 = arith.constant 0 : i32
    %c0_i32_1 = arith.constant 0 : i32
    %c0_i32_2 = arith.constant 0 : i32
    return %c0_i32, %c0_i32_0, %c0_i32_1 : i32, i32, i32
  }
  func.func @transform_7(%arg0: i32) -> (i32, i32) {
    %c0_i32 = arith.constant 0 : i32
    %c0_i32_0 = arith.constant 0 : i32
    %c0_i32_1 = arith.constant 0 : i32
    return %c0_i32, %c0_i32_0 : i32, i32
  }
  func.func @transform_8(%arg0: i32) -> (i32, i32) {
    %c0_i32 = arith.constant 0 : i32
    %c0_i32_0 = arith.constant 0 : i32
    %c0_i32_1 = arith.constant 0 : i32
    return %c0_i32, %c0_i32_0 : i32, i32
  }
  func.func @transform_9(%arg0: i32) -> (i32, i32) {
    %c0_i32 = arith.constant 0 : i32
    %c0_i32_0 = arith.constant 0 : i32
    %c0_i32_1 = arith.constant 0 : i32
    return %c0_i32, %c0_i32_0 : i32, i32
  }
  func.func @transform_10(%arg0: i32) -> (i32, i32) {
    %c0_i32 = arith.constant 0 : i32
    %c0_i32_0 = arith.constant 0 : i32
    %c0_i32_1 = arith.constant 0 : i32
    return %c0_i32, %c0_i32_0 : i32, i32
  }
  func.func @transform_11(%arg0: i32) -> (i32, i32) {
    %c0_i32 = arith.constant 0 : i32
    %c0_i32_0 = arith.constant 0 : i32
    %c0_i32_1 = arith.constant 0 : i32
    return %c0_i32, %c0_i32_0 : i32, i32
  }
  func.func @transform_12(%arg0: i32) -> (i32, i32) {
    %c0_i32 = arith.constant 0 : i32
    %c0_i32_0 = arith.constant 0 : i32
    %c0_i32_1 = arith.constant 0 : i32
    return %c0_i32, %c0_i32_0 : i32, i32
  }
  func.func @transform_13(%arg0: i32) -> (i32, i32) {
    %c0_i32 = arith.constant 0 : i32
    %c0_i32_0 = arith.constant 0 : i32
    %c0_i32_1 = arith.constant 0 : i32
    return %c0_i32, %c0_i32_0 : i32, i32
  }
  func.func @transform_14(%arg0: i32) -> (i32, i32) {
    %c0_i32 = arith.constant 0 : i32
    %c0_i32_0 = arith.constant 0 : i32
    %c0_i32_1 = arith.constant 0 : i32
    return %c0_i32, %c0_i32_0 : i32, i32
  }
  func.func @transform_15(%arg0: i32) -> (i32, i32, i32) {
    %c0_i32 = arith.constant 0 : i32
    %c0_i32_0 = arith.constant 0 : i32
    %c0_i32_1 = arith.constant 0 : i32
    %c0_i32_2 = arith.constant 0 : i32
    return %c0_i32, %c0_i32_0, %c0_i32_1 : i32, i32, i32
  }
  func.func @transform_16(%arg0: i32) -> (i32, i32) {
    %c0_i32 = arith.constant 0 : i32
    %c0_i32_0 = arith.constant 0 : i32
    %c0_i32_1 = arith.constant 0 : i32
    return %c0_i32, %c0_i32_0 : i32, i32
  }
  func.func @transform_17(%arg0: i32) -> (i32, i32) {
    %c0_i32 = arith.constant 0 : i32
    %c0_i32_0 = arith.constant 0 : i32
    %c0_i32_1 = arith.constant 0 : i32
    return %c0_i32, %c0_i32_0 : i32, i32
  }
  func.func @transform_18(%arg0: i32) -> (i32, i32) {
    %c0_i32 = arith.constant 0 : i32
    %c0_i32_0 = arith.constant 0 : i32
    %c0_i32_1 = arith.constant 0 : i32
    return %c0_i32, %c0_i32_0 : i32, i32
  }
  func.func @transform_19(%arg0: i32) -> (i32, i32) {
    %c0_i32 = arith.constant 0 : i32
    %c0_i32_0 = arith.constant 0 : i32
    %c0_i32_1 = arith.constant 0 : i32
    return %c0_i32, %c0_i32_0 : i32, i32
  }
  func.func @transform_20(%arg0: i32) -> (i32, i32) {
    %c0_i32 = arith.constant 0 : i32
    %c0_i32_0 = arith.constant 0 : i32
    %c0_i32_1 = arith.constant 0 : i32
    return %c0_i32, %c0_i32_0 : i32, i32
  }
  func.func @transform_21(%arg0: i32) -> (i32, i32, i32) {
    %c0_i32 = arith.constant 0 : i32
    %c0_i32_0 = arith.constant 0 : i32
    %c0_i32_1 = arith.constant 0 : i32
    return %arg0, %c0_i32, %c0_i32_0 : i32, i32, i32
  }
}

</mosaic_0001>

<llo_original>
// kernel: tpu_custom_call.1
$region0: #{tpu_custom_call.1}
  #allocation0 [shape = 'u32[]', space=smem, size = 0x4, offset = 0x4, fixed_abs, tag = 'smem constant byte address 0x4 - core index']
  #allocation1 [shape = 'u32[144,128]{1,0:T(1,128)}', space=vmem, size = 0x12000, scoped, tag = 'internal scratch']
  %s0 = inlined_call_operand.hbm [shape: f32[2,8,32], index: 0, kind: input, shape index: {}]
  %s1 = inlined_call_operand.hbm [shape: f32[2,16,64], index: 1, kind: input, shape index: {}]
  %s2 = inlined_call_operand.vmem [shape: f32[16,8], index: 2, kind: input, shape index: {}]
  %s3 = inlined_call_operand.hbm [shape: f32[32,64], index: 3, kind: input, shape index: {}]
  %s4 = inlined_call_operand.hbm [shape: f32[16,64], index: 4, kind: input, shape index: {}]
  %s5 = inlined_call_operand.hbm [shape: f32[3,64,64], index: 5, kind: input, shape index: {}]
  %s6 = inlined_call_operand.vmem [shape: f32[3,1,64], index: 6, kind: input, shape index: {}]
  %s7 = inlined_call_operand.vmem [shape: f32[64,64], index: 7, kind: input, shape index: {}]
  %s8 = inlined_call_operand.vmem [shape: f32[1,64], index: 8, kind: input, shape index: {}]
  %s9 = inlined_call_operand.vmem [shape: f32[64,64], index: 9, kind: input, shape index: {}]
  %s10 = inlined_call_operand.vmem [shape: f32[1,64], index: 10, kind: input, shape index: {}]
  %s11 = inlined_call_operand.hbm [shape: f32[64,128], index: 11, kind: input, shape index: {}]
  %s12 = inlined_call_operand.hbm [shape: f32[64,128], index: 12, kind: input, shape index: {}]
  %s13 = inlined_call_operand.vmem [shape: f32[1,128], index: 13, kind: input, shape index: {}]
  %s14 = inlined_call_operand.vmem [shape: f32[112,16], index: 14, kind: input, shape index: {}]
  %s15 = inlined_call_operand.hbm [shape: f32[7,128,128], index: 15, kind: input, shape index: {}]
  %s16 = inlined_call_operand.vmem [shape: f32[1,128], index: 16, kind: input, shape index: {}]
  %s17 = inlined_call_operand.hbm [shape: f32[128,512], index: 17, kind: input, shape index: {}]
  %s18 = inlined_call_operand.vmem [shape: f32[1,512], index: 18, kind: input, shape index: {}]
  %s19 = inlined_call_operand.hbm [shape: f32[512,128], index: 19, kind: input, shape index: {}]
  %s20 = inlined_call_operand.vmem [shape: f32[1,128], index: 20, kind: input, shape index: {}]
  %s21 = inlined_call_operand.hbm [shape: f32[2,16,128], index: 21, kind: output, shape index: {}]
  %s22 = sld [smem:[#allocation0]]
  $region157: #{tpu_custom_call.1} parent=0
    _
  %s24 = ssub.s32 1, %s22
  %s25 = scalar_select 0, %s24, %s22
  $region1: #{tpu_custom_call.1} parent=0
    #allocation2 [shape = 'u8[8192]{0}', space=vmem, size = 0x2000, scoped, tag = 'input window, operand 0']
    #allocation3 [shape = 's32[2]{0}', space=sflag, size = 0x8, scoped, tag = 'scoped memory for tpu_custom_call.1']
    #allocation4 [shape = 's32[2]{0}', space=sflag, size = 0x8, scoped, tag = 'scoped memory for tpu_custom_call.1']
    #allocation5 [shape = 'u8[16384]{0}', space=vmem, size = 0x4000, scoped, tag = 'input window, operand 1']
    #allocation6 [shape = 's32[2]{0}', space=sflag, size = 0x8, scoped, tag = 'scoped memory for tpu_custom_call.1']
    #allocation7 [shape = 'u8[16384]{0}', space=vmem, size = 0x4000, scoped, tag = 'input window, operand 3, single buffered']
    #allocation8 [shape = 'u8[8192]{0}', space=vmem, size = 0x2000, scoped, tag = 'input window, operand 4, single buffered']
    #allocation9 [shape = 's32[1]{0}', space=sflag, size = 0x4, scoped, tag = 'scoped memory for tpu_custom_call.1']
    #allocation10 [shape = 'u8[98304]{0}', space=vmem, size = 0x18000, scoped, tag = 'input window, operand 5, single buffered']
    #allocation11 [shape = 'u8[32768]{0}', space=vmem, size = 0x8000, scoped, tag = 'input window, operand 11, single buffered']
    #allocation12 [shape = 's32[1]{0}', space=sflag, size = 0x4, scoped, tag = 'scoped memory for tpu_custom_call.1']
    #allocation13 [shape = 'u8[32768]{0}', space=vmem, size = 0x8000, scoped, tag = 'input window, operand 12, single buffered']
    #allocation14 [shape = 'u8[458752]{0}', space=vmem, size = 0x70000, scoped, tag = 'input window, operand 15, single buffered']
    #allocation15 [shape = 's32[1]{0}', space=sflag, size = 0x4, scoped, tag = 'scoped memory for tpu_custom_call.1']
    #allocation16 [shape = 'u8[262144]{0}', space=vmem, size = 0x40000, scoped, tag = 'input window, operand 17, single buffered']
    #allocation17 [shape = 'u8[262144]{0}', space=vmem, size = 0x40000, scoped, tag = 'input window, operand 19, single buffered']
    #allocation18 [shape = 's32[1]{0}', space=sflag, size = 0x4, scoped, tag = 'scoped memory for tpu_custom_call.1']
    #allocation19 [shape = 'u8[16384]{0}', space=vmem, size = 0x4000, scoped, tag = 'output window, operand 0']
    %26 = vsyncpa [#allocation3], 0
    %s27 = scalar_lea.sflag [#allocation3], 1
    %28 = vsyncpa %s27, 0
    %29 = vsyncpa [#allocation6], 0
    %s30 = scalar_lea.sflag [#allocation6], 1
    %31 = vsyncpa %s30, 0
    %32 = vsyncpa [#allocation9], 0
    %33 = vsyncpa [#allocation12], 0
    %34 = vsyncpa [#allocation15], 0
    %35 = vsyncpa [#allocation18], 0
    %36 = vsyncpa [#allocation4], 0
    %s37 = scalar_lea.sflag [#allocation4], 1
    %38 = vsyncpa %s37, 0
    loop: start=0, step=1, limit=4
    $region2: #{tpu_custom_call.1} parent=1 // loop_pre_header
      _
    $region3: #{tpu_custom_call.1} parent=1 // loop_header
      %s40 = sphi 0, %s44
      %p41 = scmp.ge.s32.totalorder %s40, 4
      %s50 = sphi 0, %s52
      %s53 = sphi 0, %s50
      %s54 = sphi 0, %s53
      %s70 = sphi 0, %s54
      %s76 = sphi 0, %s78
      %s79 = sphi 0, %s76
      %s80 = sphi 0, %s79
      %s96 = sphi 0, %s80
      %s100 = sphi 0, %s100
      %s102 = sphi 0, %s100
      %s103 = sphi 0, %s102
      %s117 = sphi 0, %s103
      %s121 = sphi 0, %s121
      %s123 = sphi 0, %s121
      %s124 = sphi 0, %s123
      %s138 = sphi 0, %s124
      %s142 = sphi 0, %s142
      %s144 = sphi 0, %s142
      %s145 = sphi 0, %s144
      %s159 = sphi 0, %s145
      %s163 = sphi 0, %s163
      %s165 = sphi 0, %s163
      %s166 = sphi 0, %s165
      %s180 = sphi 0, %s166
      %s184 = sphi 0, %s184
      %s186 = sphi 0, %s184
      %s187 = sphi 0, %s186
      %s201 = sphi 0, %s187
      %s205 = sphi 0, %s205
      %s207 = sphi 0, %s205
      %s208 = sphi 0, %s207
      %s222 = sphi 0, %s208
      %s226 = sphi 0, %s226
      %s228 = sphi 0, %s226
      %s229 = sphi 0, %s228
      %s243 = sphi 0, %s229
      %s247 = sphi 0, %s247
      %s249 = sphi 0, %s247
      %s250 = sphi 0, %s249
      %s264 = sphi 0, %s250
      %s268 = sphi 0, %s268
      %s270 = sphi 0, %s268
      %s271 = sphi 0, %s270
      %s285 = sphi 0, %s271
      %s289 = sphi 0, %s289
      %s291 = sphi 0, %s289
      %s292 = sphi 0, %s291
      %s306 = sphi 0, %s292
      %s310 = sphi 0, %s310
      %s312 = sphi 0, %s310
      %s313 = sphi 0, %s312
      %s327 = sphi 0, %s313
      %s331 = sphi 0, %s331
      %s333 = sphi 0, %s331
      %s334 = sphi 0, %s333
      %s348 = sphi 0, %s334
      %s352 = sphi 0, %s352
      %s354 = sphi 0, %s352
      %s355 = sphi 0, %s354
      %s369 = sphi 0, %s355
      %s373 = sphi 0, %s373
      %s375 = sphi 0, %s373
      %s376 = sphi 0, %s375
      %s390 = sphi 0, %s376
      %s394 = sphi 0, %s394
      %s396 = sphi 0, %s394
      %s397 = sphi 0, %s396
      %s411 = sphi 0, %s397
      %s415 = sphi 0, %s415
      %s417 = sphi 0, %s415
      %s418 = sphi 0, %s417
      %s432 = sphi 0, %s418
      %s436 = sphi 0, %s436
      %s438 = sphi 0, %s436
      %s439 = sphi 0, %s438
      %s453 = sphi 0, %s439
      %s457 = sphi 0, %s457
      %s459 = sphi 0, %s457
      %s460 = sphi 0, %s459
      %s474 = sphi 0, %s460
      %s478 = sphi 0, %s478
      %s480 = sphi 0, %s478
      %s481 = sphi 0, %s480
      %s495 = sphi 0, %s481
      %s501 = sphi 0, %s503
      %s504 = sphi 0, %s501
      %s505 = sphi 0, %s504
      %s521 = sphi 0, %s505
    $region4: #{tpu_custom_call.1} parent=1 // loop_header_branch
      %43 = sbr.rel (%p41) target = $region8
    $region5: #{tpu_custom_call.1} parent=1 // loop_body
      %s45 = ssub.s32 %s40, 1
      %s46 = ssub.s32 %s40, 2
      %s47 = sadd.s32 %s40, 1
      %s48 = ssub.s32 %s40, %s47
      %p49 = scmp.eq.s32.totalorder %s48, 0
      %s51 = sadd.s32 %s50, 1
      %s52 = scalar_select %p49, %s50, %s51
      %p55 = pneg %p49
      %p56 = scmp.eq.s32.totalorder %s40, 1
      %p57 = por %p55, %p56
      %p58 = scmp.ne.s32.totalorder %s50, %s53
      %p59 = scmp.eq.s32.totalorder %s40, 0
      %p60 = por %p58, %p59
      %p61 = scmp.ne.s32.totalorder %s50, %s53
      %p62 = scmp.eq.s32.totalorder %s45, 1
      %p63 = por %p61, %p62
      %p64 = scmp.ne.s32.totalorder %s53, %s54
      %p65 = scmp.eq.s32.totalorder %s45, 0
      %p66 = por %p64, %p65
      %p67 = scmp.ne.s32.totalorder %s53, %s54
      %p68 = scmp.eq.s32.totalorder %s46, 1
      %p69 = por %p67, %p68
      %p71 = scmp.ne.s32.totalorder %s54, %s70
      %p72 = scmp.eq.s32.totalorder %s46, 0
      %p73 = por %p71, %p72
      %s74 = ssub.s32 %s40, %s47
      %p75 = scmp.eq.s32.totalorder %s74, 0
      %s77 = sadd.s32 %s76, 1
      %s78 = scalar_select %p75, %s76, %s77
      %p81 = pneg %p75
      %p82 = scmp.eq.s32.totalorder %s40, 1
      %p83 = por %p81, %p82
      %p84 = scmp.ne.s32.totalorder %s76, %s79
      %p85 = scmp.eq.s32.totalorder %s40, 0
      %p86 = por %p84, %p85
      %p87 = scmp.ne.s32.totalorder %s76, %s79
      %p88 = scmp.eq.s32.totalorder %s45, 1
      %p89 = por %p87, %p88
      %p90 = scmp.ne.s32.totalorder %s79, %s80
      %p91 = scmp.eq.s32.totalorder %s45, 0
      %p92 = por %p90, %p91
      %p93 = scmp.ne.s32.totalorder %s79, %s80
      %p94 = scmp.eq.s32.totalorder %s46, 1
      %p95 = por %p93, %p94
      %p97 = scmp.ne.s32.totalorder %s80, %s96
      %p98 = scmp.eq.s32.totalorder %s46, 0
      %p99 = por %p97, %p98
      %s101 = sadd.s32 %s100, 1
      %p104 = scmp.eq.s32.totalorder %s40, 1
      %p105 = scmp.ne.s32.totalorder %s100, %s102
      %p106 = scmp.eq.s32.totalorder %s40, 0
      %p107 = por %p105, %p106
      %p108 = scmp.ne.s32.totalorder %s100, %s102
      %p109 = scmp.eq.s32.totalorder %s45, 1
      %p110 = por %p108, %p109
      %p111 = scmp.ne.s32.totalorder %s102, %s103
      %p112 = scmp.eq.s32.totalorder %s45, 0
      %p113 = por %p111, %p112
      %p114 = scmp.ne.s32.totalorder %s102, %s103
      %p115 = scmp.eq.s32.totalorder %s46, 1
      %p116 = por %p114, %p115
      %p118 = scmp.ne.s32.totalorder %s103, %s117
      %p119 = scmp.eq.s32.totalorder %s46, 0
      %p120 = por %p118, %p119
      %s122 = sadd.s32 %s121, 1
      %p125 = scmp.eq.s32.totalorder %s40, 1
      %p126 = scmp.ne.s32.totalorder %s121, %s123
      %p127 = scmp.eq.s32.totalorder %s40, 0
      %p128 = por %p126, %p127
      %p129 = scmp.ne.s32.totalorder %s121, %s123
      %p130 = scmp.eq.s32.totalorder %s45, 1
      %p131 = por %p129, %p130
      %p132 = scmp.ne.s32.totalorder %s123, %s124
      %p133 = scmp.eq.s32.totalorder %s45, 0
      %p134 = por %p132, %p133
      %p135 = scmp.ne.s32.totalorder %s123, %s124
      %p136 = scmp.eq.s32.totalorder %s46, 1
      %p137 = por %p135, %p136
      %p139 = scmp.ne.s32.totalorder %s124, %s138
      %p140 = scmp.eq.s32.totalorder %s46, 0
      %p141 = por %p139, %p140
      %s143 = sadd.s32 %s142, 1
      %p146 = scmp.eq.s32.totalorder %s40, 1
      %p147 = scmp.ne.s32.totalorder %s142, %s144
      %p148 = scmp.eq.s32.totalorder %s40, 0
      %p149 = por %p147, %p148
      %p150 = scmp.ne.s32.totalorder %s142, %s144
      %p151 = scmp.eq.s32.totalorder %s45, 1
      %p152 = por %p150, %p151
      %p153 = scmp.ne.s32.totalorder %s144, %s145
      %p154 = scmp.eq.s32.totalorder %s45, 0
      %p155 = por %p153, %p154
      %p156 = scmp.ne.s32.totalorder %s144, %s145
      %p157 = scmp.eq.s32.totalorder %s46, 1
      %p158 = por %p156, %p157
      %p160 = scmp.ne.s32.totalorder %s145, %s159
      %p161 = scmp.eq.s32.totalorder %s46, 0
      %p162 = por %p160, %p161
      %s164 = sadd.s32 %s163, 1
      %p167 = scmp.eq.s32.totalorder %s40, 1
      %p168 = scmp.ne.s32.totalorder %s163, %s165
      %p169 = scmp.eq.s32.totalorder %s40, 0
      %p170 = por %p168, %p169
      %p171 = scmp.ne.s32.totalorder %s163, %s165
      %p172 = scmp.eq.s32.totalorder %s45, 1
      %p173 = por %p171, %p172
      %p174 = scmp.ne.s32.totalorder %s165, %s166
      %p175 = scmp.eq.s32.totalorder %s45, 0
      %p176 = por %p174, %p175
      %p177 = scmp.ne.s32.totalorder %s165, %s166
      %p178 = scmp.eq.s32.totalorder %s46, 1
      %p179 = por %p177, %p178
      %p181 = scmp.ne.s32.totalorder %s166, %s180
      %p182 = scmp.eq.s32.totalorder %s46, 0
      %p183 = por %p181, %p182
      %s185 = sadd.s32 %s184, 1
      %p188 = scmp.eq.s32.totalorder %s40, 1
      %p189 = scmp.ne.s32.totalorder %s184, %s186
      %p190 = scmp.eq.s32.totalorder %s40, 0
      %p191 = por %p189, %p190
      %p192 = scmp.ne.s32.totalorder %s184, %s186
      %p193 = scmp.eq.s32.totalorder %s45, 1
      %p194 = por %p192, %p193
      %p195 = scmp.ne.s32.totalorder %s186, %s187
      %p196 = scmp.eq.s32.totalorder %s45, 0
      %p197 = por %p195, %p196
      %p198 = scmp.ne.s32.totalorder %s186, %s187
      %p199 = scmp.eq.s32.totalorder %s46, 1
      %p200 = por %p198, %p199
      %p202 = scmp.ne.s32.totalorder %s187, %s201
      %p203 = scmp.eq.s32.totalorder %s46, 0
      %p204 = por %p202, %p203
      %s206 = sadd.s32 %s205, 1
      %p209 = scmp.eq.s32.totalorder %s40, 1
      %p210 = scmp.ne.s32.totalorder %s205, %s207
      %p211 = scmp.eq.s32.totalorder %s40, 0
      %p212 = por %p210, %p211
      %p213 = scmp.ne.s32.totalorder %s205, %s207
      %p214 = scmp.eq.s32.totalorder %s45, 1
      %p215 = por %p213, %p214
      %p216 = scmp.ne.s32.totalorder %s207, %s208
      %p217 = scmp.eq.s32.totalorder %s45, 0
      %p218 = por %p216, %p217
      %p219 = scmp.ne.s32.totalorder %s207, %s208
      %p220 = scmp.eq.s32.totalorder %s46, 1
      %p221 = por %p219, %p220
      %p223 = scmp.ne.s32.totalorder %s208, %s222
      %p224 = scmp.eq.s32.totalorder %s46, 0
      %p225 = por %p223, %p224
      %s227 = sadd.s32 %s226, 1
      %p230 = scmp.eq.s32.totalorder %s40, 1
      %p231 = scmp.ne.s32.totalorder %s226, %s228
      %p232 = scmp.eq.s32.totalorder %s40, 0
      %p233 = por %p231, %p232
      %p234 = scmp.ne.s32.totalorder %s226, %s228
      %p235 = scmp.eq.s32.totalorder %s45, 1
      %p236 = por %p234, %p235
      %p237 = scmp.ne.s32.totalorder %s228, %s229
      %p238 = scmp.eq.s32.totalorder %s45, 0
      %p239 = por %p237, %p238
      %p240 = scmp.ne.s32.totalorder %s228, %s229
      %p241 = scmp.eq.s32.totalorder %s46, 1
      %p242 = por %p240, %p241
      %p244 = scmp.ne.s32.totalorder %s229, %s243
      %p245 = scmp.eq.s32.totalorder %s46, 0
      %p246 = por %p244, %p245
      %s248 = sadd.s32 %s247, 1
      %p251 = scmp.eq.s32.totalorder %s40, 1
      %p252 = scmp.ne.s32.totalorder %s247, %s249
      %p253 = scmp.eq.s32.totalorder %s40, 0
      %p254 = por %p252, %p253
      %p255 = scmp.ne.s32.totalorder %s247, %s249
      %p256 = scmp.eq.s32.totalorder %s45, 1
      %p257 = por %p255, %p256
      %p258 = scmp.ne.s32.totalorder %s249, %s250
      %p259 = scmp.eq.s32.totalorder %s45, 0
      %p260 = por %p258, %p259
      %p261 = scmp.ne.s32.totalorder %s249, %s250
      %p262 = scmp.eq.s32.totalorder %s46, 1
      %p263 = por %p261, %p262
      %p265 = scmp.ne.s32.totalorder %s250, %s264
      %p266 = scmp.eq.s32.totalorder %s46, 0
      %p267 = por %p265, %p266
      %s269 = sadd.s32 %s268, 1
      %p272 = scmp.eq.s32.totalorder %s40, 1
      %p273 = scmp.ne.s32.totalorder %s268, %s270
      %p274 = scmp.eq.s32.totalorder %s40, 0
      %p275 = por %p273, %p274
      %p276 = scmp.ne.s32.totalorder %s268, %s270
      %p277 = scmp.eq.s32.totalorder %s45, 1
      %p278 = por %p276, %p277
      %p279 = scmp.ne.s32.totalorder %s270, %s271
      %p280 = scmp.eq.s32.totalorder %s45, 0
      %p281 = por %p279, %p280
      %p282 = scmp.ne.s32.totalorder %s270, %s271
      %p283 = scmp.eq.s32.totalorder %s46, 1
      %p284 = por %p282, %p283
      %p286 = scmp.ne.s32.totalorder %s271, %s285
      %p287 = scmp.eq.s32.totalorder %s46, 0
      %p288 = por %p286, %p287
      %s290 = sadd.s32 %s289, 1
      %p293 = scmp.eq.s32.totalorder %s40, 1
      %p294 = scmp.ne.s32.totalorder %s289, %s291
      %p295 = scmp.eq.s32.totalorder %s40, 0
      %p296 = por %p294, %p295
      %p297 = scmp.ne.s32.totalorder %s289, %s291
      %p298 = scmp.eq.s32.totalorder %s45, 1
      %p299 = por %p297, %p298
      %p300 = scmp.ne.s32.totalorder %s291, %s292
      %p301 = scmp.eq.s32.totalorder %s45, 0
      %p302 = por %p300, %p301
      %p303 = scmp.ne.s32.totalorder %s291, %s292
      %p304 = scmp.eq.s32.totalorder %s46, 1
      %p305 = por %p303, %p304
      %p307 = scmp.ne.s32.totalorder %s292, %s306
      %p308 = scmp.eq.s32.totalorder %s46, 0
      %p309 = por %p307, %p308
      %s311 = sadd.s32 %s310, 1
      %p314 = scmp.eq.s32.totalorder %s40, 1
      %p315 = scmp.ne.s32.totalorder %s310, %s312
      %p316 = scmp.eq.s32.totalorder %s40, 0
      %p317 = por %p315, %p316
      %p318 = scmp.ne.s32.totalorder %s310, %s312
      %p319 = scmp.eq.s32.totalorder %s45, 1
      %p320 = por %p318, %p319
      %p321 = scmp.ne.s32.totalorder %s312, %s313
      %p322 = scmp.eq.s32.totalorder %s45, 0
      %p323 = por %p321, %p322
      %p324 = scmp.ne.s32.totalorder %s312, %s313
      %p325 = scmp.eq.s32.totalorder %s46, 1
      %p326 = por %p324, %p325
      %p328 = scmp.ne.s32.totalorder %s313, %s327
      %p329 = scmp.eq.s32.totalorder %s46, 0
      %p330 = por %p328, %p329
      %s332 = sadd.s32 %s331, 1
      %p335 = scmp.eq.s32.totalorder %s40, 1
      %p336 = scmp.ne.s32.totalorder %s331, %s333
      %p337 = scmp.eq.s32.totalorder %s40, 0
      %p338 = por %p336, %p337
      %p339 = scmp.ne.s32.totalorder %s331, %s333
      %p340 = scmp.eq.s32.totalorder %s45, 1
      %p341 = por %p339, %p340
      %p342 = scmp.ne.s32.totalorder %s333, %s334
      %p343 = scmp.eq.s32.totalorder %s45, 0
      %p344 = por %p342, %p343
      %p345 = scmp.ne.s32.totalorder %s333, %s334
      %p346 = scmp.eq.s32.totalorder %s46, 1
      %p347 = por %p345, %p346
      %p349 = scmp.ne.s32.totalorder %s334, %s348
      %p350 = scmp.eq.s32.totalorder %s46, 0
      %p351 = por %p349, %p350
      %s353 = sadd.s32 %s352, 1
      %p356 = scmp.eq.s32.totalorder %s40, 1
      %p357 = scmp.ne.s32.totalorder %s352, %s354
      %p358 = scmp.eq.s32.totalorder %s40, 0
      %p359 = por %p357, %p358
      %p360 = scmp.ne.s32.totalorder %s352, %s354
      %p361 = scmp.eq.s32.totalorder %s45, 1
      %p362 = por %p360, %p361
      %p363 = scmp.ne.s32.totalorder %s354, %s355
      %p364 = scmp.eq.s32.totalorder %s45, 0
      %p365 = por %p363, %p364
      %p366 = scmp.ne.s32.totalorder %s354, %s355
      %p367 = scmp.eq.s32.totalorder %s46, 1
      %p368 = por %p366, %p367
      %p370 = scmp.ne.s32.totalorder %s355, %s369
      %p371 = scmp.eq.s32.totalorder %s46, 0
      %p372 = por %p370, %p371
      %s374 = sadd.s32 %s373, 1
      %p377 = scmp.eq.s32.totalorder %s40, 1
      %p378 = scmp.ne.s32.totalorder %s373, %s375
      %p379 = scmp.eq.s32.totalorder %s40, 0
      %p380 = por %p378, %p379
      %p381 = scmp.ne.s32.totalorder %s373, %s375
      %p382 = scmp.eq.s32.totalorder %s45, 1
      %p383 = por %p381, %p382
      %p384 = scmp.ne.s32.totalorder %s375, %s376
      %p385 = scmp.eq.s32.totalorder %s45, 0
      %p386 = por %p384, %p385
      %p387 = scmp.ne.s32.totalorder %s375, %s376
      %p388 = scmp.eq.s32.totalorder %s46, 1
      %p389 = por %p387, %p388
      %p391 = scmp.ne.s32.totalorder %s376, %s390
      %p392 = scmp.eq.s32.totalorder %s46, 0
      %p393 = por %p391, %p392
      %s395 = sadd.s32 %s394, 1
      %p398 = scmp.eq.s32.totalorder %s40, 1
      %p399 = scmp.ne.s32.totalorder %s394, %s396
      %p400 = scmp.eq.s32.totalorder %s40, 0
      %p401 = por %p399, %p400
      %p402 = scmp.ne.s32.totalorder %s394, %s396
      %p403 = scmp.eq.s32.totalorder %s45, 1
      %p404 = por %p402, %p403
      %p405 = scmp.ne.s32.totalorder %s396, %s397
      %p406 = scmp.eq.s32.totalorder %s45, 0
      %p407 = por %p405, %p406
      %p408 = scmp.ne.s32.totalorder %s396, %s397
      %p409 = scmp.eq.s32.totalorder %s46, 1
      %p410 = por %p408, %p409
      %p412 = scmp.ne.s32.totalorder %s397, %s411
      %p413 = scmp.eq.s32.totalorder %s46, 0
      %p414 = por %p412, %p413
      %s416 = sadd.s32 %s415, 1
      %p419 = scmp.eq.s32.totalorder %s40, 1
      %p420 = scmp.ne.s32.totalorder %s415, %s417
      %p421 = scmp.eq.s32.totalorder %s40, 0
      %p422 = por %p420, %p421
      %p423 = scmp.ne.s32.totalorder %s415, %s417
      %p424 = scmp.eq.s32.totalorder %s45, 1
      %p425 = por %p423, %p424
      %p426 = scmp.ne.s32.totalorder %s417, %s418
      %p427 = scmp.eq.s32.totalorder %s45, 0
      %p428 = por %p426, %p427
      %p429 = scmp.ne.s32.totalorder %s417, %s418
      %p430 = scmp.eq.s32.totalorder %s46, 1
      %p431 = por %p429, %p430
      %p433 = scmp.ne.s32.totalorder %s418, %s432
      %p434 = scmp.eq.s32.totalorder %s46, 0
      %p435 = por %p433, %p434
      %s437 = sadd.s32 %s436, 1
      %p440 = scmp.eq.s32.totalorder %s40, 1
      %p441 = scmp.ne.s32.totalorder %s436, %s438
      %p442 = scmp.eq.s32.totalorder %s40, 0
      %p443 = por %p441, %p442
      %p444 = scmp.ne.s32.totalorder %s436, %s438
      %p445 = scmp.eq.s32.totalorder %s45, 1
      %p446 = por %p444, %p445
      %p447 = scmp.ne.s32.totalorder %s438, %s439
      %p448 = scmp.eq.s32.totalorder %s45, 0
      %p449 = por %p447, %p448
      %p450 = scmp.ne.s32.totalorder %s438, %s439
      %p451 = scmp.eq.s32.totalorder %s46, 1
      %p452 = por %p450, %p451
      %p454 = scmp.ne.s32.totalorder %s439, %s453
      %p455 = scmp.eq.s32.totalorder %s46, 0
      %p456 = por %p454, %p455
      %s458 = sadd.s32 %s457, 1
      %p461 = scmp.eq.s32.totalorder %s40, 1
      %p462 = scmp.ne.s32.totalorder %s457, %s459
      %p463 = scmp.eq.s32.totalorder %s40, 0
      %p464 = por %p462, %p463
      %p465 = scmp.ne.s32.totalorder %s457, %s459
      %p466 = scmp.eq.s32.totalorder %s45, 1
      %p467 = por %p465, %p466
      %p468 = scmp.ne.s32.totalorder %s459, %s460
      %p469 = scmp.eq.s32.totalorder %s45, 0
      %p470 = por %p468, %p469
      %p471 = scmp.ne.s32.totalorder %s459, %s460
      %p472 = scmp.eq.s32.totalorder %s46, 1
      %p473 = por %p471, %p472
      %p475 = scmp.ne.s32.totalorder %s460, %s474
      %p476 = scmp.eq.s32.totalorder %s46, 0
      %p477 = por %p475, %p476
      %s479 = sadd.s32 %s478, 1
      %p482 = scmp.eq.s32.totalorder %s40, 1
      %p483 = scmp.ne.s32.totalorder %s478, %s480
      %p484 = scmp.eq.s32.totalorder %s40, 0
      %p485 = por %p483, %p484
      %p486 = scmp.ne.s32.totalorder %s478, %s480
      %p487 = scmp.eq.s32.totalorder %s45, 1
      %p488 = por %p486, %p487
      %p489 = scmp.ne.s32.totalorder %s480, %s481
      %p490 = scmp.eq.s32.totalorder %s45, 0
      %p491 = por %p489, %p490
      %p492 = scmp.ne.s32.totalorder %s480, %s481
      %p493 = scmp.eq.s32.totalorder %s46, 1
      %p494 = por %p492, %p493
      %p496 = scmp.ne.s32.totalorder %s481, %s495
      %p497 = scmp.eq.s32.totalorder %s46, 0
      %p498 = por %p496, %p497
      %s499 = ssub.s32 %s40, %s47
      %p500 = scmp.eq.s32.totalorder %s499, 0
      %s502 = sadd.s32 %s501, 1
      %s503 = scalar_select %p500, %s501, %s502
      %p506 = pneg %p500
      %p507 = scmp.eq.s32.totalorder %s40, 1
      %p508 = por %p506, %p507
      %p509 = scmp.ne.s32.totalorder %s501, %s504
      %p510 = scmp.eq.s32.totalorder %s40, 0
      %p511 = por %p509, %p510
      %p512 = scmp.ne.s32.totalorder %s501, %s504
      %p513 = scmp.eq.s32.totalorder %s45, 1
      %p514 = por %p512, %p513
      %p515 = scmp.ne.s32.totalorder %s504, %s505
      %p516 = scmp.eq.s32.totalorder %s45, 0
      %p517 = por %p515, %p516
      %p518 = scmp.ne.s32.totalorder %s504, %s505
      %p519 = scmp.eq.s32.totalorder %s46, 1
      %p520 = por %p518, %p519
      %p522 = scmp.ne.s32.totalorder %s505, %s521
      %p523 = scmp.eq.s32.totalorder %s46, 0
      %p524 = por %p522, %p523
      %p525 = scmp.le.s32.totalorder 1, %s40
      %p526 = scmp.lt.s32.totalorder %s40, 3
      %p527 = pnand %p525, %p526
      %p528 = pneg %p527
      // Predicated region
      $region9: #{tpu_custom_call.1} parent=5 // pred_check
        _
      $region10: #{tpu_custom_call.1} parent=5 // pred_check_branch
        %530 = sbr.rel (%p527) target = $region12
      $region11: #{tpu_custom_call.1} parent=5 // pred_region
        %s531 = ssub.s32 %s40, 1
        // Predicated region
        $region13: #{tpu_custom_call.1} parent=11 // pred_check
          %p532 = pneg %p113
        $region14: #{tpu_custom_call.1} parent=11 // pred_check_branch
          %534 = sbr.rel (%p532) target = $region16
        $region15: #{tpu_custom_call.1} parent=11 // pred_region
          _
        $region16: #{tpu_custom_call.1} parent=11 // pred_fallthru
          _
        // Predicated region
        $region17: #{tpu_custom_call.1} parent=11 // pred_check
          %p535 = pneg %p134
        $region18: #{tpu_custom_call.1} parent=11 // pred_check_branch
          %537 = sbr.rel (%p535) target = $region20
        $region19: #{tpu_custom_call.1} parent=11 // pred_region
          %s539 = ssub.s32 512, 512
          %540 = vsyncadd [#allocation6], %s539
          %s541 = sshll.u32 [#allocation7], 4
          %s542 = int_to_ptr.vmem [resolvable:$true] %s541
          %547 = dma.hbm_to_vmem [thread:$0]  %s3, 512, %s542, [#allocation6], 128, 128, 8
        $region20: #{tpu_custom_call.1} parent=11 // pred_fallthru
          _
        // Predicated region
        $region21: #{tpu_custom_call.1} parent=11 // pred_check
          %p548 = pneg %p155
        $region22: #{tpu_custom_call.1} parent=11 // pred_check_branch
          %550 = sbr.rel (%p548) target = $region24
        $region23: #{tpu_custom_call.1} parent=11 // pred_region
          %s552 = ssub.s32 256, 256
          %553 = vsyncadd [#allocation9], %s552
          %s554 = sshll.u32 [#allocation8], 4
          %s555 = int_to_ptr.vmem [resolvable:$true] %s554
          %560 = dma.hbm_to_vmem [thread:$0]  %s4, 256, %s555, [#allocation9], 128, 128, 8
        $region24: #{tpu_custom_call.1} parent=11 // pred_fallthru
          _
        // Predicated region
        $region25: #{tpu_custom_call.1} parent=11 // pred_check
          %p561 = pneg %p176
        $region26: #{tpu_custom_call.1} parent=11 // pred_check_branch
          %563 = sbr.rel (%p561) target = $region28
        $region27: #{tpu_custom_call.1} parent=11 // pred_region
          %s565 = ssub.s32 3072, 3072
          %566 = vsyncadd [#allocation9], %s565
          %s567 = sshll.u32 [#allocation10], 4
          %s568 = int_to_ptr.vmem [resolvable:$true] %s567
          %573 = dma.hbm_to_vmem [thread:$0]  %s5, 3072, %s568, [#allocation9], 128, 128, 8
        $region28: #{tpu_custom_call.1} parent=11 // pred_fallthru
          _
        // Predicated region
        $region29: #{tpu_custom_call.1} parent=11 // pred_check
          %p574 = pneg %p197
        $region30: #{tpu_custom_call.1} parent=11 // pred_check_branch
          %576 = sbr.rel (%p574) target = $region32
        $region31: #{tpu_custom_call.1} parent=11 // pred_region
          _
        $region32: #{tpu_custom_call.1} parent=11 // pred_fallthru
          _
        // Predicated region
        $region33: #{tpu_custom_call.1} parent=11 // pred_check
          %p577 = pneg %p218
        $region34: #{tpu_custom_call.1} parent=11 // pred_check_branch
          %579 = sbr.rel (%p577) target = $region36
        $region35: #{tpu_custom_call.1} parent=11 // pred_region
          _
        $region36: #{tpu_custom_call.1} parent=11 // pred_fallthru
          _
        // Predicated region
        $region37: #{tpu_custom_call.1} parent=11 // pred_check
          %p580 = pneg %p239
        $region38: #{tpu_custom_call.1} parent=11 // pred_check_branch
          %582 = sbr.rel (%p580) target = $region40
        $region39: #{tpu_custom_call.1} parent=11 // pred_region
          _
        $region40: #{tpu_custom_call.1} parent=11 // pred_fallthru
          _
        // Predicated region
        $region41: #{tpu_custom_call.1} parent=11 // pred_check
          %p583 = pneg %p260
        $region42: #{tpu_custom_call.1} parent=11 // pred_check_branch
          %585 = sbr.rel (%p583) target = $region44
        $region43: #{tpu_custom_call.1} parent=11 // pred_region
          _
        $region44: #{tpu_custom_call.1} parent=11 // pred_fallthru
          _
        // Predicated region
        $region45: #{tpu_custom_call.1} parent=11 // pred_check
          %p586 = pneg %p281
        $region46: #{tpu_custom_call.1} parent=11 // pred_check_branch
          %588 = sbr.rel (%p586) target = $region48
        $region47: #{tpu_custom_call.1} parent=11 // pred_region
          _
        $region48: #{tpu_custom_call.1} parent=11 // pred_fallthru
          _
        // Predicated region
        $region49: #{tpu_custom_call.1} parent=11 // pred_check
          %p589 = pneg %p302
        $region50: #{tpu_custom_call.1} parent=11 // pred_check_branch
          %591 = sbr.rel (%p589) target = $region52
        $region51: #{tpu_custom_call.1} parent=11 // pred_region
          %s593 = ssub.s32 1024, 1024
          %594 = vsyncadd [#allocation12], %s593
          %s595 = sshll.u32 [#allocation11], 4
          %s596 = int_to_ptr.vmem [resolvable:$true] %s595
          %601 = dma.hbm_to_vmem [thread:$0]  %s11, 1024, %s596, [#allocation12], 128, 128, 8
        $region52: #{tpu_custom_call.1} parent=11 // pred_fallthru
          _
        // Predicated region
        $region53: #{tpu_custom_call.1} parent=11 // pred_check
          %p602 = pneg %p323
        $region54: #{tpu_custom_call.1} parent=11 // pred_check_branch
          %604 = sbr.rel (%p602) target = $region56
        $region55: #{tpu_custom_call.1} parent=11 // pred_region
          %s606 = ssub.s32 1024, 1024
          %607 = vsyncadd [#allocation12], %s606
          %s608 = sshll.u32 [#allocation13], 4
          %s609 = int_to_ptr.vmem [resolvable:$true] %s608
          %614 = dma.hbm_to_vmem [thread:$0]  %s12, 1024, %s609, [#allocation12], 128, 128, 8
        $region56: #{tpu_custom_call.1} parent=11 // pred_fallthru
          _
        // Predicated region
        $region57: #{tpu_custom_call.1} parent=11 // pred_check
          %p615 = pneg %p344
        $region58: #{tpu_custom_call.1} parent=11 // pred_check_branch
          %617 = sbr.rel (%p615) target = $region60
        $region59: #{tpu_custom_call.1} parent=11 // pred_region
          _
        $region60: #{tpu_custom_call.1} parent=11 // pred_fallthru
          _
        // Predicated region
        $region61: #{tpu_custom_call.1} parent=11 // pred_check
          %p618 = pneg %p365
        $region62: #{tpu_custom_call.1} parent=11 // pred_check_branch
          %620 = sbr.rel (%p618) target = $region64
        $region63: #{tpu_custom_call.1} parent=11 // pred_region
          _
        $region64: #{tpu_custom_call.1} parent=11 // pred_fallthru
          _
        // Predicated region
        $region65: #{tpu_custom_call.1} parent=11 // pred_check
          %p621 = pneg %p386
        $region66: #{tpu_custom_call.1} parent=11 // pred_check_branch
          %623 = sbr.rel (%p621) target = $region68
        $region67: #{tpu_custom_call.1} parent=11 // pred_region
          %s625 = ssub.s32 14336, 14336
          %626 = vsyncadd [#allocation15], %s625
          %s627 = sshll.u32 [#allocation14], 4
          %s628 = int_to_ptr.vmem [resolvable:$true] %s627
          %633 = dma.hbm_to_vmem [thread:$0]  %s15, 14336, %s628, [#allocation15], 128, 128, 8
        $region68: #{tpu_custom_call.1} parent=11 // pred_fallthru
          _
        // Predicated region
        $region69: #{tpu_custom_call.1} parent=11 // pred_check
          %p634 = pneg %p407
        $region70: #{tpu_custom_call.1} parent=11 // pred_check_branch
          %636 = sbr.rel (%p634) target = $region72
        $region71: #{tpu_custom_call.1} parent=11 // pred_region
          _
        $region72: #{tpu_custom_call.1} parent=11 // pred_fallthru
          _
        // Predicated region
        $region73: #{tpu_custom_call.1} parent=11 // pred_check
          %p637 = pneg %p428
        $region74: #{tpu_custom_call.1} parent=11 // pred_check_branch
          %639 = sbr.rel (%p637) target = $region76
        $region75: #{tpu_custom_call.1} parent=11 // pred_region
          %s641 = ssub.s32 8192, 8192
          %642 = vsyncadd [#allocation15], %s641
          %s643 = sshll.u32 [#allocation16], 4
          %s644 = int_to_ptr.vmem [resolvable:$true] %s643
          %649 = dma.hbm_to_vmem [thread:$0]  %s17, 8192, %s644, [#allocation15], 512, 512, 32
        $region76: #{tpu_custom_call.1} parent=11 // pred_fallthru
          _
        // Predicated region
        $region77: #{tpu_custom_call.1} parent=11 // pred_check
          %p650 = pneg %p449
        $region78: #{tpu_custom_call.1} parent=11 // pred_check_branch
          %652 = sbr.rel (%p650) target = $region80
        $region79: #{tpu_custom_call.1} parent=11 // pred_region
          _
        $region80: #{tpu_custom_call.1} parent=11 // pred_fallthru
          _
        // Predicated region
        $region81: #{tpu_custom_call.1} parent=11 // pred_check
          %p653 = pneg %p470
        $region82: #{tpu_custom_call.1} parent=11 // pred_check_branch
          %655 = sbr.rel (%p653) target = $region84
        $region83: #{tpu_custom_call.1} parent=11 // pred_region
          %s657 = ssub.s32 8192, 8192
          %658 = vsyncadd [#allocation18], %s657
          %s659 = sshll.u32 [#allocation17], 4
          %s660 = int_to_ptr.vmem [resolvable:$true] %s659
          %665 = dma.hbm_to_vmem [thread:$0]  %s19, 8192, %s660, [#allocation18], 128, 128, 8
        $region84: #{tpu_custom_call.1} parent=11 // pred_fallthru
          _
        // Predicated region
        $region85: #{tpu_custom_call.1} parent=11 // pred_check
          %p666 = pneg %p491
        $region86: #{tpu_custom_call.1} parent=11 // pred_check_branch
          %668 = sbr.rel (%p666) target = $region88
        $region87: #{tpu_custom_call.1} parent=11 // pred_region
          _
        $region88: #{tpu_custom_call.1} parent=11 // pred_fallthru
          _
      $region12: #{tpu_custom_call.1} parent=5 // pred_fallthru
        _
      %p669 = scmp.lt.s32.totalorder %s40, 2
      // Predicated region
      $region89: #{tpu_custom_call.1} parent=5 // pred_check
        %p670 = pneg %p669
      $region90: #{tpu_custom_call.1} parent=5 // pred_check_branch
        %672 = sbr.rel (%p670) target = $region92
      $region91: #{tpu_custom_call.1} parent=5 // pred_region
        // Predicated region
        $region93: #{tpu_custom_call.1} parent=91 // pred_check
          %p673 = pneg %p60
        $region94: #{tpu_custom_call.1} parent=91 // pred_check_branch
          %675 = sbr.rel (%p673) target = $region96
        $region95: #{tpu_custom_call.1} parent=91 // pred_region
          %s676 = sand.u32 %s50, 1
          %s677 = scalar_lea.sflag [#allocation3], %s676
          %s678 = sand.u32 %s50, 1
          %s679 = smul.addr %s678, 8
          %s680 = scalar_lea.vmem [#allocation2], %s679
          %s682 = ssub.s32 128, 128
          %683 = vsyncadd %s677, %s682
          %s684 = smul.addr %s40, 128
          %s685 = scalar_lea.hbm %s0, %s684
          %s687 = sshll.u32 %s680, 4
          %s688 = int_to_ptr.vmem [resolvable:$true] %s687
          %690 = dma.hbm_to_vmem [thread:$0]  %s685, 128, %s688, %s677
        $region96: #{tpu_custom_call.1} parent=91 // pred_fallthru
          _
        // Predicated region
        $region97: #{tpu_custom_call.1} parent=91 // pred_check
          %p691 = pneg %p86
        $region98: #{tpu_custom_call.1} parent=91 // pred_check_branch
          %693 = sbr.rel (%p691) target = $region100
        $region99: #{tpu_custom_call.1} parent=91 // pred_region
          %s694 = sand.u32 %s40, 1
          %s695 = scalar_lea.sflag [#allocation6], %s694
          %s696 = sand.u32 %s76, 1
          %s697 = smul.addr %s696, 16
          %s698 = scalar_lea.vmem [#allocation5], %s697
          %s700 = ssub.s32 256, 256
          %701 = vsyncadd %s695, %s700
          %s702 = smul.addr %s40, 2
          %s703 = smul.addr %s702, 128
          %s704 = scalar_lea.hbm %s1, %s703
          %s705 = sshll.u32 %s698, 4
          %s706 = int_to_ptr.vmem [resolvable:$true] %s705
          %711 = dma.hbm_to_vmem [thread:$0]  %s704, 256, %s706, %s695, 128, 128, 8
        $region100: #{tpu_custom_call.1} parent=91 // pred_fallthru
          _
      $region92: #{tpu_custom_call.1} parent=5 // pred_fallthru
        _
      %p712 = scmp.le.s32.totalorder 1, %s40
      %p713 = scmp.lt.s32.totalorder %s40, 3
      %p714 = pnand %p712, %p713
      %p715 = pneg %p714
      // Predicated region
      $region101: #{tpu_custom_call.1} parent=5 // pred_check
        _
      $region102: #{tpu_custom_call.1} parent=5 // pred_check_branch
        %717 = sbr.rel (%p714) target = $region104
      $region103: #{tpu_custom_call.1} parent=5 // pred_region
        %s718 = ssub.s32 %s40, 1
        %s719 = sand.u32 %s53, 1
        %s720 = scalar_lea.sflag [#allocation3], %s719
        %s721 = sand.u32 %s53, 1
        %s722 = smul.addr %s721, 8
        %s723 = scalar_lea.vmem [#allocation2], %s722
        // Predicated region
        $region105: #{tpu_custom_call.1} parent=103 // pred_check
          %p724 = pneg %p66
        $region106: #{tpu_custom_call.1} parent=103 // pred_check_branch
          %726 = sbr.rel (%p724) target = $region108
        $region107: #{tpu_custom_call.1} parent=103 // pred_region
          %727 = dma.done %s720, 128
        $region108: #{tpu_custom_call.1} parent=103 // pred_fallthru
          _
        %s728 = sand.u32 %s45, 1
        %s729 = scalar_lea.sflag [#allocation6], %s728
        %s730 = sand.u32 %s79, 1
        %s731 = smul.addr %s730, 16
        %s732 = scalar_lea.vmem [#allocation5], %s731
        // Predicated region
        $region109: #{tpu_custom_call.1} parent=103 // pred_check
          %p733 = pneg %p92
        $region110: #{tpu_custom_call.1} parent=103 // pred_check_branch
          %735 = sbr.rel (%p733) target = $region112
        $region111: #{tpu_custom_call.1} parent=103 // pred_region
          %736 = dma.done %s729, 256
        $region112: #{tpu_custom_call.1} parent=103 // pred_fallthru
          _
        // Predicated region
        $region113: #{tpu_custom_call.1} parent=103 // pred_check
          %p737 = pneg %p134
        $region114: #{tpu_custom_call.1} parent=103 // pred_check_branch
          %739 = sbr.rel (%p737) target = $region116
        $region115: #{tpu_custom_call.1} parent=103 // pred_region
          %740 = dma.done [#allocation6], 512
        $region116: #{tpu_custom_call.1} parent=103 // pred_fallthru
          _
        // Predicated region
        $region117: #{tpu_custom_call.1} parent=103 // pred_check
          %p741 = pneg %p155
        $region118: #{tpu_custom_call.1} parent=103 // pred_check_branch
          %743 = sbr.rel (%p741) target = $region120
        $region119: #{tpu_custom_call.1} parent=103 // pred_region
          %744 = dma.done [#allocation9], 256
        $region120: #{tpu_custom_call.1} parent=103 // pred_fallthru
          _
        // Predicated region
        $region121: #{tpu_custom_call.1} parent=103 // pred_check
          %p745 = pneg %p176
        $region122: #{tpu_custom_call.1} parent=103 // pred_check_branch
          %747 = sbr.rel (%p745) target = $region124
        $region123: #{tpu_custom_call.1} parent=103 // pred_region
          %748 = dma.done [#allocation9], 3072
        $region124: #{tpu_custom_call.1} parent=103 // pred_fallthru
          _
        // Predicated region
        $region125: #{tpu_custom_call.1} parent=103 // pred_check
          %p749 = pneg %p302
        $region126: #{tpu_custom_call.1} parent=103 // pred_check_branch
          %751 = sbr.rel (%p749) target = $region128
        $region127: #{tpu_custom_call.1} parent=103 // pred_region
          %752 = dma.done [#allocation12], 1024
        $region128: #{tpu_custom_call.1} parent=103 // pred_fallthru
          _
        // Predicated region
        $region129: #{tpu_custom_call.1} parent=103 // pred_check
          %p753 = pneg %p323
        $region130: #{tpu_custom_call.1} parent=103 // pred_check_branch
          %755 = sbr.rel (%p753) target = $region132
        $region131: #{tpu_custom_call.1} parent=103 // pred_region
          %756 = dma.done [#allocation12], 1024
        $region132: #{tpu_custom_call.1} parent=103 // pred_fallthru
          _
        // Predicated region
        $region133: #{tpu_custom_call.1} parent=103 // pred_check
          %p757 = pneg %p386
        $region134: #{tpu_custom_call.1} parent=103 // pred_check_branch
          %759 = sbr.rel (%p757) target = $region136
        $region135: #{tpu_custom_call.1} parent=103 // pred_region
          %760 = dma.done [#allocation15], 14336
        $region136: #{tpu_custom_call.1} parent=103 // pred_fallthru
          _
        // Predicated region
        $region137: #{tpu_custom_call.1} parent=103 // pred_check
          %p761 = pneg %p428
        $region138: #{tpu_custom_call.1} parent=103 // pred_check_branch
          %763 = sbr.rel (%p761) target = $region140
        $region139: #{tpu_custom_call.1} parent=103 // pred_region
          %764 = dma.done [#allocation15], 8192
        $region140: #{tpu_custom_call.1} parent=103 // pred_fallthru
          _
        // Predicated region
        $region141: #{tpu_custom_call.1} parent=103 // pred_check
          %p765 = pneg %p470
        $region142: #{tpu_custom_call.1} parent=103 // pred_check_branch
          %767 = sbr.rel (%p765) target = $region144
        $region143: #{tpu_custom_call.1} parent=103 // pred_region
          %768 = dma.done [#allocation18], 8192
        $region144: #{tpu_custom_call.1} parent=103 // pred_fallthru
          _
        %s769 = sand.u32 %s53, 1
        %s770 = scalar_lea.sflag [#allocation3], %s769
        %s771 = sand.u32 %s53, 1
        %s772 = smul.addr %s771, 8
        %s773 = scalar_lea.vmem [#allocation2], %s772
        %p774 = pneg %p66
        %p775 = pneg %p63
        %s776 = sand.u32 %s45, 1
        %s777 = scalar_lea.sflag [#allocation6], %s776
        %s778 = sand.u32 %s79, 1
        %s779 = smul.addr %s778, 16
        %s780 = scalar_lea.vmem [#allocation5], %s779
        %p781 = pneg %p92
        %p782 = pneg %p89
        %p783 = pneg %p113
        %p784 = pneg %p110
        %p785 = pneg %p134
        %p786 = pneg %p131
        %p787 = pneg %p155
        %p788 = pneg %p152
        %p789 = pneg %p176
        %p790 = pneg %p173
        %p791 = pneg %p197
        %p792 = pneg %p194
        %p793 = pneg %p218
        %p794 = pneg %p215
        %p795 = pneg %p239
        %p796 = pneg %p236
        %p797 = pneg %p260
        %p798 = pneg %p257
        %p799 = pneg %p281
        %p800 = pneg %p278
        %p801 = pneg %p302
        %p802 = pneg %p299
        %p803 = pneg %p323
        %p804 = pneg %p320
        %p805 = pneg %p344
        %p806 = pneg %p341
        %p807 = pneg %p365
        %p808 = pneg %p362
        %p809 = pneg %p386
        %p810 = pneg %p383
        %p811 = pneg %p407
        %p812 = pneg %p404
        %p813 = pneg %p428
        %p814 = pneg %p425
        %p815 = pneg %p449
        %p816 = pneg %p446
        %p817 = pneg %p470
        %p818 = pneg %p467
        %p819 = pneg %p491
        %p820 = pneg %p488
        %p821 = pneg %p517
        %p822 = pneg %p514
        %s823 = sand.u32 %s504, 1
        %s824 = scalar_lea.sflag [#allocation4], %s823
        %s825 = sand.u32 %s504, 1
        %s826 = smul.addr %s825, 16
        %s827 = scalar_lea.vmem [#allocation19], %s826
        %v828 = vld [vmem:[%s723] sm:$0xff]
        %v829 = vld [vmem:[%s732] sm:$0xff]
        %v830 = vld [vmem:[%s732 + $0x8] sm:$0xff]
        %v831 = vld [vmem:[%s2] sm:$0xff]
        %v832 = vld [vmem:[%s2 + $0x8] sm:$0xff]
        %v833 = vld [vmem:[#allocation7] sm:$0xff]
        %v834 = vld [vmem:[#allocation7 + $0x8] sm:$0xff]
        %v835 = vld [vmem:[#allocation7 + $0x10] sm:$0xff]
        %v836 = vld [vmem:[#allocation7 + $0x18] sm:$0xff]
        %vm837 = vcmask 261120
        %v839 = vsel %vm837, %v828, 0
        %841 = vmatprep.subr.mxu0 0.0
        %842 = vmatpush1.msra.mxu0 0.0
        %843 = vmatprep.subr.mxu0 0.0
        %844 = vmatpush1.msra.mxu0 0.0
        %845 = vmatprep.subr.mxu0 0.0
        %846 = vmatpush1.msra.mxu0 0.0
        %847 = vmatprep.subr.mxu0 0.0
        %848 = vmatpush1.msra.mxu0 0.0
        %849 = vmatprep.subr.mxu0 0.0
        %850 = vmatpush1.msra.mxu0 0.0
        %851 = vmatprep.subr.mxu0 0.0
        %852 = vmatpush1.msra.mxu0 0.0
        %853 = vmatprep.subr.mxu0 0.0
        %854 = vmatpush1.msra.mxu0 0.0
        %855 = vmatprep.subr.mxu0 0.0
        %856 = vmatpush1.msra.mxu0 0.0
        %857 = vmatprep.subr.mxu0 0.0
        %858 = vmatpush1.msra.mxu0 0.0
        %859 = vmatprep.subr.mxu0 0.0
        %860 = vmatpush1.msra.mxu0 0.0
        %861 = vmatprep.subr.mxu0 0.0
        %862 = vmatpush1.msra.mxu0 0.0
        %863 = vmatprep.subr.mxu0 0.0
        %864 = vmatpush1.msra.mxu0 0.0
        %865 = vmatprep.subr.mxu0 0.0
        %866 = vmatpush1.msra.mxu0 %v836
        %867 = vmatprep.subr.mxu0 0.0
        %868 = vmatpush1.msra.mxu0 %v835
        %869 = vmatprep.subr.mxu0 0.0
        %870 = vmatpush1.msra.mxu0 %v834
        %871 = vmatprep.subr.mxu0 0.0
        %872 = vmatpush1.msra.mxu0 %v833
        %873 = vmatprep.subr.mxu0 0.0
        %874 = vmatpush2.msra.mxu0 0.0
        %875 = vmatprep.subr.mxu0 0.0
        %876 = vmatpush2.msra.mxu0 0.0
        %877 = vmatprep.subr.mxu0 0.0
        %878 = vmatpush2.msra.mxu0 0.0
        %879 = vmatprep.subr.mxu0 0.0
        %880 = vmatpush2.msra.mxu0 0.0
        %881 = vmatprep.subr.mxu0 0.0
        %882 = vmatpush2.msra.mxu0 0.0
        %883 = vmatprep.subr.mxu0 0.0
        %884 = vmatpush2.msra.mxu0 0.0
        %885 = vmatprep.subr.mxu0 0.0
        %886 = vmatpush2.msra.mxu0 0.0
        %887 = vmatprep.subr.mxu0 0.0
        %888 = vmatpush2.msra.mxu0 0.0
        %889 = vmatprep.subr.mxu0 0.0
        %890 = vmatpush2.msra.mxu0 0.0
        %891 = vmatprep.subr.mxu0 0.0
        %892 = vmatpush2.msra.mxu0 0.0
        %893 = vmatprep.subr.mxu0 0.0
        %894 = vmatpush2.msra.mxu0 0.0
        %895 = vmatprep.subr.mxu0 0.0
        %896 = vmatpush2.msra.mxu0 0.0
        %897 = vmatprep.subr.mxu0 0.0
        %898 = vmatpush2.msra.mxu0 0.0
        %899 = vmatprep.subr.mxu0 0.0
        %900 = vmatpush2.msra.mxu0 0.0
        %901 = vmatprep.subr.mxu0 0.0
        %902 = vmatpush2.msra.mxu0 0.0
        %903 = vmatprep.subr.mxu0 0.0
        %904 = vmatpush2.msra.mxu0 0.0
        %905 = vmatprep.mubr.f32.mxu0 0.0
        %906 = vmatmul.mubr.f32.gmra.mxu0 %v839
        %v907 = vpop.f32.mrf.mxu0
        %v908 = vadd.f32 0.0, %v907
        %v909 = vpop.f32.mrf.mxu0
        %910 = vdwg.mxu0
        %v911 = vld [vmem:[#allocation8] sm:$0xff]
        %v912 = vld [vmem:[#allocation8 + $0x8] sm:$0xff]
        %vm913 = vcmask 64512
        %v915 = vsel %vm913, %v831, 0
        %v918 = vsel %vm913, %v832, 0
        %920 = vmatprep.subr.mxu0 0.0
        %921 = vmatpush1.msra.mxu0 0.0
        %922 = vmatprep.subr.mxu0 0.0
        %923 = vmatpush1.msra.mxu0 0.0
        %924 = vmatprep.subr.mxu0 0.0
        %925 = vmatpush1.msra.mxu0 0.0
        %926 = vmatprep.subr.mxu0 0.0
        %927 = vmatpush1.msra.mxu0 0.0
        %928 = vmatprep.subr.mxu0 0.0
        %929 = vmatpush1.msra.mxu0 0.0
        %930 = vmatprep.subr.mxu0 0.0
        %931 = vmatpush1.msra.mxu0 0.0
        %932 = vmatprep.subr.mxu0 0.0
        %933 = vmatpush1.msra.mxu0 0.0
        %934 = vmatprep.subr.mxu0 0.0
        %935 = vmatpush1.msra.mxu0 0.0
        %936 = vmatprep.subr.mxu0 0.0
        %937 = vmatpush1.msra.mxu0 0.0
        %938 = vmatprep.subr.mxu0 0.0
        %939 = vmatpush1.msra.mxu0 0.0
        %940 = vmatprep.subr.mxu0 0.0
        %941 = vmatpush1.msra.mxu0 0.0
        %942 = vmatprep.subr.mxu0 0.0
        %943 = vmatpush1.msra.mxu0 0.0
        %944 = vmatprep.subr.mxu0 0.0
        %945 = vmatpush1.msra.mxu0 0.0
        %946 = vmatprep.subr.mxu0 0.0
        %947 = vmatpush1.msra.mxu0 0.0
        %948 = vmatprep.subr.mxu0 0.0
        %949 = vmatpush1.msra.mxu0 0.0
        %950 = vmatprep.subr.mxu0 0.0
        %951 = vmatpush1.msra.mxu0 %v908
        %952 = vmatprep.subr.mxu0 0.0
        %953 = vmatpush2.msra.mxu0 0.0
        %954 = vmatprep.subr.mxu0 0.0
        %955 = vmatpush2.msra.mxu0 0.0
        %956 = vmatprep.subr.mxu0 0.0
        %957 = vmatpush2.msra.mxu0 0.0
        %958 = vmatprep.subr.mxu0 0.0
        %959 = vmatpush2.msra.mxu0 0.0
        %960 = vmatprep.subr.mxu0 0.0
        %961 = vmatpush2.msra.mxu0 0.0
        %962 = vmatprep.subr.mxu0 0.0
        %963 = vmatpush2.msra.mxu0 0.0
        %964 = vmatprep.subr.mxu0 0.0
        %965 = vmatpush2.msra.mxu0 0.0
        %966 = vmatprep.subr.mxu0 0.0
        %967 = vmatpush2.msra.mxu0 0.0
        %968 = vmatprep.subr.mxu0 0.0
        %969 = vmatpush2.msra.mxu0 0.0
        %970 = vmatprep.subr.mxu0 0.0
        %971 = vmatpush2.msra.mxu0 0.0
        %972 = vmatprep.subr.mxu0 0.0
        %973 = vmatpush2.msra.mxu0 0.0
        %974 = vmatprep.subr.mxu0 0.0
        %975 = vmatpush2.msra.mxu0 0.0
        %976 = vmatprep.subr.mxu0 0.0
        %977 = vmatpush2.msra.mxu0 0.0
        %978 = vmatprep.subr.mxu0 0.0
        %979 = vmatpush2.msra.mxu0 0.0
        %980 = vmatprep.subr.mxu0 0.0
        %981 = vmatpush2.msra.mxu0 0.0
        %982 = vmatprep.subr.mxu0 0.0
        %983 = vmatpush2.msra.mxu0 0.0
        %984 = vmatprep.mubr.f32.mxu0 0.0
        %985 = vmatmul.mubr.f32.gmra.mxu0 %v915
        %v986 = vpop.f32.mrf.mxu0
        %v987 = vadd.f32 %v911, %v986
        %v988 = vpop.f32.mrf.mxu0
        %989 = vmatprep.mubr.f32.mxu0 0.0
        %990 = vmatmul.mubr.f32.gmra.mxu0 %v918
        %v991 = vpop.f32.mrf.mxu0
        %v992 = vadd.f32 %v912, %v991
        %v993 = vpop.f32.mrf.mxu0
        %994 = vdwg.mxu0
        %v995 = vld [vmem:[#allocation10] sm:$0xff]
        %v996 = vld [vmem:[#allocation10 + $0x8] sm:$0xff]
        %v997 = vld [vmem:[#allocation10 + $0x10] sm:$0xff]
        %v998 = vld [vmem:[#allocation10 + $0x18] sm:$0xff]
        %v999 = vld [vmem:[#allocation10 + $0x20] sm:$0xff]
        %v1000 = vld [vmem:[#allocation10 + $0x28] sm:$0xff]
        %v1001 = vld [vmem:[#allocation10 + $0x30] sm:$0xff]
        %v1002 = vld [vmem:[#allocation10 + $0x38] sm:$0xff]
        %v1003 = vld [vmem:[%s6] sm:$0x1]
        %v1005 = vlaneseq
        %v1006 = vshrl.u32 %v1005, 7
        %v1007 = vsub.s32 0, %v1006
        %v1008 = vrot.slane %v1003, %v1007
        %vm1010 = vcmask 523264
        %v1012 = vsel %vm1010, %v987, 0
        %v1015 = vsel %vm1010, %v992, 0
        %1017 = vmatprep.subr.mxu0 0.0
        %1018 = vmatpush1.msra.mxu0 0.0
        %1019 = vmatprep.subr.mxu0 0.0
        %1020 = vmatpush1.msra.mxu0 0.0
        %1021 = vmatprep.subr.mxu0 0.0
        %1022 = vmatpush1.msra.mxu0 0.0
        %1023 = vmatprep.subr.mxu0 0.0
        %1024 = vmatpush1.msra.mxu0 0.0
        %1025 = vmatprep.subr.mxu0 0.0
        %1026 = vmatpush1.msra.mxu0 0.0
        %1027 = vmatprep.subr.mxu0 0.0
        %1028 = vmatpush1.msra.mxu0 0.0
        %1029 = vmatprep.subr.mxu0 0.0
        %1030 = vmatpush1.msra.mxu0 0.0
        %1031 = vmatprep.subr.mxu0 0.0
        %1032 = vmatpush1.msra.mxu0 0.0
        %1033 = vmatprep.subr.mxu0 0.0
        %1034 = vmatpush1.msra.mxu0 %v1002
        %1035 = vmatprep.subr.mxu0 0.0
        %1036 = vmatpush1.msra.mxu0 %v1001
        %1037 = vmatprep.subr.mxu0 0.0
        %1038 = vmatpush1.msra.mxu0 %v1000
        %1039 = vmatprep.subr.mxu0 0.0
        %1040 = vmatpush1.msra.mxu0 %v999
        %1041 = vmatprep.subr.mxu0 0.0
        %1042 = vmatpush1.msra.mxu0 %v998
        %1043 = vmatprep.subr.mxu0 0.0
        %1044 = vmatpush1.msra.mxu0 %v997
        %1045 = vmatprep.subr.mxu0 0.0
        %1046 = vmatpush1.msra.mxu0 %v996
        %1047 = vmatprep.subr.mxu0 0.0
        %1048 = vmatpush1.msra.mxu0 %v995
        %1049 = vmatprep.subr.mxu0 0.0
        %1050 = vmatpush2.msra.mxu0 0.0
        %1051 = vmatprep.subr.mxu0 0.0
        %1052 = vmatpush2.msra.mxu0 0.0
        %1053 = vmatprep.subr.mxu0 0.0
        %1054 = vmatpush2.msra.mxu0 0.0
        %1055 = vmatprep.subr.mxu0 0.0
        %1056 = vmatpush2.msra.mxu0 0.0
        %1057 = vmatprep.subr.mxu0 0.0
        %1058 = vmatpush2.msra.mxu0 0.0
        %1059 = vmatprep.subr.mxu0 0.0
        %1060 = vmatpush2.msra.mxu0 0.0
        %1061 = vmatprep.subr.mxu0 0.0
        %1062 = vmatpush2.msra.mxu0 0.0
        %1063 = vmatprep.subr.mxu0 0.0
        %1064 = vmatpush2.msra.mxu0 0.0
        %1065 = vmatprep.subr.mxu0 0.0
        %1066 = vmatpush2.msra.mxu0 0.0
        %1067 = vmatprep.subr.mxu0 0.0
        %1068 = vmatpush2.msra.mxu0 0.0
        %1069 = vmatprep.subr.mxu0 0.0
        %1070 = vmatpush2.msra.mxu0 0.0
        %1071 = vmatprep.subr.mxu0 0.0
        %1072 = vmatpush2.msra.mxu0 0.0
        %1073 = vmatprep.subr.mxu0 0.0
        %1074 = vmatpush2.msra.mxu0 0.0
        %1075 = vmatprep.subr.mxu0 0.0
        %1076 = vmatpush2.msra.mxu0 0.0
        %1077 = vmatprep.subr.mxu0 0.0
        %1078 = vmatpush2.msra.mxu0 0.0
        %1079 = vmatprep.subr.mxu0 0.0
        %1080 = vmatpush2.msra.mxu0 0.0
        %1081 = vmatprep.mubr.f32.mxu0 0.0
        %1082 = vmatmul.mubr.f32.gmra.mxu0 %v1012
        %v1083 = vpop.f32.mrf.mxu0
        %v1084 = vadd.f32 %v1008, %v1083
        %v1085 = vpop.f32.mrf.mxu0
        %1086 = vmatprep.mubr.f32.mxu0 0.0
        %1087 = vmatmul.mubr.f32.gmra.mxu0 %v1015
        %v1088 = vpop.f32.mrf.mxu0
        %v1089 = vadd.f32 %v1008, %v1088
        %v1090 = vpop.f32.mrf.mxu0
        %1091 = vdwg.mxu0
        %s1092 = scalar_lea.vmem [#allocation10], 64
        %v1093 = vld [vmem:[%s1092] sm:$0xff]
        %v1094 = vld [vmem:[%s1092 + $0x8] sm:$0xff]
        %v1095 = vld [vmem:[%s1092 + $0x10] sm:$0xff]
        %v1096 = vld [vmem:[%s1092 + $0x18] sm:$0xff]
        %v1097 = vld [vmem:[%s1092 + $0x20] sm:$0xff]
        %v1098 = vld [vmem:[%s1092 + $0x28] sm:$0xff]
        %v1099 = vld [vmem:[%s1092 + $0x30] sm:$0xff]
        %v1100 = vld [vmem:[%s1092 + $0x38] sm:$0xff]
        %s1101 = scalar_lea.vmem %s6, 1
        %v1102 = vld [vmem:[%s1101] sm:$0x1]
        %v1104 = vlaneseq
        %v1105 = vshrl.u32 %v1104, 7
        %v1106 = vsub.s32 0, %v1105
        %v1107 = vrot.slane %v1102, %v1106
        %1109 = vmatprep.subr.mxu0 0.0
        %1110 = vmatpush1.msra.mxu0 0.0
        %1111 = vmatprep.subr.mxu0 0.0
        %1112 = vmatpush1.msra.mxu0 0.0
        %1113 = vmatprep.subr.mxu0 0.0
        %1114 = vmatpush1.msra.mxu0 0.0
        %1115 = vmatprep.subr.mxu0 0.0
        %1116 = vmatpush1.msra.mxu0 0.0
        %1117 = vmatprep.subr.mxu0 0.0
        %1118 = vmatpush1.msra.mxu0 0.0
        %1119 = vmatprep.subr.mxu0 0.0
        %1120 = vmatpush1.msra.mxu0 0.0
        %1121 = vmatprep.subr.mxu0 0.0
        %1122 = vmatpush1.msra.mxu0 0.0
        %1123 = vmatprep.subr.mxu0 0.0
        %1124 = vmatpush1.msra.mxu0 0.0
        %1125 = vmatprep.subr.mxu0 0.0
        %1126 = vmatpush1.msra.mxu0 %v1100
        %1127 = vmatprep.subr.mxu0 0.0
        %1128 = vmatpush1.msra.mxu0 %v1099
        %1129 = vmatprep.subr.mxu0 0.0
        %1130 = vmatpush1.msra.mxu0 %v1098
        %1131 = vmatprep.subr.mxu0 0.0
        %1132 = vmatpush1.msra.mxu0 %v1097
        %1133 = vmatprep.subr.mxu0 0.0
        %1134 = vmatpush1.msra.mxu0 %v1096
        %1135 = vmatprep.subr.mxu0 0.0
        %1136 = vmatpush1.msra.mxu0 %v1095
        %1137 = vmatprep.subr.mxu0 0.0
        %1138 = vmatpush1.msra.mxu0 %v1094
        %1139 = vmatprep.subr.mxu0 0.0
        %1140 = vmatpush1.msra.mxu0 %v1093
        %1141 = vmatprep.subr.mxu0 0.0
        %1142 = vmatpush2.msra.mxu0 0.0
        %1143 = vmatprep.subr.mxu0 0.0
        %1144 = vmatpush2.msra.mxu0 0.0
        %1145 = vmatprep.subr.mxu0 0.0
        %1146 = vmatpush2.msra.mxu0 0.0
        %1147 = vmatprep.subr.mxu0 0.0
        %1148 = vmatpush2.msra.mxu0 0.0
        %1149 = vmatprep.subr.mxu0 0.0
        %1150 = vmatpush2.msra.mxu0 0.0
        %1151 = vmatprep.subr.mxu0 0.0
        %1152 = vmatpush2.msra.mxu0 0.0
        %1153 = vmatprep.subr.mxu0 0.0
        %1154 = vmatpush2.msra.mxu0 0.0
        %1155 = vmatprep.subr.mxu0 0.0
        %1156 = vmatpush2.msra.mxu0 0.0
        %1157 = vmatprep.subr.mxu0 0.0
        %1158 = vmatpush2.msra.mxu0 0.0
        %1159 = vmatprep.subr.mxu0 0.0
        %1160 = vmatpush2.msra.mxu0 0.0
        %1161 = vmatprep.subr.mxu0 0.0
        %1162 = vmatpush2.msra.mxu0 0.0
        %1163 = vmatprep.subr.mxu0 0.0
        %1164 = vmatpush2.msra.mxu0 0.0
        %1165 = vmatprep.subr.mxu0 0.0
        %1166 = vmatpush2.msra.mxu0 0.0
        %1167 = vmatprep.subr.mxu0 0.0
        %1168 = vmatpush2.msra.mxu0 0.0
        %1169 = vmatprep.subr.mxu0 0.0
        %1170 = vmatpush2.msra.mxu0 0.0
        %1171 = vmatprep.subr.mxu0 0.0
        %1172 = vmatpush2.msra.mxu0 0.0
        %1173 = vmatprep.mubr.f32.mxu0 0.0
        %1174 = vmatmul.mubr.f32.gmra.mxu0 %v1012
        %v1175 = vpop.f32.mrf.mxu0
        %v1176 = vadd.f32 %v1107, %v1175
        %v1177 = vpop.f32.mrf.mxu0
        %1178 = vmatprep.mubr.f32.mxu0 0.0
        %1179 = vmatmul.mubr.f32.gmra.mxu0 %v1015
        %v1180 = vpop.f32.mrf.mxu0
        %v1181 = vadd.f32 %v1107, %v1180
        %v1182 = vpop.f32.mrf.mxu0
        %1183 = vdwg.mxu0
        %s1184 = scalar_lea.vmem [#allocation10], 128
        %v1185 = vld [vmem:[%s1184] sm:$0xff]
        %v1186 = vld [vmem:[%s1184 + $0x8] sm:$0xff]
        %v1187 = vld [vmem:[%s1184 + $0x10] sm:$0xff]
        %v1188 = vld [vmem:[%s1184 + $0x18] sm:$0xff]
        %v1189 = vld [vmem:[%s1184 + $0x20] sm:$0xff]
        %v1190 = vld [vmem:[%s1184 + $0x28] sm:$0xff]
        %v1191 = vld [vmem:[%s1184 + $0x30] sm:$0xff]
        %v1192 = vld [vmem:[%s1184 + $0x38] sm:$0xff]
        %s1193 = scalar_lea.vmem %s6, 2
        %v1194 = vld [vmem:[%s1193] sm:$0x1]
        %v1196 = vlaneseq
        %v1197 = vshrl.u32 %v1196, 7
        %v1198 = vsub.s32 0, %v1197
        %v1199 = vrot.slane %v1194, %v1198
        %1201 = vmatprep.subr.mxu0 0.0
        %1202 = vmatpush1.msra.mxu0 0.0
        %1203 = vmatprep.subr.mxu0 0.0
        %1204 = vmatpush1.msra.mxu0 0.0
        %1205 = vmatprep.subr.mxu0 0.0
        %1206 = vmatpush1.msra.mxu0 0.0
        %1207 = vmatprep.subr.mxu0 0.0
        %1208 = vmatpush1.msra.mxu0 0.0
        %1209 = vmatprep.subr.mxu0 0.0
        %1210 = vmatpush1.msra.mxu0 0.0
        %1211 = vmatprep.subr.mxu0 0.0
        %1212 = vmatpush1.msra.mxu0 0.0
        %1213 = vmatprep.subr.mxu0 0.0
        %1214 = vmatpush1.msra.mxu0 0.0
        %1215 = vmatprep.subr.mxu0 0.0
        %1216 = vmatpush1.msra.mxu0 0.0
        %1217 = vmatprep.subr.mxu0 0.0
        %1218 = vmatpush1.msra.mxu0 %v1192
        %1219 = vmatprep.subr.mxu0 0.0
        %1220 = vmatpush1.msra.mxu0 %v1191
        %1221 = vmatprep.subr.mxu0 0.0
        %1222 = vmatpush1.msra.mxu0 %v1190
        %1223 = vmatprep.subr.mxu0 0.0
        %1224 = vmatpush1.msra.mxu0 %v1189
        %1225 = vmatprep.subr.mxu0 0.0
        %1226 = vmatpush1.msra.mxu0 %v1188
        %1227 = vmatprep.subr.mxu0 0.0
        %1228 = vmatpush1.msra.mxu0 %v1187
        %1229 = vmatprep.subr.mxu0 0.0
        %1230 = vmatpush1.msra.mxu0 %v1186
        %1231 = vmatprep.subr.mxu0 0.0
        %1232 = vmatpush1.msra.mxu0 %v1185
        %1233 = vmatprep.subr.mxu0 0.0
        %1234 = vmatpush2.msra.mxu0 0.0
        %1235 = vmatprep.subr.mxu0 0.0
        %1236 = vmatpush2.msra.mxu0 0.0
        %1237 = vmatprep.subr.mxu0 0.0
        %1238 = vmatpush2.msra.mxu0 0.0
        %1239 = vmatprep.subr.mxu0 0.0
        %1240 = vmatpush2.msra.mxu0 0.0
        %1241 = vmatprep.subr.mxu0 0.0
        %1242 = vmatpush2.msra.mxu0 0.0
        %1243 = vmatprep.subr.mxu0 0.0
        %1244 = vmatpush2.msra.mxu0 0.0
        %1245 = vmatprep.subr.mxu0 0.0
        %1246 = vmatpush2.msra.mxu0 0.0
        %1247 = vmatprep.subr.mxu0 0.0
        %1248 = vmatpush2.msra.mxu0 0.0
        %1249 = vmatprep.subr.mxu0 0.0
        %1250 = vmatpush2.msra.mxu0 0.0
        %1251 = vmatprep.subr.mxu0 0.0
        %1252 = vmatpush2.msra.mxu0 0.0
        %1253 = vmatprep.subr.mxu0 0.0
        %1254 = vmatpush2.msra.mxu0 0.0
        %1255 = vmatprep.subr.mxu0 0.0
        %1256 = vmatpush2.msra.mxu0 0.0
        %1257 = vmatprep.subr.mxu0 0.0
        %1258 = vmatpush2.msra.mxu0 0.0
        %1259 = vmatprep.subr.mxu0 0.0
        %1260 = vmatpush2.msra.mxu0 0.0
        %1261 = vmatprep.subr.mxu0 0.0
        %1262 = vmatpush2.msra.mxu0 0.0
        %1263 = vmatprep.subr.mxu0 0.0
        %1264 = vmatpush2.msra.mxu0 0.0
        %1265 = vmatprep.mubr.f32.mxu0 0.0
        %1266 = vmatmul.mubr.f32.gmra.mxu0 %v1012
        %v1267 = vpop.f32.mrf.mxu0
        %v1268 = vadd.f32 %v1199, %v1267
        %v1269 = vpop.f32.mrf.mxu0
        %1270 = vmatprep.mubr.f32.mxu0 0.0
        %1271 = vmatmul.mubr.f32.gmra.mxu0 %v1015
        %v1272 = vpop.f32.mrf.mxu0
        %v1273 = vadd.f32 %v1199, %v1272
        %v1274 = vpop.f32.mrf.mxu0
        %1275 = vdwg.mxu0
        %v1276 = vadd.f32 %v1084, %v829
        %v1277 = vadd.f32 %v1089, %v830
        %v1278 = vld [vmem:[%s7] sm:$0xff]
        %v1279 = vld [vmem:[%s7 + $0x8] sm:$0xff]
        %v1280 = vld [vmem:[%s7 + $0x10] sm:$0xff]
        %v1281 = vld [vmem:[%s7 + $0x18] sm:$0xff]
        %v1282 = vld [vmem:[%s7 + $0x20] sm:$0xff]
        %v1283 = vld [vmem:[%s7 + $0x28] sm:$0xff]
        %v1284 = vld [vmem:[%s7 + $0x30] sm:$0xff]
        %v1285 = vld [vmem:[%s7 + $0x38] sm:$0xff]
        %v1286 = vld [vmem:[%s8] sm:$0x1]
        %v1288 = vlaneseq
        %v1289 = vshrl.u32 %v1288, 7
        %v1290 = vsub.s32 0, %v1289
        %v1291 = vrot.slane %v1286, %v1290
        %v1294 = vsel %vm1010, %v1276, 0
        %v1297 = vsel %vm1010, %v1277, 0
        %1299 = vmatprep.subr.mxu0 0.0
        %1300 = vmatpush1.msra.mxu0 0.0
        %1301 = vmatprep.subr.mxu0 0.0
        %1302 = vmatpush1.msra.mxu0 0.0
        %1303 = vmatprep.subr.mxu0 0.0
        %1304 = vmatpush1.msra.mxu0 0.0
        %1305 = vmatprep.subr.mxu0 0.0
        %1306 = vmatpush1.msra.mxu0 0.0
        %1307 = vmatprep.subr.mxu0 0.0
        %1308 = vmatpush1.msra.mxu0 0.0
        %1309 = vmatprep.subr.mxu0 0.0
        %1310 = vmatpush1.msra.mxu0 0.0
        %1311 = vmatprep.subr.mxu0 0.0
        %1312 = vmatpush1.msra.mxu0 0.0
        %1313 = vmatprep.subr.mxu0 0.0
        %1314 = vmatpush1.msra.mxu0 0.0
        %1315 = vmatprep.subr.mxu0 0.0
        %1316 = vmatpush1.msra.mxu0 %v1285
        %1317 = vmatprep.subr.mxu0 0.0
        %1318 = vmatpush1.msra.mxu0 %v1284
        %1319 = vmatprep.subr.mxu0 0.0
        %1320 = vmatpush1.msra.mxu0 %v1283
        %1321 = vmatprep.subr.mxu0 0.0
        %1322 = vmatpush1.msra.mxu0 %v1282
        %1323 = vmatprep.subr.mxu0 0.0
        %1324 = vmatpush1.msra.mxu0 %v1281
        %1325 = vmatprep.subr.mxu0 0.0
        %1326 = vmatpush1.msra.mxu0 %v1280
        %1327 = vmatprep.subr.mxu0 0.0
        %1328 = vmatpush1.msra.mxu0 %v1279
        %1329 = vmatprep.subr.mxu0 0.0
        %1330 = vmatpush1.msra.mxu0 %v1278
        %1331 = vmatprep.subr.mxu0 0.0
        %1332 = vmatpush2.msra.mxu0 0.0
        %1333 = vmatprep.subr.mxu0 0.0
        %1334 = vmatpush2.msra.mxu0 0.0
        %1335 = vmatprep.subr.mxu0 0.0
        %1336 = vmatpush2.msra.mxu0 0.0
        %1337 = vmatprep.subr.mxu0 0.0
        %1338 = vmatpush2.msra.mxu0 0.0
        %1339 = vmatprep.subr.mxu0 0.0
        %1340 = vmatpush2.msra.mxu0 0.0
        %1341 = vmatprep.subr.mxu0 0.0
        %1342 = vmatpush2.msra.mxu0 0.0
        %1343 = vmatprep.subr.mxu0 0.0
        %1344 = vmatpush2.msra.mxu0 0.0
        %1345 = vmatprep.subr.mxu0 0.0
        %1346 = vmatpush2.msra.mxu0 0.0
        %1347 = vmatprep.subr.mxu0 0.0
        %1348 = vmatpush2.msra.mxu0 0.0
        %1349 = vmatprep.subr.mxu0 0.0
        %1350 = vmatpush2.msra.mxu0 0.0
        %1351 = vmatprep.subr.mxu0 0.0
        %1352 = vmatpush2.msra.mxu0 0.0
        %1353 = vmatprep.subr.mxu0 0.0
        %1354 = vmatpush2.msra.mxu0 0.0
        %1355 = vmatprep.subr.mxu0 0.0
        %1356 = vmatpush2.msra.mxu0 0.0
        %1357 = vmatprep.subr.mxu0 0.0
        %1358 = vmatpush2.msra.mxu0 0.0
        %1359 = vmatprep.subr.mxu0 0.0
        %1360 = vmatpush2.msra.mxu0 0.0
        %1361 = vmatprep.subr.mxu0 0.0
        %1362 = vmatpush2.msra.mxu0 0.0
        %1363 = vmatprep.mubr.f32.mxu0 0.0
        %1364 = vmatmul.mubr.f32.gmra.mxu0 %v1294
        %v1365 = vpop.f32.mrf.mxu0
        %v1366 = vadd.f32 %v1291, %v1365
        %v1367 = vpop.f32.mrf.mxu0
        %1368 = vmatprep.mubr.f32.mxu0 0.0
        %1369 = vmatmul.mubr.f32.gmra.mxu0 %v1297
        %v1370 = vpop.f32.mrf.mxu0
        %v1371 = vadd.f32 %v1291, %v1370
        %v1372 = vpop.f32.mrf.mxu0
        %1373 = vdwg.mxu0
        %v1374 = vxor.u32 %v1366, 2147483648
        %v1375 = vxor.u32 %v1371, 2147483648
        %v1376 = vmul.f32 %v1374, 1.442695
        %v1377 = vpow.pop %v1376
        %v1378 = vmul.f32 %v1375, 1.442695
        %v1379 = vpow.pop %v1378
        %v1380 = vadd.f32 %v1377, 1.0
        %v1381 = vadd.f32 %v1379, 1.0
        %v1382 = vrcp.pop %v1380
        %v1383 = vmul.f32 1.0, %v1382
        %v1384 = vrcp.pop %v1381
        %v1385 = vmul.f32 1.0, %v1384
        %v1386 = vmul.f32 %v1383, %v829
        %v1387 = vmul.f32 %v1385, %v830
        %v1388 = vxor.u32 %v1176, 2147483648
        %v1389 = vxor.u32 %v1181, 2147483648
        %v1390 = vmul.f32 %v1388, 1.442695
        %v1391 = vpow.pop %v1390
        %v1392 = vmul.f32 %v1389, 1.442695
        %v1393 = vpow.pop %v1392
        %v1394 = vadd.f32 %v1391, 1.0
        %v1395 = vadd.f32 %v1393, 1.0
        %v1396 = vrcp.pop %v1394
        %v1397 = vmul.f32 1.0, %v1396
        %v1398 = vrcp.pop %v1395
        %v1399 = vmul.f32 1.0, %v1398
        %v1400 = vtanh.pop %v1268
        %v1401 = vtanh.pop %v1273
        %v1402 = vmul.f32 %v1397, %v1400
        %v1403 = vmul.f32 %v1399, %v1401
        %v1404 = vadd.f32 %v1386, %v1402
        %v1405 = vadd.f32 %v1387, %v1403
        %v1406 = vld [vmem:[%s9] sm:$0xff]
        %v1407 = vld [vmem:[%s9 + $0x8] sm:$0xff]
        %v1408 = vld [vmem:[%s9 + $0x10] sm:$0xff]
        %v1409 = vld [vmem:[%s9 + $0x18] sm:$0xff]
        %v1410 = vld [vmem:[%s9 + $0x20] sm:$0xff]
        %v1411 = vld [vmem:[%s9 + $0x28] sm:$0xff]
        %v1412 = vld [vmem:[%s9 + $0x30] sm:$0xff]
        %v1413 = vld [vmem:[%s9 + $0x38] sm:$0xff]
        %v1414 = vld [vmem:[%s10] sm:$0x1]
        %v1416 = vlaneseq
        %v1417 = vshrl.u32 %v1416, 7
        %v1418 = vsub.s32 0, %v1417
        %v1419 = vrot.slane %v1414, %v1418
        %v1422 = vsel %vm1010, %v1404, 0
        %v1425 = vsel %vm1010, %v1405, 0
        %1427 = vmatprep.subr.mxu0 0.0
        %1428 = vmatpush1.msra.mxu0 0.0
        %1429 = vmatprep.subr.mxu0 0.0
        %1430 = vmatpush1.msra.mxu0 0.0
        %1431 = vmatprep.subr.mxu0 0.0
        %1432 = vmatpush1.msra.mxu0 0.0
        %1433 = vmatprep.subr.mxu0 0.0
        %1434 = vmatpush1.msra.mxu0 0.0
        %1435 = vmatprep.subr.mxu0 0.0
        %1436 = vmatpush1.msra.mxu0 0.0
        %1437 = vmatprep.subr.mxu0 0.0
        %1438 = vmatpush1.msra.mxu0 0.0
        %1439 = vmatprep.subr.mxu0 0.0
        %1440 = vmatpush1.msra.mxu0 0.0
        %1441 = vmatprep.subr.mxu0 0.0
        %1442 = vmatpush1.msra.mxu0 0.0
        %1443 = vmatprep.subr.mxu0 0.0
        %1444 = vmatpush1.msra.mxu0 %v1413
        %1445 = vmatprep.subr.mxu0 0.0
        %1446 = vmatpush1.msra.mxu0 %v1412
        %1447 = vmatprep.subr.mxu0 0.0
        %1448 = vmatpush1.msra.mxu0 %v1411
        %1449 = vmatprep.subr.mxu0 0.0
        %1450 = vmatpush1.msra.mxu0 %v1410
        %1451 = vmatprep.subr.mxu0 0.0
        %1452 = vmatpush1.msra.mxu0 %v1409
        %1453 = vmatprep.subr.mxu0 0.0
        %1454 = vmatpush1.msra.mxu0 %v1408
        %1455 = vmatprep.subr.mxu0 0.0
        %1456 = vmatpush1.msra.mxu0 %v1407
        %1457 = vmatprep.subr.mxu0 0.0
        %1458 = vmatpush1.msra.mxu0 %v1406
        %1459 = vmatprep.subr.mxu0 0.0
        %1460 = vmatpush2.msra.mxu0 0.0
        %1461 = vmatprep.subr.mxu0 0.0
        %1462 = vmatpush2.msra.mxu0 0.0
        %1463 = vmatprep.subr.mxu0 0.0
        %1464 = vmatpush2.msra.mxu0 0.0
        %1465 = vmatprep.subr.mxu0 0.0
        %1466 = vmatpush2.msra.mxu0 0.0
        %1467 = vmatprep.subr.mxu0 0.0
        %1468 = vmatpush2.msra.mxu0 0.0
        %1469 = vmatprep.subr.mxu0 0.0
        %1470 = vmatpush2.msra.mxu0 0.0
        %1471 = vmatprep.subr.mxu0 0.0
        %1472 = vmatpush2.msra.mxu0 0.0
        %1473 = vmatprep.subr.mxu0 0.0
        %1474 = vmatpush2.msra.mxu0 0.0
        %1475 = vmatprep.subr.mxu0 0.0
        %1476 = vmatpush2.msra.mxu0 0.0
        %1477 = vmatprep.subr.mxu0 0.0
        %1478 = vmatpush2.msra.mxu0 0.0
        %1479 = vmatprep.subr.mxu0 0.0
        %1480 = vmatpush2.msra.mxu0 0.0
        %1481 = vmatprep.subr.mxu0 0.0
        %1482 = vmatpush2.msra.mxu0 0.0
        %1483 = vmatprep.subr.mxu0 0.0
        %1484 = vmatpush2.msra.mxu0 0.0
        %1485 = vmatprep.subr.mxu0 0.0
        %1486 = vmatpush2.msra.mxu0 0.0
        %1487 = vmatprep.subr.mxu0 0.0
        %1488 = vmatpush2.msra.mxu0 0.0
        %1489 = vmatprep.subr.mxu0 0.0
        %1490 = vmatpush2.msra.mxu0 0.0
        %1491 = vmatprep.mubr.f32.mxu0 0.0
        %1492 = vmatmul.mubr.f32.gmra.mxu0 %v1422
        %v1493 = vpop.f32.mrf.mxu0
        %v1494 = vadd.f32 %v1419, %v1493
        %v1495 = vpop.f32.mrf.mxu0
        %1496 = vmatprep.mubr.f32.mxu0 0.0
        %1497 = vmatmul.mubr.f32.gmra.mxu0 %v1425
        %v1498 = vpop.f32.mrf.mxu0
        %v1499 = vadd.f32 %v1419, %v1498
        %v1500 = vpop.f32.mrf.mxu0
        %1501 = vdwg.mxu0
        %v1502 = vld [vmem:[#allocation11] sm:$0xff]
        %v1503 = vld [vmem:[#allocation11 + $0x8] sm:$0xff]
        %v1504 = vld [vmem:[#allocation11 + $0x10] sm:$0xff]
        %v1505 = vld [vmem:[#allocation11 + $0x18] sm:$0xff]
        %v1506 = vld [vmem:[#allocation11 + $0x20] sm:$0xff]
        %v1507 = vld [vmem:[#allocation11 + $0x28] sm:$0xff]
        %v1508 = vld [vmem:[#allocation11 + $0x30] sm:$0xff]
        %v1509 = vld [vmem:[#allocation11 + $0x38] sm:$0xff]
        %v1510 = vld [vmem:[#allocation13] sm:$0xff]
        %v1511 = vld [vmem:[#allocation13 + $0x8] sm:$0xff]
        %v1512 = vld [vmem:[#allocation13 + $0x10] sm:$0xff]
        %v1513 = vld [vmem:[#allocation13 + $0x18] sm:$0xff]
        %v1514 = vld [vmem:[#allocation13 + $0x20] sm:$0xff]
        %v1515 = vld [vmem:[#allocation13 + $0x28] sm:$0xff]
        %v1516 = vld [vmem:[#allocation13 + $0x30] sm:$0xff]
        %v1517 = vld [vmem:[#allocation13 + $0x38] sm:$0xff]
        %1518 = vmatprep.subr.mxu0 0.0
        %1519 = vmatpush1.msra.mxu0 0.0
        %1520 = vmatprep.subr.mxu0 0.0
        %1521 = vmatpush1.msra.mxu0 0.0
        %1522 = vmatprep.subr.mxu0 0.0
        %1523 = vmatpush1.msra.mxu0 0.0
        %1524 = vmatprep.subr.mxu0 0.0
        %1525 = vmatpush1.msra.mxu0 0.0
        %1526 = vmatprep.subr.mxu0 0.0
        %1527 = vmatpush1.msra.mxu0 0.0
        %1528 = vmatprep.subr.mxu0 0.0
        %1529 = vmatpush1.msra.mxu0 0.0
        %1530 = vmatprep.subr.mxu0 0.0
        %1531 = vmatpush1.msra.mxu0 0.0
        %1532 = vmatprep.subr.mxu0 0.0
        %1533 = vmatpush1.msra.mxu0 0.0
        %1534 = vmatprep.subr.mxu0 0.0
        %1535 = vmatpush1.msra.mxu0 %v1517
        %1536 = vmatprep.subr.mxu0 0.0
        %1537 = vmatpush1.msra.mxu0 %v1516
        %1538 = vmatprep.subr.mxu0 0.0
        %1539 = vmatpush1.msra.mxu0 %v1515
        %1540 = vmatprep.subr.mxu0 0.0
        %1541 = vmatpush1.msra.mxu0 %v1514
        %1542 = vmatprep.subr.mxu0 0.0
        %1543 = vmatpush1.msra.mxu0 %v1513
        %1544 = vmatprep.subr.mxu0 0.0
        %1545 = vmatpush1.msra.mxu0 %v1512
        %1546 = vmatprep.subr.mxu0 0.0
        %1547 = vmatpush1.msra.mxu0 %v1511
        %1548 = vmatprep.subr.mxu0 0.0
        %1549 = vmatpush1.msra.mxu0 %v1510
        %1550 = vmatprep.subr.mxu0 0.0
        %1551 = vmatpush2.msra.mxu0 0.0
        %1552 = vmatprep.subr.mxu0 0.0
        %1553 = vmatpush2.msra.mxu0 0.0
        %1554 = vmatprep.subr.mxu0 0.0
        %1555 = vmatpush2.msra.mxu0 0.0
        %1556 = vmatprep.subr.mxu0 0.0
        %1557 = vmatpush2.msra.mxu0 0.0
        %1558 = vmatprep.subr.mxu0 0.0
        %1559 = vmatpush2.msra.mxu0 0.0
        %1560 = vmatprep.subr.mxu0 0.0
        %1561 = vmatpush2.msra.mxu0 0.0
        %1562 = vmatprep.subr.mxu0 0.0
        %1563 = vmatpush2.msra.mxu0 0.0
        %1564 = vmatprep.subr.mxu0 0.0
        %1565 = vmatpush2.msra.mxu0 0.0
        %1566 = vmatprep.subr.mxu0 0.0
        %1567 = vmatpush2.msra.mxu0 0.0
        %1568 = vmatprep.subr.mxu0 0.0
        %1569 = vmatpush2.msra.mxu0 0.0
        %1570 = vmatprep.subr.mxu0 0.0
        %1571 = vmatpush2.msra.mxu0 0.0
        %1572 = vmatprep.subr.mxu0 0.0
        %1573 = vmatpush2.msra.mxu0 0.0
        %1574 = vmatprep.subr.mxu0 0.0
        %1575 = vmatpush2.msra.mxu0 0.0
        %1576 = vmatprep.subr.mxu0 0.0
        %1577 = vmatpush2.msra.mxu0 0.0
        %1578 = vmatprep.subr.mxu0 0.0
        %1579 = vmatpush2.msra.mxu0 0.0
        %1580 = vmatprep.subr.mxu0 0.0
        %1581 = vmatpush2.msra.mxu0 0.0
        %1582 = vmatprep.mubr.f32.mxu0 0.0
        %1583 = vmatmul.mubr.f32.gmra.mxu0 %v1012
        %v1584 = vpop.f32.mrf.mxu0
        %v1585 = vadd.f32 0.0, %v1584
        %v1586 = vpop.f32.mrf.mxu0
        %1587 = vmatprep.mubr.f32.mxu0 0.0
        %1588 = vmatmul.mubr.f32.gmra.mxu0 %v1015
        %v1589 = vpop.f32.mrf.mxu0
        %v1590 = vadd.f32 0.0, %v1589
        %v1591 = vpop.f32.mrf.mxu0
        %1592 = vdwg.mxu0
        %v1594 = vsel %vm1010, %v1494, 0
        %v1597 = vsel %vm1010, %v1499, 0
        %1599 = vmatprep.subr.mxu0 0.0
        %1600 = vmatpush1.msra.mxu0 0.0
        %1601 = vmatprep.subr.mxu0 0.0
        %1602 = vmatpush1.msra.mxu0 0.0
        %1603 = vmatprep.subr.mxu0 0.0
        %1604 = vmatpush1.msra.mxu0 0.0
        %1605 = vmatprep.subr.mxu0 0.0
        %1606 = vmatpush1.msra.mxu0 0.0
        %1607 = vmatprep.subr.mxu0 0.0
        %1608 = vmatpush1.msra.mxu0 0.0
        %1609 = vmatprep.subr.mxu0 0.0
        %1610 = vmatpush1.msra.mxu0 0.0
        %1611 = vmatprep.subr.mxu0 0.0
        %1612 = vmatpush1.msra.mxu0 0.0
        %1613 = vmatprep.subr.mxu0 0.0
        %1614 = vmatpush1.msra.mxu0 0.0
        %1615 = vmatprep.subr.mxu0 0.0
        %1616 = vmatpush1.msra.mxu0 %v1509
        %1617 = vmatprep.subr.mxu0 0.0
        %1618 = vmatpush1.msra.mxu0 %v1508
        %1619 = vmatprep.subr.mxu0 0.0
        %1620 = vmatpush1.msra.mxu0 %v1507
        %1621 = vmatprep.subr.mxu0 0.0
        %1622 = vmatpush1.msra.mxu0 %v1506
        %1623 = vmatprep.subr.mxu0 0.0
        %1624 = vmatpush1.msra.mxu0 %v1505
        %1625 = vmatprep.subr.mxu0 0.0
        %1626 = vmatpush1.msra.mxu0 %v1504
        %1627 = vmatprep.subr.mxu0 0.0
        %1628 = vmatpush1.msra.mxu0 %v1503
        %1629 = vmatprep.subr.mxu0 0.0
        %1630 = vmatpush1.msra.mxu0 %v1502
        %1631 = vmatprep.subr.mxu0 0.0
        %1632 = vmatpush2.msra.mxu0 0.0
        %1633 = vmatprep.subr.mxu0 0.0
        %1634 = vmatpush2.msra.mxu0 0.0
        %1635 = vmatprep.subr.mxu0 0.0
        %1636 = vmatpush2.msra.mxu0 0.0
        %1637 = vmatprep.subr.mxu0 0.0
        %1638 = vmatpush2.msra.mxu0 0.0
        %1639 = vmatprep.subr.mxu0 0.0
        %1640 = vmatpush2.msra.mxu0 0.0
        %1641 = vmatprep.subr.mxu0 0.0
        %1642 = vmatpush2.msra.mxu0 0.0
        %1643 = vmatprep.subr.mxu0 0.0
        %1644 = vmatpush2.msra.mxu0 0.0
        %1645 = vmatprep.subr.mxu0 0.0
        %1646 = vmatpush2.msra.mxu0 0.0
        %1647 = vmatprep.subr.mxu0 0.0
        %1648 = vmatpush2.msra.mxu0 0.0
        %1649 = vmatprep.subr.mxu0 0.0
        %1650 = vmatpush2.msra.mxu0 0.0
        %1651 = vmatprep.subr.mxu0 0.0
        %1652 = vmatpush2.msra.mxu0 0.0
        %1653 = vmatprep.subr.mxu0 0.0
        %1654 = vmatpush2.msra.mxu0 0.0
        %1655 = vmatprep.subr.mxu0 0.0
        %1656 = vmatpush2.msra.mxu0 0.0
        %1657 = vmatprep.subr.mxu0 0.0
        %1658 = vmatpush2.msra.mxu0 0.0
        %1659 = vmatprep.subr.mxu0 0.0
        %1660 = vmatpush2.msra.mxu0 0.0
        %1661 = vmatprep.subr.mxu0 0.0
        %1662 = vmatpush2.msra.mxu0 0.0
        %1663 = vmatprep.mubr.f32.mxu0 0.0
        %1664 = vmatmul.mubr.f32.gmra.mxu0 %v1594
        %v1665 = vpop.f32.mrf.mxu0
        %v1666 = vadd.f32 %v1585, %v1665
        %v1667 = vpop.f32.mrf.mxu0
        %1668 = vmatprep.mubr.f32.mxu0 0.0
        %1669 = vmatmul.mubr.f32.gmra.mxu0 %v1597
        %v1670 = vpop.f32.mrf.mxu0
        %v1671 = vadd.f32 %v1590, %v1670
        %v1672 = vpop.f32.mrf.mxu0
        %1673 = vdwg.mxu0
        %v1674 = vld [vmem:[%s13] sm:$0x1]
        %v1676 = vlaneseq
        %v1677 = vshrl.u32 %v1676, 7
        %v1678 = vsub.s32 0, %v1677
        %v1679 = vrot.slane %v1674, %v1678
        %v1681 = vadd.f32 %v1666, %v1679
        %v1682 = vadd.f32 %v1671, %v1679
        %v1683 = vld [vmem:[%s14] sm:$0xff]
        %v1684 = vld [vmem:[%s14 + $0x8] sm:$0xff]
        %v1685 = vld [vmem:[%s14 + $0x10] sm:$0xff]
        %v1686 = vld [vmem:[%s14 + $0x18] sm:$0xff]
        %v1687 = vld [vmem:[%s14 + $0x20] sm:$0xff]
        %v1688 = vld [vmem:[%s14 + $0x28] sm:$0xff]
        %v1689 = vld [vmem:[%s14 + $0x30] sm:$0xff]
        %v1690 = vld [vmem:[%s14 + $0x38] sm:$0xff]
        %v1691 = vld [vmem:[%s14 + $0x40] sm:$0xff]
        %v1692 = vld [vmem:[%s14 + $0x48] sm:$0xff]
        %v1693 = vld [vmem:[%s14 + $0x50] sm:$0xff]
        %v1694 = vld [vmem:[%s14 + $0x58] sm:$0xff]
        %v1695 = vld [vmem:[%s14 + $0x60] sm:$0xff]
        %v1696 = vld [vmem:[%s14 + $0x68] sm:$0xff]
        %vm1697 = vcmask 130048
        %v1699 = vsel %vm1697, %v1683, 0
        %v1702 = vsel %vm1697, %v1684, 0
        %v1705 = vsel %vm1697, %v1685, 0
        %v1708 = vsel %vm1697, %v1686, 0
        %v1711 = vsel %vm1697, %v1687, 0
        %v1714 = vsel %vm1697, %v1688, 0
        %v1717 = vsel %vm1697, %v1689, 0
        %v1720 = vsel %vm1697, %v1690, 0
        %v1723 = vsel %vm1697, %v1691, 0
        %v1726 = vsel %vm1697, %v1692, 0
        %v1729 = vsel %vm1697, %v1693, 0
        %v1732 = vsel %vm1697, %v1694, 0
        %v1735 = vsel %vm1697, %v1695, 0
        %v1738 = vsel %vm1697, %v1696, 0
        %1740 = vmatprep.subr.mxu0 0.0
        %1741 = vmatpush1.msra.mxu0 0.0
        %1742 = vmatprep.subr.mxu0 0.0
        %1743 = vmatpush1.msra.mxu0 0.0
        %1744 = vmatprep.subr.mxu0 0.0
        %1745 = vmatpush1.msra.mxu0 0.0
        %1746 = vmatprep.subr.mxu0 0.0
        %1747 = vmatpush1.msra.mxu0 0.0
        %1748 = vmatprep.subr.mxu0 0.0
        %1749 = vmatpush1.msra.mxu0 0.0
        %1750 = vmatprep.subr.mxu0 0.0
        %1751 = vmatpush1.msra.mxu0 0.0
        %1752 = vmatprep.subr.mxu0 0.0
        %1753 = vmatpush1.msra.mxu0 0.0
        %1754 = vmatprep.subr.mxu0 0.0
        %1755 = vmatpush1.msra.mxu0 0.0
        %1756 = vmatprep.subr.mxu0 0.0
        %1757 = vmatpush1.msra.mxu0 0.0
        %1758 = vmatprep.subr.mxu0 0.0
        %1759 = vmatpush1.msra.mxu0 0.0
        %1760 = vmatprep.subr.mxu0 0.0
        %1761 = vmatpush1.msra.mxu0 0.0
        %1762 = vmatprep.subr.mxu0 0.0
        %1763 = vmatpush1.msra.mxu0 0.0
        %1764 = vmatprep.subr.mxu0 0.0
        %1765 = vmatpush1.msra.mxu0 0.0
        %1766 = vmatprep.subr.mxu0 0.0
        %1767 = vmatpush1.msra.mxu0 0.0
        %1768 = vmatprep.subr.mxu0 0.0
        %1769 = vmatpush1.msra.mxu0 %v1682
        %1770 = vmatprep.subr.mxu0 0.0
        %1771 = vmatpush1.msra.mxu0 %v1681
        %1772 = vmatprep.subr.mxu0 0.0
        %1773 = vmatpush2.msra.mxu0 0.0
        %1774 = vmatprep.subr.mxu0 0.0
        %1775 = vmatpush2.msra.mxu0 0.0
        %1776 = vmatprep.subr.mxu0 0.0
        %1777 = vmatpush2.msra.mxu0 0.0
        %1778 = vmatprep.subr.mxu0 0.0
        %1779 = vmatpush2.msra.mxu0 0.0
        %1780 = vmatprep.subr.mxu0 0.0
        %1781 = vmatpush2.msra.mxu0 0.0
        %1782 = vmatprep.subr.mxu0 0.0
        %1783 = vmatpush2.msra.mxu0 0.0
        %1784 = vmatprep.subr.mxu0 0.0
        %1785 = vmatpush2.msra.mxu0 0.0
        %1786 = vmatprep.subr.mxu0 0.0
        %1787 = vmatpush2.msra.mxu0 0.0
        %1788 = vmatprep.subr.mxu0 0.0
        %1789 = vmatpush2.msra.mxu0 0.0
        %1790 = vmatprep.subr.mxu0 0.0
        %1791 = vmatpush2.msra.mxu0 0.0
        %1792 = vmatprep.subr.mxu0 0.0
        %1793 = vmatpush2.msra.mxu0 0.0
        %1794 = vmatprep.subr.mxu0 0.0
        %1795 = vmatpush2.msra.mxu0 0.0
        %1796 = vmatprep.subr.mxu0 0.0
        %1797 = vmatpush2.msra.mxu0 0.0
        %1798 = vmatprep.subr.mxu0 0.0
        %1799 = vmatpush2.msra.mxu0 0.0
        %1800 = vmatprep.subr.mxu0 0.0
        %1801 = vmatpush2.msra.mxu0 0.0
        %1802 = vmatprep.subr.mxu0 0.0
        %1803 = vmatpush2.msra.mxu0 0.0
        %1804 = vmatprep.mubr.f32.mxu0 0.0
        %1805 = vmatmul.mubr.f32.gmra.mxu0 %v1699
        %v1806 = vpop.f32.mrf.mxu0
        %v1807 = vadd.f32 0.0, %v1806
        %v1808 = vpop.f32.mrf.mxu0
        %1809 = vmatprep.mubr.f32.mxu0 0.0
        %1810 = vmatmul.mubr.f32.gmra.mxu0 %v1702
        %v1811 = vpop.f32.mrf.mxu0
        %v1812 = vadd.f32 0.0, %v1811
        %v1813 = vpop.f32.mrf.mxu0
        %1814 = vmatprep.mubr.f32.mxu0 0.0
        %1815 = vmatmul.mubr.f32.gmra.mxu0 %v1705
        %v1816 = vpop.f32.mrf.mxu0
        %v1817 = vadd.f32 0.0, %v1816
        %v1818 = vpop.f32.mrf.mxu0
        %1819 = vmatprep.mubr.f32.mxu0 0.0
        %1820 = vmatmul.mubr.f32.gmra.mxu0 %v1708
        %v1821 = vpop.f32.mrf.mxu0
        %v1822 = vadd.f32 0.0, %v1821
        %v1823 = vpop.f32.mrf.mxu0
        %1824 = vmatprep.mubr.f32.mxu0 0.0
        %1825 = vmatmul.mubr.f32.gmra.mxu0 %v1711
        %v1826 = vpop.f32.mrf.mxu0
        %v1827 = vadd.f32 0.0, %v1826
        %v1828 = vpop.f32.mrf.mxu0
        %1829 = vmatprep.mubr.f32.mxu0 0.0
        %1830 = vmatmul.mubr.f32.gmra.mxu0 %v1714
        %v1831 = vpop.f32.mrf.mxu0
        %v1832 = vadd.f32 0.0, %v1831
        %v1833 = vpop.f32.mrf.mxu0
        %1834 = vmatprep.mubr.f32.mxu0 0.0
        %1835 = vmatmul.mubr.f32.gmra.mxu0 %v1717
        %v1836 = vpop.f32.mrf.mxu0
        %v1837 = vadd.f32 0.0, %v1836
        %v1838 = vpop.f32.mrf.mxu0
        %1839 = vmatprep.mubr.f32.mxu0 0.0
        %1840 = vmatmul.mubr.f32.gmra.mxu0 %v1720
        %v1841 = vpop.f32.mrf.mxu0
        %v1842 = vadd.f32 0.0, %v1841
        %v1843 = vpop.f32.mrf.mxu0
        %1844 = vmatprep.mubr.f32.mxu0 0.0
        %1845 = vmatmul.mubr.f32.gmra.mxu0 %v1723
        %v1846 = vpop.f32.mrf.mxu0
        %v1847 = vadd.f32 0.0, %v1846
        %v1848 = vpop.f32.mrf.mxu0
        %1849 = vmatprep.mubr.f32.mxu0 0.0
        %1850 = vmatmul.mubr.f32.gmra.mxu0 %v1726
        %v1851 = vpop.f32.mrf.mxu0
        %v1852 = vadd.f32 0.0, %v1851
        %v1853 = vpop.f32.mrf.mxu0
        %1854 = vmatprep.mubr.f32.mxu0 0.0
        %1855 = vmatmul.mubr.f32.gmra.mxu0 %v1729
        %v1856 = vpop.f32.mrf.mxu0
        %v1857 = vadd.f32 0.0, %v1856
        %v1858 = vpop.f32.mrf.mxu0
        %1859 = vmatprep.mubr.f32.mxu0 0.0
        %1860 = vmatmul.mubr.f32.gmra.mxu0 %v1732
        %v1861 = vpop.f32.mrf.mxu0
        %v1862 = vadd.f32 0.0, %v1861
        %v1863 = vpop.f32.mrf.mxu0
        %1864 = vmatprep.mubr.f32.mxu0 0.0
        %1865 = vmatmul.mubr.f32.gmra.mxu0 %v1735
        %v1866 = vpop.f32.mrf.mxu0
        %v1867 = vadd.f32 0.0, %v1866
        %v1868 = vpop.f32.mrf.mxu0
        %1869 = vmatprep.mubr.f32.mxu0 0.0
        %1870 = vmatmul.mubr.f32.gmra.mxu0 %v1738
        %v1871 = vpop.f32.mrf.mxu0
        %v1872 = vadd.f32 0.0, %v1871
        %v1873 = vpop.f32.mrf.mxu0
        %1874 = vdwg.mxu0
        %v1875 = vld [vmem:[#allocation14] sm:$0xff]
        %v1876 = vld [vmem:[#allocation14 + $0x8] sm:$0xff]
        %v1877 = vld [vmem:[#allocation14 + $0x10] sm:$0xff]
        %v1878 = vld [vmem:[#allocation14 + $0x18] sm:$0xff]
        %v1879 = vld [vmem:[#allocation14 + $0x20] sm:$0xff]
        %v1880 = vld [vmem:[#allocation14 + $0x28] sm:$0xff]
        %v1881 = vld [vmem:[#allocation14 + $0x30] sm:$0xff]
        %v1882 = vld [vmem:[#allocation14 + $0x38] sm:$0xff]
        %v1883 = vld [vmem:[#allocation14 + $0x40] sm:$0xff]
        %v1884 = vld [vmem:[#allocation14 + $0x48] sm:$0xff]
        %v1885 = vld [vmem:[#allocation14 + $0x50] sm:$0xff]
        %v1886 = vld [vmem:[#allocation14 + $0x58] sm:$0xff]
        %v1887 = vld [vmem:[#allocation14 + $0x60] sm:$0xff]
        %v1888 = vld [vmem:[#allocation14 + $0x68] sm:$0xff]
        %v1889 = vld [vmem:[#allocation14 + $0x70] sm:$0xff]
        %v1890 = vld [vmem:[#allocation14 + $0x78] sm:$0xff]
        %s1891 = scalar_lea.vmem [#allocation14], 128
        %v1892 = vld [vmem:[%s1891] sm:$0xff]
        %v1893 = vld [vmem:[%s1891 + $0x8] sm:$0xff]
        %v1894 = vld [vmem:[%s1891 + $0x10] sm:$0xff]
        %v1895 = vld [vmem:[%s1891 + $0x18] sm:$0xff]
        %v1896 = vld [vmem:[%s1891 + $0x20] sm:$0xff]
        %v1897 = vld [vmem:[%s1891 + $0x28] sm:$0xff]
        %v1898 = vld [vmem:[%s1891 + $0x30] sm:$0xff]
        %v1899 = vld [vmem:[%s1891 + $0x38] sm:$0xff]
        %v1900 = vld [vmem:[%s1891 + $0x40] sm:$0xff]
        %v1901 = vld [vmem:[%s1891 + $0x48] sm:$0xff]
        %v1902 = vld [vmem:[%s1891 + $0x50] sm:$0xff]
        %v1903 = vld [vmem:[%s1891 + $0x58] sm:$0xff]
        %v1904 = vld [vmem:[%s1891 + $0x60] sm:$0xff]
        %v1905 = vld [vmem:[%s1891 + $0x68] sm:$0xff]
        %v1906 = vld [vmem:[%s1891 + $0x70] sm:$0xff]
        %v1907 = vld [vmem:[%s1891 + $0x78] sm:$0xff]
        %1908 = vmatprep.subr.mxu0 0.0
        %1909 = vmatpush1.msra.mxu0 %v1907
        %1910 = vmatprep.subr.mxu0 0.0
        %1911 = vmatpush1.msra.mxu0 %v1906
        %1912 = vmatprep.subr.mxu0 0.0
        %1913 = vmatpush1.msra.mxu0 %v1905
        %1914 = vmatprep.subr.mxu0 0.0
        %1915 = vmatpush1.msra.mxu0 %v1904
        %1916 = vmatprep.subr.mxu0 0.0
        %1917 = vmatpush1.msra.mxu0 %v1903
        %1918 = vmatprep.subr.mxu0 0.0
        %1919 = vmatpush1.msra.mxu0 %v1902
        %1920 = vmatprep.subr.mxu0 0.0
        %1921 = vmatpush1.msra.mxu0 %v1901
        %1922 = vmatprep.subr.mxu0 0.0
        %1923 = vmatpush1.msra.mxu0 %v1900
        %1924 = vmatprep.subr.mxu0 0.0
        %1925 = vmatpush1.msra.mxu0 %v1899
        %1926 = vmatprep.subr.mxu0 0.0
        %1927 = vmatpush1.msra.mxu0 %v1898
        %1928 = vmatprep.subr.mxu0 0.0
        %1929 = vmatpush1.msra.mxu0 %v1897
        %1930 = vmatprep.subr.mxu0 0.0
        %1931 = vmatpush1.msra.mxu0 %v1896
        %1932 = vmatprep.subr.mxu0 0.0
        %1933 = vmatpush1.msra.mxu0 %v1895
        %1934 = vmatprep.subr.mxu0 0.0
        %1935 = vmatpush1.msra.mxu0 %v1894
        %1936 = vmatprep.subr.mxu0 0.0
        %1937 = vmatpush1.msra.mxu0 %v1893
        %1938 = vmatprep.subr.mxu0 0.0
        %1939 = vmatpush1.msra.mxu0 %v1892
        %1940 = vmatprep.subr.mxu0 0.0
        %1941 = vmatpush2.msra.mxu0 0.0
        %1942 = vmatprep.subr.mxu0 0.0
        %1943 = vmatpush2.msra.mxu0 0.0
        %1944 = vmatprep.subr.mxu0 0.0
        %1945 = vmatpush2.msra.mxu0 0.0
        %1946 = vmatprep.subr.mxu0 0.0
        %1947 = vmatpush2.msra.mxu0 0.0
        %1948 = vmatprep.subr.mxu0 0.0
        %1949 = vmatpush2.msra.mxu0 0.0
        %1950 = vmatprep.subr.mxu0 0.0
        %1951 = vmatpush2.msra.mxu0 0.0
        %1952 = vmatprep.subr.mxu0 0.0
        %1953 = vmatpush2.msra.mxu0 0.0
        %1954 = vmatprep.subr.mxu0 0.0
        %1955 = vmatpush2.msra.mxu0 0.0
        %1956 = vmatprep.subr.mxu0 0.0
        %1957 = vmatpush2.msra.mxu0 0.0
        %1958 = vmatprep.subr.mxu0 0.0
        %1959 = vmatpush2.msra.mxu0 0.0
        %1960 = vmatprep.subr.mxu0 0.0
        %1961 = vmatpush2.msra.mxu0 0.0
        %1962 = vmatprep.subr.mxu0 0.0
        %1963 = vmatpush2.msra.mxu0 0.0
        %1964 = vmatprep.subr.mxu0 0.0
        %1965 = vmatpush2.msra.mxu0 0.0
        %1966 = vmatprep.subr.mxu0 0.0
        %1967 = vmatpush2.msra.mxu0 0.0
        %1968 = vmatprep.subr.mxu0 0.0
        %1969 = vmatpush2.msra.mxu0 0.0
        %1970 = vmatprep.subr.mxu0 0.0
        %1971 = vmatpush2.msra.mxu0 0.0
        %1972 = vmatprep.mubr.f32.mxu0 0.0
        %1973 = vmatmul.mubr.f32.gmra.mxu0 %v1817
        %v1974 = vpop.f32.mrf.mxu0
        %v1975 = vadd.f32 0.0, %v1974
        %v1976 = vpop.f32.mrf.mxu0
        %1977 = vmatprep.mubr.f32.mxu0 0.0
        %1978 = vmatmul.mubr.f32.gmra.mxu0 %v1822
        %v1979 = vpop.f32.mrf.mxu0
        %v1980 = vadd.f32 0.0, %v1979
        %v1981 = vpop.f32.mrf.mxu0
        %1982 = vdwg.mxu0
        %1983 = vmatprep.subr.mxu0 0.0
        %1984 = vmatpush1.msra.mxu0 %v1890
        %1985 = vmatprep.subr.mxu0 0.0
        %1986 = vmatpush1.msra.mxu0 %v1889
        %1987 = vmatprep.subr.mxu0 0.0
        %1988 = vmatpush1.msra.mxu0 %v1888
        %1989 = vmatprep.subr.mxu0 0.0
        %1990 = vmatpush1.msra.mxu0 %v1887
        %1991 = vmatprep.subr.mxu0 0.0
        %1992 = vmatpush1.msra.mxu0 %v1886
        %1993 = vmatprep.subr.mxu0 0.0
        %1994 = vmatpush1.msra.mxu0 %v1885
        %1995 = vmatprep.subr.mxu0 0.0
        %1996 = vmatpush1.msra.mxu0 %v1884
        %1997 = vmatprep.subr.mxu0 0.0
        %1998 = vmatpush1.msra.mxu0 %v1883
        %1999 = vmatprep.subr.mxu0 0.0
        %2000 = vmatpush1.msra.mxu0 %v1882
        %2001 = vmatprep.subr.mxu0 0.0
        %2002 = vmatpush1.msra.mxu0 %v1881
        %2003 = vmatprep.subr.mxu0 0.0
        %2004 = vmatpush1.msra.mxu0 %v1880
        %2005 = vmatprep.subr.mxu0 0.0
        %2006 = vmatpush1.msra.mxu0 %v1879
        %2007 = vmatprep.subr.mxu0 0.0
        %2008 = vmatpush1.msra.mxu0 %v1878
        %2009 = vmatprep.subr.mxu0 0.0
        %2010 = vmatpush1.msra.mxu0 %v1877
        %2011 = vmatprep.subr.mxu0 0.0
        %2012 = vmatpush1.msra.mxu0 %v1876
        %2013 = vmatprep.subr.mxu0 0.0
        %2014 = vmatpush1.msra.mxu0 %v1875
        %2015 = vmatprep.subr.mxu0 0.0
        %2016 = vmatpush2.msra.mxu0 0.0
        %2017 = vmatprep.subr.mxu0 0.0
        %2018 = vmatpush2.msra.mxu0 0.0
        %2019 = vmatprep.subr.mxu0 0.0
        %2020 = vmatpush2.msra.mxu0 0.0
        %2021 = vmatprep.subr.mxu0 0.0
        %2022 = vmatpush2.msra.mxu0 0.0
        %2023 = vmatprep.subr.mxu0 0.0
        %2024 = vmatpush2.msra.mxu0 0.0
        %2025 = vmatprep.subr.mxu0 0.0
        %2026 = vmatpush2.msra.mxu0 0.0
        %2027 = vmatprep.subr.mxu0 0.0
        %2028 = vmatpush2.msra.mxu0 0.0
        %2029 = vmatprep.subr.mxu0 0.0
        %2030 = vmatpush2.msra.mxu0 0.0
        %2031 = vmatprep.subr.mxu0 0.0
        %2032 = vmatpush2.msra.mxu0 0.0
        %2033 = vmatprep.subr.mxu0 0.0
        %2034 = vmatpush2.msra.mxu0 0.0
        %2035 = vmatprep.subr.mxu0 0.0
        %2036 = vmatpush2.msra.mxu0 0.0
        %2037 = vmatprep.subr.mxu0 0.0
        %2038 = vmatpush2.msra.mxu0 0.0
        %2039 = vmatprep.subr.mxu0 0.0
        %2040 = vmatpush2.msra.mxu0 0.0
        %2041 = vmatprep.subr.mxu0 0.0
        %2042 = vmatpush2.msra.mxu0 0.0
        %2043 = vmatprep.subr.mxu0 0.0
        %2044 = vmatpush2.msra.mxu0 0.0
        %2045 = vmatprep.subr.mxu0 0.0
        %2046 = vmatpush2.msra.mxu0 0.0
        %2047 = vmatprep.mubr.f32.mxu0 0.0
        %2048 = vmatmul.mubr.f32.gmra.mxu0 %v1807
        %v2049 = vpop.f32.mrf.mxu0
        %v2050 = vadd.f32 %v1975, %v2049
        %v2051 = vpop.f32.mrf.mxu0
        %2052 = vmatprep.mubr.f32.mxu0 0.0
        %2053 = vmatmul.mubr.f32.gmra.mxu0 %v1812
        %v2054 = vpop.f32.mrf.mxu0
        %v2055 = vadd.f32 %v1980, %v2054
        %v2056 = vpop.f32.mrf.mxu0
        %2057 = vdwg.mxu0
        %s2058 = scalar_lea.vmem [#allocation14], 256
        %v2059 = vld [vmem:[%s2058] sm:$0xff]
        %v2060 = vld [vmem:[%s2058 + $0x8] sm:$0xff]
        %v2061 = vld [vmem:[%s2058 + $0x10] sm:$0xff]
        %v2062 = vld [vmem:[%s2058 + $0x18] sm:$0xff]
        %v2063 = vld [vmem:[%s2058 + $0x20] sm:$0xff]
        %v2064 = vld [vmem:[%s2058 + $0x28] sm:$0xff]
        %v2065 = vld [vmem:[%s2058 + $0x30] sm:$0xff]
        %v2066 = vld [vmem:[%s2058 + $0x38] sm:$0xff]
        %v2067 = vld [vmem:[%s2058 + $0x40] sm:$0xff]
        %v2068 = vld [vmem:[%s2058 + $0x48] sm:$0xff]
        %v2069 = vld [vmem:[%s2058 + $0x50] sm:$0xff]
        %v2070 = vld [vmem:[%s2058 + $0x58] sm:$0xff]
        %v2071 = vld [vmem:[%s2058 + $0x60] sm:$0xff]
        %v2072 = vld [vmem:[%s2058 + $0x68] sm:$0xff]
        %v2073 = vld [vmem:[%s2058 + $0x70] sm:$0xff]
        %v2074 = vld [vmem:[%s2058 + $0x78] sm:$0xff]
        %2075 = vmatprep.subr.mxu0 0.0
        %2076 = vmatpush1.msra.mxu0 %v2074
        %2077 = vmatprep.subr.mxu0 0.0
        %2078 = vmatpush1.msra.mxu0 %v2073
        %2079 = vmatprep.subr.mxu0 0.0
        %2080 = vmatpush1.msra.mxu0 %v2072
        %2081 = vmatprep.subr.mxu0 0.0
        %2082 = vmatpush1.msra.mxu0 %v2071
        %2083 = vmatprep.subr.mxu0 0.0
        %2084 = vmatpush1.msra.mxu0 %v2070
        %2085 = vmatprep.subr.mxu0 0.0
        %2086 = vmatpush1.msra.mxu0 %v2069
        %2087 = vmatprep.subr.mxu0 0.0
        %2088 = vmatpush1.msra.mxu0 %v2068
        %2089 = vmatprep.subr.mxu0 0.0
        %2090 = vmatpush1.msra.mxu0 %v2067
        %2091 = vmatprep.subr.mxu0 0.0
        %2092 = vmatpush1.msra.mxu0 %v2066
        %2093 = vmatprep.subr.mxu0 0.0
        %2094 = vmatpush1.msra.mxu0 %v2065
        %2095 = vmatprep.subr.mxu0 0.0
        %2096 = vmatpush1.msra.mxu0 %v2064
        %2097 = vmatprep.subr.mxu0 0.0
        %2098 = vmatpush1.msra.mxu0 %v2063
        %2099 = vmatprep.subr.mxu0 0.0
        %2100 = vmatpush1.msra.mxu0 %v2062
        %2101 = vmatprep.subr.mxu0 0.0
        %2102 = vmatpush1.msra.mxu0 %v2061
        %2103 = vmatprep.subr.mxu0 0.0
        %2104 = vmatpush1.msra.mxu0 %v2060
        %2105 = vmatprep.subr.mxu0 0.0
        %2106 = vmatpush1.msra.mxu0 %v2059
        %2107 = vmatprep.subr.mxu0 0.0
        %2108 = vmatpush2.msra.mxu0 0.0
        %2109 = vmatprep.subr.mxu0 0.0
        %2110 = vmatpush2.msra.mxu0 0.0
        %2111 = vmatprep.subr.mxu0 0.0
        %2112 = vmatpush2.msra.mxu0 0.0
        %2113 = vmatprep.subr.mxu0 0.0
        %2114 = vmatpush2.msra.mxu0 0.0
        %2115 = vmatprep.subr.mxu0 0.0
        %2116 = vmatpush2.msra.mxu0 0.0
        %2117 = vmatprep.subr.mxu0 0.0
        %2118 = vmatpush2.msra.mxu0 0.0
        %2119 = vmatprep.subr.mxu0 0.0
        %2120 = vmatpush2.msra.mxu0 0.0
        %2121 = vmatprep.subr.mxu0 0.0
        %2122 = vmatpush2.msra.mxu0 0.0
        %2123 = vmatprep.subr.mxu0 0.0
        %2124 = vmatpush2.msra.mxu0 0.0
        %2125 = vmatprep.subr.mxu0 0.0
        %2126 = vmatpush2.msra.mxu0 0.0
        %2127 = vmatprep.subr.mxu0 0.0
        %2128 = vmatpush2.msra.mxu0 0.0
        %2129 = vmatprep.subr.mxu0 0.0
        %2130 = vmatpush2.msra.mxu0 0.0
        %2131 = vmatprep.subr.mxu0 0.0
        %2132 = vmatpush2.msra.mxu0 0.0
        %2133 = vmatprep.subr.mxu0 0.0
        %2134 = vmatpush2.msra.mxu0 0.0
        %2135 = vmatprep.subr.mxu0 0.0
        %2136 = vmatpush2.msra.mxu0 0.0
        %2137 = vmatprep.subr.mxu0 0.0
        %2138 = vmatpush2.msra.mxu0 0.0
        %2139 = vmatprep.mubr.f32.mxu0 0.0
        %2140 = vmatmul.mubr.f32.gmra.mxu0 %v1827
        %v2141 = vpop.f32.mrf.mxu0
        %v2142 = vadd.f32 0.0, %v2141
        %v2143 = vpop.f32.mrf.mxu0
        %2144 = vmatprep.mubr.f32.mxu0 0.0
        %2145 = vmatmul.mubr.f32.gmra.mxu0 %v1832
        %v2146 = vpop.f32.mrf.mxu0
        %v2147 = vadd.f32 0.0, %v2146
        %v2148 = vpop.f32.mrf.mxu0
        %2149 = vdwg.mxu0
        %v2150 = vadd.f32 %v2050, %v2142
        %v2151 = vadd.f32 %v2055, %v2147
        %s2152 = scalar_lea.vmem [#allocation14], 384
        %v2153 = vld [vmem:[%s2152] sm:$0xff]
        %v2154 = vld [vmem:[%s2152 + $0x8] sm:$0xff]
        %v2155 = vld [vmem:[%s2152 + $0x10] sm:$0xff]
        %v2156 = vld [vmem:[%s2152 + $0x18] sm:$0xff]
        %v2157 = vld [vmem:[%s2152 + $0x20] sm:$0xff]
        %v2158 = vld [vmem:[%s2152 + $0x28] sm:$0xff]
        %v2159 = vld [vmem:[%s2152 + $0x30] sm:$0xff]
        %v2160 = vld [vmem:[%s2152 + $0x38] sm:$0xff]
        %v2161 = vld [vmem:[%s2152 + $0x40] sm:$0xff]
        %v2162 = vld [vmem:[%s2152 + $0x48] sm:$0xff]
        %v2163 = vld [vmem:[%s2152 + $0x50] sm:$0xff]
        %v2164 = vld [vmem:[%s2152 + $0x58] sm:$0xff]
        %v2165 = vld [vmem:[%s2152 + $0x60] sm:$0xff]
        %v2166 = vld [vmem:[%s2152 + $0x68] sm:$0xff]
        %v2167 = vld [vmem:[%s2152 + $0x70] sm:$0xff]
        %v2168 = vld [vmem:[%s2152 + $0x78] sm:$0xff]
        %2169 = vmatprep.subr.mxu0 0.0
        %2170 = vmatpush1.msra.mxu0 %v2168
        %2171 = vmatprep.subr.mxu0 0.0
        %2172 = vmatpush1.msra.mxu0 %v2167
        %2173 = vmatprep.subr.mxu0 0.0
        %2174 = vmatpush1.msra.mxu0 %v2166
        %2175 = vmatprep.subr.mxu0 0.0
        %2176 = vmatpush1.msra.mxu0 %v2165
        %2177 = vmatprep.subr.mxu0 0.0
        %2178 = vmatpush1.msra.mxu0 %v2164
        %2179 = vmatprep.subr.mxu0 0.0
        %2180 = vmatpush1.msra.mxu0 %v2163
        %2181 = vmatprep.subr.mxu0 0.0
        %2182 = vmatpush1.msra.mxu0 %v2162
        %2183 = vmatprep.subr.mxu0 0.0
        %2184 = vmatpush1.msra.mxu0 %v2161
        %2185 = vmatprep.subr.mxu0 0.0
        %2186 = vmatpush1.msra.mxu0 %v2160
        %2187 = vmatprep.subr.mxu0 0.0
        %2188 = vmatpush1.msra.mxu0 %v2159
        %2189 = vmatprep.subr.mxu0 0.0
        %2190 = vmatpush1.msra.mxu0 %v2158
        %2191 = vmatprep.subr.mxu0 0.0
        %2192 = vmatpush1.msra.mxu0 %v2157
        %2193 = vmatprep.subr.mxu0 0.0
        %2194 = vmatpush1.msra.mxu0 %v2156
        %2195 = vmatprep.subr.mxu0 0.0
        %2196 = vmatpush1.msra.mxu0 %v2155
        %2197 = vmatprep.subr.mxu0 0.0
        %2198 = vmatpush1.msra.mxu0 %v2154
        %2199 = vmatprep.subr.mxu0 0.0
        %2200 = vmatpush1.msra.mxu0 %v2153
        %2201 = vmatprep.subr.mxu0 0.0
        %2202 = vmatpush2.msra.mxu0 0.0
        %2203 = vmatprep.subr.mxu0 0.0
        %2204 = vmatpush2.msra.mxu0 0.0
        %2205 = vmatprep.subr.mxu0 0.0
        %2206 = vmatpush2.msra.mxu0 0.0
        %2207 = vmatprep.subr.mxu0 0.0
        %2208 = vmatpush2.msra.mxu0 0.0
        %2209 = vmatprep.subr.mxu0 0.0
        %2210 = vmatpush2.msra.mxu0 0.0
        %2211 = vmatprep.subr.mxu0 0.0
        %2212 = vmatpush2.msra.mxu0 0.0
        %2213 = vmatprep.subr.mxu0 0.0
        %2214 = vmatpush2.msra.mxu0 0.0
        %2215 = vmatprep.subr.mxu0 0.0
        %2216 = vmatpush2.msra.mxu0 0.0
        %2217 = vmatprep.subr.mxu0 0.0
        %2218 = vmatpush2.msra.mxu0 0.0
        %2219 = vmatprep.subr.mxu0 0.0
        %2220 = vmatpush2.msra.mxu0 0.0
        %2221 = vmatprep.subr.mxu0 0.0
        %2222 = vmatpush2.msra.mxu0 0.0
        %2223 = vmatprep.subr.mxu0 0.0
        %2224 = vmatpush2.msra.mxu0 0.0
        %2225 = vmatprep.subr.mxu0 0.0
        %2226 = vmatpush2.msra.mxu0 0.0
        %2227 = vmatprep.subr.mxu0 0.0
        %2228 = vmatpush2.msra.mxu0 0.0
        %2229 = vmatprep.subr.mxu0 0.0
        %2230 = vmatpush2.msra.mxu0 0.0
        %2231 = vmatprep.subr.mxu0 0.0
        %2232 = vmatpush2.msra.mxu0 0.0
        %2233 = vmatprep.mubr.f32.mxu0 0.0
        %2234 = vmatmul.mubr.f32.gmra.mxu0 %v1837
        %v2235 = vpop.f32.mrf.mxu0
        %v2236 = vadd.f32 0.0, %v2235
        %v2237 = vpop.f32.mrf.mxu0
        %2238 = vmatprep.mubr.f32.mxu0 0.0
        %2239 = vmatmul.mubr.f32.gmra.mxu0 %v1842
        %v2240 = vpop.f32.mrf.mxu0
        %v2241 = vadd.f32 0.0, %v2240
        %v2242 = vpop.f32.mrf.mxu0
        %2243 = vdwg.mxu0
        %v2244 = vadd.f32 %v2150, %v2236
        %v2245 = vadd.f32 %v2151, %v2241
        %s2246 = scalar_lea.vmem [#allocation14], 512
        %v2247 = vld [vmem:[%s2246] sm:$0xff]
        %v2248 = vld [vmem:[%s2246 + $0x8] sm:$0xff]
        %v2249 = vld [vmem:[%s2246 + $0x10] sm:$0xff]
        %v2250 = vld [vmem:[%s2246 + $0x18] sm:$0xff]
        %v2251 = vld [vmem:[%s2246 + $0x20] sm:$0xff]
        %v2252 = vld [vmem:[%s2246 + $0x28] sm:$0xff]
        %v2253 = vld [vmem:[%s2246 + $0x30] sm:$0xff]
        %v2254 = vld [vmem:[%s2246 + $0x38] sm:$0xff]
        %v2255 = vld [vmem:[%s2246 + $0x40] sm:$0xff]
        %v2256 = vld [vmem:[%s2246 + $0x48] sm:$0xff]
        %v2257 = vld [vmem:[%s2246 + $0x50] sm:$0xff]
        %v2258 = vld [vmem:[%s2246 + $0x58] sm:$0xff]
        %v2259 = vld [vmem:[%s2246 + $0x60] sm:$0xff]
        %v2260 = vld [vmem:[%s2246 + $0x68] sm:$0xff]
        %v2261 = vld [vmem:[%s2246 + $0x70] sm:$0xff]
        %v2262 = vld [vmem:[%s2246 + $0x78] sm:$0xff]
        %2263 = vmatprep.subr.mxu0 0.0
        %2264 = vmatpush1.msra.mxu0 %v2262
        %2265 = vmatprep.subr.mxu0 0.0
        %2266 = vmatpush1.msra.mxu0 %v2261
        %2267 = vmatprep.subr.mxu0 0.0
        %2268 = vmatpush1.msra.mxu0 %v2260
        %2269 = vmatprep.subr.mxu0 0.0
        %2270 = vmatpush1.msra.mxu0 %v2259
        %2271 = vmatprep.subr.mxu0 0.0
        %2272 = vmatpush1.msra.mxu0 %v2258
        %2273 = vmatprep.subr.mxu0 0.0
        %2274 = vmatpush1.msra.mxu0 %v2257
        %2275 = vmatprep.subr.mxu0 0.0
        %2276 = vmatpush1.msra.mxu0 %v2256
        %2277 = vmatprep.subr.mxu0 0.0
        %2278 = vmatpush1.msra.mxu0 %v2255
        %2279 = vmatprep.subr.mxu0 0.0
        %2280 = vmatpush1.msra.mxu0 %v2254
        %2281 = vmatprep.subr.mxu0 0.0
        %2282 = vmatpush1.msra.mxu0 %v2253
        %2283 = vmatprep.subr.mxu0 0.0
        %2284 = vmatpush1.msra.mxu0 %v2252
        %2285 = vmatprep.subr.mxu0 0.0
        %2286 = vmatpush1.msra.mxu0 %v2251
        %2287 = vmatprep.subr.mxu0 0.0
        %2288 = vmatpush1.msra.mxu0 %v2250
        %2289 = vmatprep.subr.mxu0 0.0
        %2290 = vmatpush1.msra.mxu0 %v2249
        %2291 = vmatprep.subr.mxu0 0.0
        %2292 = vmatpush1.msra.mxu0 %v2248
        %2293 = vmatprep.subr.mxu0 0.0
        %2294 = vmatpush1.msra.mxu0 %v2247
        %2295 = vmatprep.subr.mxu0 0.0
        %2296 = vmatpush2.msra.mxu0 0.0
        %2297 = vmatprep.subr.mxu0 0.0
        %2298 = vmatpush2.msra.mxu0 0.0
        %2299 = vmatprep.subr.mxu0 0.0
        %2300 = vmatpush2.msra.mxu0 0.0
        %2301 = vmatprep.subr.mxu0 0.0
        %2302 = vmatpush2.msra.mxu0 0.0
        %2303 = vmatprep.subr.mxu0 0.0
        %2304 = vmatpush2.msra.mxu0 0.0
        %2305 = vmatprep.subr.mxu0 0.0
        %2306 = vmatpush2.msra.mxu0 0.0
        %2307 = vmatprep.subr.mxu0 0.0
        %2308 = vmatpush2.msra.mxu0 0.0
        %2309 = vmatprep.subr.mxu0 0.0
        %2310 = vmatpush2.msra.mxu0 0.0
        %2311 = vmatprep.subr.mxu0 0.0
        %2312 = vmatpush2.msra.mxu0 0.0
        %2313 = vmatprep.subr.mxu0 0.0
        %2314 = vmatpush2.msra.mxu0 0.0
        %2315 = vmatprep.subr.mxu0 0.0
        %2316 = vmatpush2.msra.mxu0 0.0
        %2317 = vmatprep.subr.mxu0 0.0
        %2318 = vmatpush2.msra.mxu0 0.0
        %2319 = vmatprep.subr.mxu0 0.0
        %2320 = vmatpush2.msra.mxu0 0.0
        %2321 = vmatprep.subr.mxu0 0.0
        %2322 = vmatpush2.msra.mxu0 0.0
        %2323 = vmatprep.subr.mxu0 0.0
        %2324 = vmatpush2.msra.mxu0 0.0
        %2325 = vmatprep.subr.mxu0 0.0
        %2326 = vmatpush2.msra.mxu0 0.0
        %2327 = vmatprep.mubr.f32.mxu0 0.0
        %2328 = vmatmul.mubr.f32.gmra.mxu0 %v1847
        %v2329 = vpop.f32.mrf.mxu0
        %v2330 = vadd.f32 0.0, %v2329
        %v2331 = vpop.f32.mrf.mxu0
        %2332 = vmatprep.mubr.f32.mxu0 0.0
        %2333 = vmatmul.mubr.f32.gmra.mxu0 %v1852
        %v2334 = vpop.f32.mrf.mxu0
        %v2335 = vadd.f32 0.0, %v2334
        %v2336 = vpop.f32.mrf.mxu0
        %2337 = vdwg.mxu0
        %v2338 = vadd.f32 %v2244, %v2330
        %v2339 = vadd.f32 %v2245, %v2335
        %s2340 = scalar_lea.vmem [#allocation14], 640
        %v2341 = vld [vmem:[%s2340] sm:$0xff]
        %v2342 = vld [vmem:[%s2340 + $0x8] sm:$0xff]
        %v2343 = vld [vmem:[%s2340 + $0x10] sm:$0xff]
        %v2344 = vld [vmem:[%s2340 + $0x18] sm:$0xff]
        %v2345 = vld [vmem:[%s2340 + $0x20] sm:$0xff]
        %v2346 = vld [vmem:[%s2340 + $0x28] sm:$0xff]
        %v2347 = vld [vmem:[%s2340 + $0x30] sm:$0xff]
        %v2348 = vld [vmem:[%s2340 + $0x38] sm:$0xff]
        %v2349 = vld [vmem:[%s2340 + $0x40] sm:$0xff]
        %v2350 = vld [vmem:[%s2340 + $0x48] sm:$0xff]
        %v2351 = vld [vmem:[%s2340 + $0x50] sm:$0xff]
        %v2352 = vld [vmem:[%s2340 + $0x58] sm:$0xff]
        %v2353 = vld [vmem:[%s2340 + $0x60] sm:$0xff]
        %v2354 = vld [vmem:[%s2340 + $0x68] sm:$0xff]
        %v2355 = vld [vmem:[%s2340 + $0x70] sm:$0xff]
        %v2356 = vld [vmem:[%s2340 + $0x78] sm:$0xff]
        %2357 = vmatprep.subr.mxu0 0.0
        %2358 = vmatpush1.msra.mxu0 %v2356
        %2359 = vmatprep.subr.mxu0 0.0
        %2360 = vmatpush1.msra.mxu0 %v2355
        %2361 = vmatprep.subr.mxu0 0.0
        %2362 = vmatpush1.msra.mxu0 %v2354
        %2363 = vmatprep.subr.mxu0 0.0
        %2364 = vmatpush1.msra.mxu0 %v2353
        %2365 = vmatprep.subr.mxu0 0.0
        %2366 = vmatpush1.msra.mxu0 %v2352
        %2367 = vmatprep.subr.mxu0 0.0
        %2368 = vmatpush1.msra.mxu0 %v2351
        %2369 = vmatprep.subr.mxu0 0.0
        %2370 = vmatpush1.msra.mxu0 %v2350
        %2371 = vmatprep.subr.mxu0 0.0
        %2372 = vmatpush1.msra.mxu0 %v2349
        %2373 = vmatprep.subr.mxu0 0.0
        %2374 = vmatpush1.msra.mxu0 %v2348
        %2375 = vmatprep.subr.mxu0 0.0
        %2376 = vmatpush1.msra.mxu0 %v2347
        %2377 = vmatprep.subr.mxu0 0.0
        %2378 = vmatpush1.msra.mxu0 %v2346
        %2379 = vmatprep.subr.mxu0 0.0
        %2380 = vmatpush1.msra.mxu0 %v2345
        %2381 = vmatprep.subr.mxu0 0.0
        %2382 = vmatpush1.msra.mxu0 %v2344
        %2383 = vmatprep.subr.mxu0 0.0
        %2384 = vmatpush1.msra.mxu0 %v2343
        %2385 = vmatprep.subr.mxu0 0.0
        %2386 = vmatpush1.msra.mxu0 %v2342
        %2387 = vmatprep.subr.mxu0 0.0
        %2388 = vmatpush1.msra.mxu0 %v2341
        %2389 = vmatprep.subr.mxu0 0.0
        %2390 = vmatpush2.msra.mxu0 0.0
        %2391 = vmatprep.subr.mxu0 0.0
        %2392 = vmatpush2.msra.mxu0 0.0
        %2393 = vmatprep.subr.mxu0 0.0
        %2394 = vmatpush2.msra.mxu0 0.0
        %2395 = vmatprep.subr.mxu0 0.0
        %2396 = vmatpush2.msra.mxu0 0.0
        %2397 = vmatprep.subr.mxu0 0.0
        %2398 = vmatpush2.msra.mxu0 0.0
        %2399 = vmatprep.subr.mxu0 0.0
        %2400 = vmatpush2.msra.mxu0 0.0
        %2401 = vmatprep.subr.mxu0 0.0
        %2402 = vmatpush2.msra.mxu0 0.0
        %2403 = vmatprep.subr.mxu0 0.0
        %2404 = vmatpush2.msra.mxu0 0.0
        %2405 = vmatprep.subr.mxu0 0.0
        %2406 = vmatpush2.msra.mxu0 0.0
        %2407 = vmatprep.subr.mxu0 0.0
        %2408 = vmatpush2.msra.mxu0 0.0
        %2409 = vmatprep.subr.mxu0 0.0
        %2410 = vmatpush2.msra.mxu0 0.0
        %2411 = vmatprep.subr.mxu0 0.0
        %2412 = vmatpush2.msra.mxu0 0.0
        %2413 = vmatprep.subr.mxu0 0.0
        %2414 = vmatpush2.msra.mxu0 0.0
        %2415 = vmatprep.subr.mxu0 0.0
        %2416 = vmatpush2.msra.mxu0 0.0
        %2417 = vmatprep.subr.mxu0 0.0
        %2418 = vmatpush2.msra.mxu0 0.0
        %2419 = vmatprep.subr.mxu0 0.0
        %2420 = vmatpush2.msra.mxu0 0.0
        %2421 = vmatprep.mubr.f32.mxu0 0.0
        %2422 = vmatmul.mubr.f32.gmra.mxu0 %v1857
        %v2423 = vpop.f32.mrf.mxu0
        %v2424 = vadd.f32 0.0, %v2423
        %v2425 = vpop.f32.mrf.mxu0
        %2426 = vmatprep.mubr.f32.mxu0 0.0
        %2427 = vmatmul.mubr.f32.gmra.mxu0 %v1862
        %v2428 = vpop.f32.mrf.mxu0
        %v2429 = vadd.f32 0.0, %v2428
        %v2430 = vpop.f32.mrf.mxu0
        %2431 = vdwg.mxu0
        %v2432 = vadd.f32 %v2338, %v2424
        %v2433 = vadd.f32 %v2339, %v2429
        %s2434 = scalar_lea.vmem [#allocation14], 768
        %v2435 = vld [vmem:[%s2434] sm:$0xff]
        %v2436 = vld [vmem:[%s2434 + $0x8] sm:$0xff]
        %v2437 = vld [vmem:[%s2434 + $0x10] sm:$0xff]
        %v2438 = vld [vmem:[%s2434 + $0x18] sm:$0xff]
        %v2439 = vld [vmem:[%s2434 + $0x20] sm:$0xff]
        %v2440 = vld [vmem:[%s2434 + $0x28] sm:$0xff]
        %v2441 = vld [vmem:[%s2434 + $0x30] sm:$0xff]
        %v2442 = vld [vmem:[%s2434 + $0x38] sm:$0xff]
        %v2443 = vld [vmem:[%s2434 + $0x40] sm:$0xff]
        %v2444 = vld [vmem:[%s2434 + $0x48] sm:$0xff]
        %v2445 = vld [vmem:[%s2434 + $0x50] sm:$0xff]
        %v2446 = vld [vmem:[%s2434 + $0x58] sm:$0xff]
        %v2447 = vld [vmem:[%s2434 + $0x60] sm:$0xff]
        %v2448 = vld [vmem:[%s2434 + $0x68] sm:$0xff]
        %v2449 = vld [vmem:[%s2434 + $0x70] sm:$0xff]
        %v2450 = vld [vmem:[%s2434 + $0x78] sm:$0xff]
        %2451 = vmatprep.subr.mxu0 0.0
        %2452 = vmatpush1.msra.mxu0 %v2450
        %2453 = vmatprep.subr.mxu0 0.0
        %2454 = vmatpush1.msra.mxu0 %v2449
        %2455 = vmatprep.subr.mxu0 0.0
        %2456 = vmatpush1.msra.mxu0 %v2448
        %2457 = vmatprep.subr.mxu0 0.0
        %2458 = vmatpush1.msra.mxu0 %v2447
        %2459 = vmatprep.subr.mxu0 0.0
        %2460 = vmatpush1.msra.mxu0 %v2446
        %2461 = vmatprep.subr.mxu0 0.0
        %2462 = vmatpush1.msra.mxu0 %v2445
        %2463 = vmatprep.subr.mxu0 0.0
        %2464 = vmatpush1.msra.mxu0 %v2444
        %2465 = vmatprep.subr.mxu0 0.0
        %2466 = vmatpush1.msra.mxu0 %v2443
        %2467 = vmatprep.subr.mxu0 0.0
        %2468 = vmatpush1.msra.mxu0 %v2442
        %2469 = vmatprep.subr.mxu0 0.0
        %2470 = vmatpush1.msra.mxu0 %v2441
        %2471 = vmatprep.subr.mxu0 0.0
        %2472 = vmatpush1.msra.mxu0 %v2440
        %2473 = vmatprep.subr.mxu0 0.0
        %2474 = vmatpush1.msra.mxu0 %v2439
        %2475 = vmatprep.subr.mxu0 0.0
        %2476 = vmatpush1.msra.mxu0 %v2438
        %2477 = vmatprep.subr.mxu0 0.0
        %2478 = vmatpush1.msra.mxu0 %v2437
        %2479 = vmatprep.subr.mxu0 0.0
        %2480 = vmatpush1.msra.mxu0 %v2436
        %2481 = vmatprep.subr.mxu0 0.0
        %2482 = vmatpush1.msra.mxu0 %v2435
        %2483 = vmatprep.subr.mxu0 0.0
        %2484 = vmatpush2.msra.mxu0 0.0
        %2485 = vmatprep.subr.mxu0 0.0
        %2486 = vmatpush2.msra.mxu0 0.0
        %2487 = vmatprep.subr.mxu0 0.0
        %2488 = vmatpush2.msra.mxu0 0.0
        %2489 = vmatprep.subr.mxu0 0.0
        %2490 = vmatpush2.msra.mxu0 0.0
        %2491 = vmatprep.subr.mxu0 0.0
        %2492 = vmatpush2.msra.mxu0 0.0
        %2493 = vmatprep.subr.mxu0 0.0
        %2494 = vmatpush2.msra.mxu0 0.0
        %2495 = vmatprep.subr.mxu0 0.0
        %2496 = vmatpush2.msra.mxu0 0.0
        %2497 = vmatprep.subr.mxu0 0.0
        %2498 = vmatpush2.msra.mxu0 0.0
        %2499 = vmatprep.subr.mxu0 0.0
        %2500 = vmatpush2.msra.mxu0 0.0
        %2501 = vmatprep.subr.mxu0 0.0
        %2502 = vmatpush2.msra.mxu0 0.0
        %2503 = vmatprep.subr.mxu0 0.0
        %2504 = vmatpush2.msra.mxu0 0.0
        %2505 = vmatprep.subr.mxu0 0.0
        %2506 = vmatpush2.msra.mxu0 0.0
        %2507 = vmatprep.subr.mxu0 0.0
        %2508 = vmatpush2.msra.mxu0 0.0
        %2509 = vmatprep.subr.mxu0 0.0
        %2510 = vmatpush2.msra.mxu0 0.0
        %2511 = vmatprep.subr.mxu0 0.0
        %2512 = vmatpush2.msra.mxu0 0.0
        %2513 = vmatprep.subr.mxu0 0.0
        %2514 = vmatpush2.msra.mxu0 0.0
        %2515 = vmatprep.mubr.f32.mxu0 0.0
        %2516 = vmatmul.mubr.f32.gmra.mxu0 %v1867
        %v2517 = vpop.f32.mrf.mxu0
        %v2518 = vadd.f32 0.0, %v2517
        %v2519 = vpop.f32.mrf.mxu0
        %2520 = vmatprep.mubr.f32.mxu0 0.0
        %2521 = vmatmul.mubr.f32.gmra.mxu0 %v1872
        %v2522 = vpop.f32.mrf.mxu0
        %v2523 = vadd.f32 0.0, %v2522
        %v2524 = vpop.f32.mrf.mxu0
        %2525 = vdwg.mxu0
        %v2526 = vadd.f32 %v2432, %v2518
        %v2527 = vadd.f32 %v2433, %v2523
        %v2528 = vld [vmem:[%s16] sm:$0x1]
        %v2530 = vlaneseq
        %v2531 = vshrl.u32 %v2530, 7
        %v2532 = vsub.s32 0, %v2531
        %v2533 = vrot.slane %v2528, %v2532
        %v2535 = vadd.f32 %v2526, %v2533
        %v2536 = vadd.f32 %v2527, %v2533
        %v2537 = vld [vmem:[#allocation16] sm:$0xff]
        %v2538 = vld [vmem:[#allocation16 + $0x8] sm:$0xff]
        %v2539 = vld [vmem:[#allocation16 + $0x10] sm:$0xff]
        %v2540 = vld [vmem:[#allocation16 + $0x18] sm:$0xff]
        %v2541 = vld [vmem:[#allocation16 + $0x20] sm:$0xff]
        %v2542 = vld [vmem:[#allocation16 + $0x28] sm:$0xff]
        %v2543 = vld [vmem:[#allocation16 + $0x30] sm:$0xff]
        %v2544 = vld [vmem:[#allocation16 + $0x38] sm:$0xff]
        %v2545 = vld [vmem:[#allocation16 + $0x40] sm:$0xff]
        %v2546 = vld [vmem:[#allocation16 + $0x48] sm:$0xff]
        %v2547 = vld [vmem:[#allocation16 + $0x50] sm:$0xff]
        %v2548 = vld [vmem:[#allocation16 + $0x58] sm:$0xff]
        %v2549 = vld [vmem:[#allocation16 + $0x60] sm:$0xff]
        %v2550 = vld [vmem:[#allocation16 + $0x68] sm:$0xff]
        %v2551 = vld [vmem:[#allocation16 + $0x70] sm:$0xff]
        %v2552 = vld [vmem:[#allocation16 + $0x78] sm:$0xff]
        %v2553 = vld [vmem:[#allocation16 + $0x80] sm:$0xff]
        %v2554 = vld [vmem:[#allocation16 + $0x88] sm:$0xff]
        %v2555 = vld [vmem:[#allocation16 + $0x90] sm:$0xff]
        %v2556 = vld [vmem:[#allocation16 + $0x98] sm:$0xff]
        %v2557 = vld [vmem:[#allocation16 + $0xa0] sm:$0xff]
        %v2558 = vld [vmem:[#allocation16 + $0xa8] sm:$0xff]
        %v2559 = vld [vmem:[#allocation16 + $0xb0] sm:$0xff]
        %v2560 = vld [vmem:[#allocation16 + $0xb8] sm:$0xff]
        %v2561 = vld [vmem:[#allocation16 + $0xc0] sm:$0xff]
        %v2562 = vld [vmem:[#allocation16 + $0xc8] sm:$0xff]
        %v2563 = vld [vmem:[#allocation16 + $0xd0] sm:$0xff]
        %v2564 = vld [vmem:[#allocation16 + $0xd8] sm:$0xff]
        %v2565 = vld [vmem:[#allocation16 + $0xe0] sm:$0xff]
        %v2566 = vld [vmem:[#allocation16 + $0xe8] sm:$0xff]
        %v2567 = vld [vmem:[#allocation16 + $0xf0] sm:$0xff]
        %v2568 = vld [vmem:[#allocation16 + $0xf8] sm:$0xff]
        %v2569 = vld [vmem:[#allocation16 + $0x100] sm:$0xff]
        %v2570 = vld [vmem:[#allocation16 + $0x108] sm:$0xff]
        %v2571 = vld [vmem:[#allocation16 + $0x110] sm:$0xff]
        %v2572 = vld [vmem:[#allocation16 + $0x118] sm:$0xff]
        %v2573 = vld [vmem:[#allocation16 + $0x120] sm:$0xff]
        %v2574 = vld [vmem:[#allocation16 + $0x128] sm:$0xff]
        %v2575 = vld [vmem:[#allocation16 + $0x130] sm:$0xff]
        %v2576 = vld [vmem:[#allocation16 + $0x138] sm:$0xff]
        %v2577 = vld [vmem:[#allocation16 + $0x140] sm:$0xff]
        %v2578 = vld [vmem:[#allocation16 + $0x148] sm:$0xff]
        %v2579 = vld [vmem:[#allocation16 + $0x150] sm:$0xff]
        %v2580 = vld [vmem:[#allocation16 + $0x158] sm:$0xff]
        %v2581 = vld [vmem:[#allocation16 + $0x160] sm:$0xff]
        %v2582 = vld [vmem:[#allocation16 + $0x168] sm:$0xff]
        %v2583 = vld [vmem:[#allocation16 + $0x170] sm:$0xff]
        %v2584 = vld [vmem:[#allocation16 + $0x178] sm:$0xff]
        %v2585 = vld [vmem:[#allocation16 + $0x180] sm:$0xff]
        %v2586 = vld [vmem:[#allocation16 + $0x188] sm:$0xff]
        %v2587 = vld [vmem:[#allocation16 + $0x190] sm:$0xff]
        %v2588 = vld [vmem:[#allocation16 + $0x198] sm:$0xff]
        %v2589 = vld [vmem:[#allocation16 + $0x1a0] sm:$0xff]
        %v2590 = vld [vmem:[#allocation16 + $0x1a8] sm:$0xff]
        %v2591 = vld [vmem:[#allocation16 + $0x1b0] sm:$0xff]
        %v2592 = vld [vmem:[#allocation16 + $0x1b8] sm:$0xff]
        %v2593 = vld [vmem:[#allocation16 + $0x1c0] sm:$0xff]
        %v2594 = vld [vmem:[#allocation16 + $0x1c8] sm:$0xff]
        %v2595 = vld [vmem:[#allocation16 + $0x1d0] sm:$0xff]
        %v2596 = vld [vmem:[#allocation16 + $0x1d8] sm:$0xff]
        %v2597 = vld [vmem:[#allocation16 + $0x1e0] sm:$0xff]
        %v2598 = vld [vmem:[#allocation16 + $0x1e8] sm:$0xff]
        %v2599 = vld [vmem:[#allocation16 + $0x1f0] sm:$0xff]
        %v2600 = vld [vmem:[#allocation16 + $0x1f8] sm:$0xff]
        %v2601 = vld [vmem:[%s18] sm:$0xf]
        %v2603 = vlaneseq
        %v2604 = vshrl.u32 %v2603, 7
        %v2605 = vsub.s32 0, %v2604
        %v2606 = vrot.slane %v2601, %v2605
        %v2607 = vlaneseq
        %v2608 = vshrl.u32 %v2607, 7
        %v2609 = vsub.s32 1, %v2608
        %v2610 = vrot.slane %v2601, %v2609
        %v2611 = vlaneseq
        %v2612 = vshrl.u32 %v2611, 7
        %v2613 = vsub.s32 2, %v2612
        %v2614 = vrot.slane %v2601, %v2613
        %v2615 = vlaneseq
        %v2616 = vshrl.u32 %v2615, 7
        %v2617 = vsub.s32 3, %v2616
        %v2618 = vrot.slane %v2601, %v2617
        %2623 = vmatprep.subr.mxu0 %v2598
        %2624 = vmatpush1.msra.mxu0 %v2597
        %2625 = vmatprep.subr.mxu0 %v2594
        %2626 = vmatpush1.msra.mxu0 %v2593
        %2627 = vmatprep.subr.mxu0 %v2590
        %2628 = vmatpush1.msra.mxu0 %v2589
        %2629 = vmatprep.subr.mxu0 %v2586
        %2630 = vmatpush1.msra.mxu0 %v2585
        %2631 = vmatprep.subr.mxu0 %v2582
        %2632 = vmatpush1.msra.mxu0 %v2581
        %2633 = vmatprep.subr.mxu0 %v2578
        %2634 = vmatpush1.msra.mxu0 %v2577
        %2635 = vmatprep.subr.mxu0 %v2574
        %2636 = vmatpush1.msra.mxu0 %v2573
        %2637 = vmatprep.subr.mxu0 %v2570
        %2638 = vmatpush1.msra.mxu0 %v2569
        %2639 = vmatprep.subr.mxu0 %v2566
        %2640 = vmatpush1.msra.mxu0 %v2565
        %2641 = vmatprep.subr.mxu0 %v2562
        %2642 = vmatpush1.msra.mxu0 %v2561
        %2643 = vmatprep.subr.mxu0 %v2558
        %2644 = vmatpush1.msra.mxu0 %v2557
        %2645 = vmatprep.subr.mxu0 %v2554
        %2646 = vmatpush1.msra.mxu0 %v2553
        %2647 = vmatprep.subr.mxu0 %v2550
        %2648 = vmatpush1.msra.mxu0 %v2549
        %2649 = vmatprep.subr.mxu0 %v2546
        %2650 = vmatpush1.msra.mxu0 %v2545
        %2651 = vmatprep.subr.mxu0 %v2542
        %2652 = vmatpush1.msra.mxu0 %v2541
        %2653 = vmatprep.subr.mxu0 %v2538
        %2654 = vmatpush1.msra.mxu0 %v2537
        %2655 = vmatprep.subr.mxu0 0.0
        %2656 = vmatpush2.msra.mxu0 0.0
        %2657 = vmatprep.subr.mxu0 0.0
        %2658 = vmatpush2.msra.mxu0 0.0
        %2659 = vmatprep.subr.mxu0 0.0
        %2660 = vmatpush2.msra.mxu0 0.0
        %2661 = vmatprep.subr.mxu0 0.0
        %2662 = vmatpush2.msra.mxu0 0.0
        %2663 = vmatprep.subr.mxu0 0.0
        %2664 = vmatpush2.msra.mxu0 0.0
        %2665 = vmatprep.subr.mxu0 0.0
        %2666 = vmatpush2.msra.mxu0 0.0
        %2667 = vmatprep.subr.mxu0 0.0
        %2668 = vmatpush2.msra.mxu0 0.0
        %2669 = vmatprep.subr.mxu0 0.0
        %2670 = vmatpush2.msra.mxu0 0.0
        %2671 = vmatprep.subr.mxu0 0.0
        %2672 = vmatpush2.msra.mxu0 0.0
        %2673 = vmatprep.subr.mxu0 0.0
        %2674 = vmatpush2.msra.mxu0 0.0
        %2675 = vmatprep.subr.mxu0 0.0
        %2676 = vmatpush2.msra.mxu0 0.0
        %2677 = vmatprep.subr.mxu0 0.0
        %2678 = vmatpush2.msra.mxu0 0.0
        %2679 = vmatprep.subr.mxu0 0.0
        %2680 = vmatpush2.msra.mxu0 0.0
        %2681 = vmatprep.subr.mxu0 0.0
        %2682 = vmatpush2.msra.mxu0 0.0
        %2683 = vmatprep.subr.mxu0 0.0
        %2684 = vmatpush2.msra.mxu0 0.0
        %2685 = vmatprep.subr.mxu0 0.0
        %2686 = vmatpush2.msra.mxu0 0.0
        %2687 = vmatprep.mubr.f32.mxu0 0.0
        %2688 = vmatmul.mubr.f32.gmra.mxu0 %v2535
        %v2689 = vpop.f32.mrf.mxu0
        %v2690 = vadd.f32 %v2606, %v2689
        %v2691 = vpop.f32.mrf.mxu0
        %v2692 = vadd.f32 %v2610, %v2691
        %2693 = vmatprep.mubr.f32.mxu0 0.0
        %2694 = vmatmul.mubr.f32.gmra.mxu0 %v2536
        %v2695 = vpop.f32.mrf.mxu0
        %v2696 = vadd.f32 %v2606, %v2695
        %v2697 = vpop.f32.mrf.mxu0
        %v2698 = vadd.f32 %v2610, %v2697
        %2699 = vdwg.mxu0
        %2700 = vmatprep.subr.mxu0 %v2600
        %2701 = vmatpush1.msra.mxu0 %v2599
        %2702 = vmatprep.subr.mxu0 %v2596
        %2703 = vmatpush1.msra.mxu0 %v2595
        %2704 = vmatprep.subr.mxu0 %v2592
        %2705 = vmatpush1.msra.mxu0 %v2591
        %2706 = vmatprep.subr.mxu0 %v2588
        %2707 = vmatpush1.msra.mxu0 %v2587
        %2708 = vmatprep.subr.mxu0 %v2584
        %2709 = vmatpush1.msra.mxu0 %v2583
        %2710 = vmatprep.subr.mxu0 %v2580
        %2711 = vmatpush1.msra.mxu0 %v2579
        %2712 = vmatprep.subr.mxu0 %v2576
        %2713 = vmatpush1.msra.mxu0 %v2575
        %2714 = vmatprep.subr.mxu0 %v2572
        %2715 = vmatpush1.msra.mxu0 %v2571
        %2716 = vmatprep.subr.mxu0 %v2568
        %2717 = vmatpush1.msra.mxu0 %v2567
        %2718 = vmatprep.subr.mxu0 %v2564
        %2719 = vmatpush1.msra.mxu0 %v2563
        %2720 = vmatprep.subr.mxu0 %v2560
        %2721 = vmatpush1.msra.mxu0 %v2559
        %2722 = vmatprep.subr.mxu0 %v2556
        %2723 = vmatpush1.msra.mxu0 %v2555
        %2724 = vmatprep.subr.mxu0 %v2552
        %2725 = vmatpush1.msra.mxu0 %v2551
        %2726 = vmatprep.subr.mxu0 %v2548
        %2727 = vmatpush1.msra.mxu0 %v2547
        %2728 = vmatprep.subr.mxu0 %v2544
        %2729 = vmatpush1.msra.mxu0 %v2543
        %2730 = vmatprep.subr.mxu0 %v2540
        %2731 = vmatpush1.msra.mxu0 %v2539
        %2732 = vmatprep.subr.mxu0 0.0
        %2733 = vmatpush2.msra.mxu0 0.0
        %2734 = vmatprep.subr.mxu0 0.0
        %2735 = vmatpush2.msra.mxu0 0.0
        %2736 = vmatprep.subr.mxu0 0.0
        %2737 = vmatpush2.msra.mxu0 0.0
        %2738 = vmatprep.subr.mxu0 0.0
        %2739 = vmatpush2.msra.mxu0 0.0
        %2740 = vmatprep.subr.mxu0 0.0
        %2741 = vmatpush2.msra.mxu0 0.0
        %2742 = vmatprep.subr.mxu0 0.0
        %2743 = vmatpush2.msra.mxu0 0.0
        %2744 = vmatprep.subr.mxu0 0.0
        %2745 = vmatpush2.msra.mxu0 0.0
        %2746 = vmatprep.subr.mxu0 0.0
        %2747 = vmatpush2.msra.mxu0 0.0
        %2748 = vmatprep.subr.mxu0 0.0
        %2749 = vmatpush2.msra.mxu0 0.0
        %2750 = vmatprep.subr.mxu0 0.0
        %2751 = vmatpush2.msra.mxu0 0.0
        %2752 = vmatprep.subr.mxu0 0.0
        %2753 = vmatpush2.msra.mxu0 0.0
        %2754 = vmatprep.subr.mxu0 0.0
        %2755 = vmatpush2.msra.mxu0 0.0
        %2756 = vmatprep.subr.mxu0 0.0
        %2757 = vmatpush2.msra.mxu0 0.0
        %2758 = vmatprep.subr.mxu0 0.0
        %2759 = vmatpush2.msra.mxu0 0.0
        %2760 = vmatprep.subr.mxu0 0.0
        %2761 = vmatpush2.msra.mxu0 0.0
        %2762 = vmatprep.subr.mxu0 0.0
        %2763 = vmatpush2.msra.mxu0 0.0
        %2764 = vmatprep.mubr.f32.mxu0 0.0
        %2765 = vmatmul.mubr.f32.gmra.mxu0 %v2535
        %v2766 = vpop.f32.mrf.mxu0
        %v2767 = vadd.f32 %v2614, %v2766
        %v2768 = vpop.f32.mrf.mxu0
        %v2769 = vadd.f32 %v2618, %v2768
        %2770 = vmatprep.mubr.f32.mxu0 0.0
        %2771 = vmatmul.mubr.f32.gmra.mxu0 %v2536
        %v2772 = vpop.f32.mrf.mxu0
        %v2773 = vadd.f32 %v2614, %v2772
        %v2774 = vpop.f32.mrf.mxu0
        %v2775 = vadd.f32 %v2618, %v2774
        %2776 = vdwg.mxu0
        %v2777 = vmul.f32 %v2690, %v2690
        %v2778 = vmul.f32 %v2692, %v2692
        %v2779 = vmul.f32 %v2767, %v2767
        %v2780 = vmul.f32 %v2769, %v2769
        %v2781 = vmul.f32 %v2696, %v2696
        %v2782 = vmul.f32 %v2698, %v2698
        %v2783 = vmul.f32 %v2773, %v2773
        %v2784 = vmul.f32 %v2775, %v2775
        %v2785 = vmul.f32 %v2690, %v2777
        %v2786 = vmul.f32 %v2692, %v2778
        %v2787 = vmul.f32 %v2767, %v2779
        %v2788 = vmul.f32 %v2769, %v2780
        %v2789 = vmul.f32 %v2696, %v2781
        %v2790 = vmul.f32 %v2698, %v2782
        %v2791 = vmul.f32 %v2773, %v2783
        %v2792 = vmul.f32 %v2775, %v2784
        %v2793 = vmul.f32 %v2785, 0.044715
        %v2794 = vmul.f32 %v2786, 0.044715
        %v2795 = vmul.f32 %v2787, 0.044715
        %v2796 = vmul.f32 %v2788, 0.044715
        %v2797 = vmul.f32 %v2789, 0.044715
        %v2798 = vmul.f32 %v2790, 0.044715
        %v2799 = vmul.f32 %v2791, 0.044715
        %v2800 = vmul.f32 %v2792, 0.044715
        %v2801 = vadd.f32 %v2690, %v2793
        %v2802 = vadd.f32 %v2692, %v2794
        %v2803 = vadd.f32 %v2767, %v2795
        %v2804 = vadd.f32 %v2769, %v2796
        %v2805 = vadd.f32 %v2696, %v2797
        %v2806 = vadd.f32 %v2698, %v2798
        %v2807 = vadd.f32 %v2773, %v2799
        %v2808 = vadd.f32 %v2775, %v2800
        %v2809 = vmul.f32 %v2801, 0.7978846
        %v2810 = vmul.f32 %v2802, 0.7978846
        %v2811 = vmul.f32 %v2803, 0.7978846
        %v2812 = vmul.f32 %v2804, 0.7978846
        %v2813 = vmul.f32 %v2805, 0.7978846
        %v2814 = vmul.f32 %v2806, 0.7978846
        %v2815 = vmul.f32 %v2807, 0.7978846
        %v2816 = vmul.f32 %v2808, 0.7978846
        %v2817 = vtanh.pop %v2809
        %v2818 = vtanh.pop %v2810
        %v2819 = vtanh.pop %v2811
        %v2820 = vtanh.pop %v2812
        %v2821 = vtanh.pop %v2813
        %v2822 = vtanh.pop %v2814
        %v2823 = vtanh.pop %v2815
        %v2824 = vtanh.pop %v2816
        %v2825 = vadd.f32 %v2817, 1.0
        %v2826 = vadd.f32 %v2818, 1.0
        %v2827 = vadd.f32 %v2819, 1.0
        %v2828 = vadd.f32 %v2820, 1.0
        %v2829 = vadd.f32 %v2821, 1.0
        %v2830 = vadd.f32 %v2822, 1.0
        %v2831 = vadd.f32 %v2823, 1.0
        %v2832 = vadd.f32 %v2824, 1.0
        %v2833 = vmul.f32 %v2825, 0.5
        %v2834 = vmul.f32 %v2826, 0.5
        %v2835 = vmul.f32 %v2827, 0.5
        %v2836 = vmul.f32 %v2828, 0.5
        %v2837 = vmul.f32 %v2829, 0.5
        %v2838 = vmul.f32 %v2830, 0.5
        %v2839 = vmul.f32 %v2831, 0.5
        %v2840 = vmul.f32 %v2832, 0.5
        %v2841 = vmul.f32 %v2690, %v2833
        %v2842 = vmul.f32 %v2692, %v2834
        %v2843 = vmul.f32 %v2767, %v2835
        %v2844 = vmul.f32 %v2769, %v2836
        %v2845 = vmul.f32 %v2696, %v2837
        %v2846 = vmul.f32 %v2698, %v2838
        %v2847 = vmul.f32 %v2773, %v2839
        %v2848 = vmul.f32 %v2775, %v2840
        %v2849 = vld [vmem:[#allocation17] sm:$0xff]
        %v2850 = vld [vmem:[#allocation17 + $0x8] sm:$0xff]
        %v2851 = vld [vmem:[#allocation17 + $0x10] sm:$0xff]
        %v2852 = vld [vmem:[#allocation17 + $0x18] sm:$0xff]
        %v2853 = vld [vmem:[#allocation17 + $0x20] sm:$0xff]
        %v2854 = vld [vmem:[#allocation17 + $0x28] sm:$0xff]
        %v2855 = vld [vmem:[#allocation17 + $0x30] sm:$0xff]
        %v2856 = vld [vmem:[#allocation17 + $0x38] sm:$0xff]
        %v2857 = vld [vmem:[#allocation17 + $0x40] sm:$0xff]
        %v2858 = vld [vmem:[#allocation17 + $0x48] sm:$0xff]
        %v2859 = vld [vmem:[#allocation17 + $0x50] sm:$0xff]
        %v2860 = vld [vmem:[#allocation17 + $0x58] sm:$0xff]
        %v2861 = vld [vmem:[#allocation17 + $0x60] sm:$0xff]
        %v2862 = vld [vmem:[#allocation17 + $0x68] sm:$0xff]
        %v2863 = vld [vmem:[#allocation17 + $0x70] sm:$0xff]
        %v2864 = vld [vmem:[#allocation17 + $0x78] sm:$0xff]
        %v2865 = vld [vmem:[#allocation17 + $0x80] sm:$0xff]
        %v2866 = vld [vmem:[#allocation17 + $0x88] sm:$0xff]
        %v2867 = vld [vmem:[#allocation17 + $0x90] sm:$0xff]
        %v2868 = vld [vmem:[#allocation17 + $0x98] sm:$0xff]
        %v2869 = vld [vmem:[#allocation17 + $0xa0] sm:$0xff]
        %v2870 = vld [vmem:[#allocation17 + $0xa8] sm:$0xff]
        %v2871 = vld [vmem:[#allocation17 + $0xb0] sm:$0xff]
        %v2872 = vld [vmem:[#allocation17 + $0xb8] sm:$0xff]
        %v2873 = vld [vmem:[#allocation17 + $0xc0] sm:$0xff]
        %v2874 = vld [vmem:[#allocation17 + $0xc8] sm:$0xff]
        %v2875 = vld [vmem:[#allocation17 + $0xd0] sm:$0xff]
        %v2876 = vld [vmem:[#allocation17 + $0xd8] sm:$0xff]
        %v2877 = vld [vmem:[#allocation17 + $0xe0] sm:$0xff]
        %v2878 = vld [vmem:[#allocation17 + $0xe8] sm:$0xff]
        %v2879 = vld [vmem:[#allocation17 + $0xf0] sm:$0xff]
        %v2880 = vld [vmem:[#allocation17 + $0xf8] sm:$0xff]
        %v2881 = vld [vmem:[#allocation17 + $0x100] sm:$0xff]
        %v2882 = vld [vmem:[#allocation17 + $0x108] sm:$0xff]
        %v2883 = vld [vmem:[#allocation17 + $0x110] sm:$0xff]
        %v2884 = vld [vmem:[#allocation17 + $0x118] sm:$0xff]
        %v2885 = vld [vmem:[#allocation17 + $0x120] sm:$0xff]
        %v2886 = vld [vmem:[#allocation17 + $0x128] sm:$0xff]
        %v2887 = vld [vmem:[#allocation17 + $0x130] sm:$0xff]
        %v2888 = vld [vmem:[#allocation17 + $0x138] sm:$0xff]
        %v2889 = vld [vmem:[#allocation17 + $0x140] sm:$0xff]
        %v2890 = vld [vmem:[#allocation17 + $0x148] sm:$0xff]
        %v2891 = vld [vmem:[#allocation17 + $0x150] sm:$0xff]
        %v2892 = vld [vmem:[#allocation17 + $0x158] sm:$0xff]
        %v2893 = vld [vmem:[#allocation17 + $0x160] sm:$0xff]
        %v2894 = vld [vmem:[#allocation17 + $0x168] sm:$0xff]
        %v2895 = vld [vmem:[#allocation17 + $0x170] sm:$0xff]
        %v2896 = vld [vmem:[#allocation17 + $0x178] sm:$0xff]
        %v2897 = vld [vmem:[#allocation17 + $0x180] sm:$0xff]
        %v2898 = vld [vmem:[#allocation17 + $0x188] sm:$0xff]
        %v2899 = vld [vmem:[#allocation17 + $0x190] sm:$0xff]
        %v2900 = vld [vmem:[#allocation17 + $0x198] sm:$0xff]
        %v2901 = vld [vmem:[#allocation17 + $0x1a0] sm:$0xff]
        %v2902 = vld [vmem:[#allocation17 + $0x1a8] sm:$0xff]
        %v2903 = vld [vmem:[#allocation17 + $0x1b0] sm:$0xff]
        %v2904 = vld [vmem:[#allocation17 + $0x1b8] sm:$0xff]
        %v2905 = vld [vmem:[#allocation17 + $0x1c0] sm:$0xff]
        %v2906 = vld [vmem:[#allocation17 + $0x1c8] sm:$0xff]
        %v2907 = vld [vmem:[#allocation17 + $0x1d0] sm:$0xff]
        %v2908 = vld [vmem:[#allocation17 + $0x1d8] sm:$0xff]
        %v2909 = vld [vmem:[#allocation17 + $0x1e0] sm:$0xff]
        %v2910 = vld [vmem:[#allocation17 + $0x1e8] sm:$0xff]
        %v2911 = vld [vmem:[#allocation17 + $0x1f0] sm:$0xff]
        %v2912 = vld [vmem:[#allocation17 + $0x1f8] sm:$0xff]
        %v2913 = vld [vmem:[%s20] sm:$0x1]
        %v2915 = vlaneseq
        %v2916 = vshrl.u32 %v2915, 7
        %v2917 = vsub.s32 0, %v2916
        %v2918 = vrot.slane %v2913, %v2917
        %2920 = vmatprep.subr.mxu0 0.0
        %2921 = vmatpush1.msra.mxu0 %v2864
        %2922 = vmatprep.subr.mxu0 0.0
        %2923 = vmatpush1.msra.mxu0 %v2863
        %2924 = vmatprep.subr.mxu0 0.0
        %2925 = vmatpush1.msra.mxu0 %v2862
        %2926 = vmatprep.subr.mxu0 0.0
        %2927 = vmatpush1.msra.mxu0 %v2861
        %2928 = vmatprep.subr.mxu0 0.0
        %2929 = vmatpush1.msra.mxu0 %v2860
        %2930 = vmatprep.subr.mxu0 0.0
        %2931 = vmatpush1.msra.mxu0 %v2859
        %2932 = vmatprep.subr.mxu0 0.0
        %2933 = vmatpush1.msra.mxu0 %v2858
        %2934 = vmatprep.subr.mxu0 0.0
        %2935 = vmatpush1.msra.mxu0 %v2857
        %2936 = vmatprep.subr.mxu0 0.0
        %2937 = vmatpush1.msra.mxu0 %v2856
        %2938 = vmatprep.subr.mxu0 0.0
        %2939 = vmatpush1.msra.mxu0 %v2855
        %2940 = vmatprep.subr.mxu0 0.0
        %2941 = vmatpush1.msra.mxu0 %v2854
        %2942 = vmatprep.subr.mxu0 0.0
        %2943 = vmatpush1.msra.mxu0 %v2853
        %2944 = vmatprep.subr.mxu0 0.0
        %2945 = vmatpush1.msra.mxu0 %v2852
        %2946 = vmatprep.subr.mxu0 0.0
        %2947 = vmatpush1.msra.mxu0 %v2851
        %2948 = vmatprep.subr.mxu0 0.0
        %2949 = vmatpush1.msra.mxu0 %v2850
        %2950 = vmatprep.subr.mxu0 0.0
        %2951 = vmatpush1.msra.mxu0 %v2849
        %2952 = vmatprep.subr.mxu0 0.0
        %2953 = vmatpush2.msra.mxu0 %v2880
        %2954 = vmatprep.subr.mxu0 0.0
        %2955 = vmatpush2.msra.mxu0 %v2879
        %2956 = vmatprep.subr.mxu0 0.0
        %2957 = vmatpush2.msra.mxu0 %v2878
        %2958 = vmatprep.subr.mxu0 0.0
        %2959 = vmatpush2.msra.mxu0 %v2877
        %2960 = vmatprep.subr.mxu0 0.0
        %2961 = vmatpush2.msra.mxu0 %v2876
        %2962 = vmatprep.subr.mxu0 0.0
        %2963 = vmatpush2.msra.mxu0 %v2875
        %2964 = vmatprep.subr.mxu0 0.0
        %2965 = vmatpush2.msra.mxu0 %v2874
        %2966 = vmatprep.subr.mxu0 0.0
        %2967 = vmatpush2.msra.mxu0 %v2873
        %2968 = vmatprep.subr.mxu0 0.0
        %2969 = vmatpush2.msra.mxu0 %v2872
        %2970 = vmatprep.subr.mxu0 0.0
        %2971 = vmatpush2.msra.mxu0 %v2871
        %2972 = vmatprep.subr.mxu0 0.0
        %2973 = vmatpush2.msra.mxu0 %v2870
        %2974 = vmatprep.subr.mxu0 0.0
        %2975 = vmatpush2.msra.mxu0 %v2869
        %2976 = vmatprep.subr.mxu0 0.0
        %2977 = vmatpush2.msra.mxu0 %v2868
        %2978 = vmatprep.subr.mxu0 0.0
        %2979 = vmatpush2.msra.mxu0 %v2867
        %2980 = vmatprep.subr.mxu0 0.0
        %2981 = vmatpush2.msra.mxu0 %v2866
        %2982 = vmatprep.subr.mxu0 0.0
        %2983 = vmatpush2.msra.mxu0 %v2865
        %2984 = vmatprep.mubr.f32.mxu0 %v2842
        %2985 = vmatmul.mubr.f32.gmra.mxu0 %v2841
        %v2986 = vpop.f32.mrf.mxu0
        %v2987 = vadd.f32 %v2918, %v2986
        %v2988 = vpop.f32.mrf.mxu0
        %2989 = vmatprep.mubr.f32.mxu0 %v2846
        %2990 = vmatmul.mubr.f32.gmra.mxu0 %v2845
        %v2991 = vpop.f32.mrf.mxu0
        %v2992 = vadd.f32 %v2918, %v2991
        %v2993 = vpop.f32.mrf.mxu0
        %2994 = vdwg.mxu0
        %2995 = vmatprep.subr.mxu0 0.0
        %2996 = vmatpush1.msra.mxu0 %v2896
        %2997 = vmatprep.subr.mxu0 0.0
        %2998 = vmatpush1.msra.mxu0 %v2895
        %2999 = vmatprep.subr.mxu0 0.0
        %3000 = vmatpush1.msra.mxu0 %v2894
        %3001 = vmatprep.subr.mxu0 0.0
        %3002 = vmatpush1.msra.mxu0 %v2893
        %3003 = vmatprep.subr.mxu0 0.0
        %3004 = vmatpush1.msra.mxu0 %v2892
        %3005 = vmatprep.subr.mxu0 0.0
        %3006 = vmatpush1.msra.mxu0 %v2891
        %3007 = vmatprep.subr.mxu0 0.0
        %3008 = vmatpush1.msra.mxu0 %v2890
        %3009 = vmatprep.subr.mxu0 0.0
        %3010 = vmatpush1.msra.mxu0 %v2889
        %3011 = vmatprep.subr.mxu0 0.0
        %3012 = vmatpush1.msra.mxu0 %v2888
        %3013 = vmatprep.subr.mxu0 0.0
        %3014 = vmatpush1.msra.mxu0 %v2887
        %3015 = vmatprep.subr.mxu0 0.0
        %3016 = vmatpush1.msra.mxu0 %v2886
        %3017 = vmatprep.subr.mxu0 0.0
        %3018 = vmatpush1.msra.mxu0 %v2885
        %3019 = vmatprep.subr.mxu0 0.0
        %3020 = vmatpush1.msra.mxu0 %v2884
        %3021 = vmatprep.subr.mxu0 0.0
        %3022 = vmatpush1.msra.mxu0 %v2883
        %3023 = vmatprep.subr.mxu0 0.0
        %3024 = vmatpush1.msra.mxu0 %v2882
        %3025 = vmatprep.subr.mxu0 0.0
        %3026 = vmatpush1.msra.mxu0 %v2881
        %3027 = vmatprep.subr.mxu0 0.0
        %3028 = vmatpush2.msra.mxu0 %v2912
        %3029 = vmatprep.subr.mxu0 0.0
        %3030 = vmatpush2.msra.mxu0 %v2911
        %3031 = vmatprep.subr.mxu0 0.0
        %3032 = vmatpush2.msra.mxu0 %v2910
        %3033 = vmatprep.subr.mxu0 0.0
        %3034 = vmatpush2.msra.mxu0 %v2909
        %3035 = vmatprep.subr.mxu0 0.0
        %3036 = vmatpush2.msra.mxu0 %v2908
        %3037 = vmatprep.subr.mxu0 0.0
        %3038 = vmatpush2.msra.mxu0 %v2907
        %3039 = vmatprep.subr.mxu0 0.0
        %3040 = vmatpush2.msra.mxu0 %v2906
        %3041 = vmatprep.subr.mxu0 0.0
        %3042 = vmatpush2.msra.mxu0 %v2905
        %3043 = vmatprep.subr.mxu0 0.0
        %3044 = vmatpush2.msra.mxu0 %v2904
        %3045 = vmatprep.subr.mxu0 0.0
        %3046 = vmatpush2.msra.mxu0 %v2903
        %3047 = vmatprep.subr.mxu0 0.0
        %3048 = vmatpush2.msra.mxu0 %v2902
        %3049 = vmatprep.subr.mxu0 0.0
        %3050 = vmatpush2.msra.mxu0 %v2901
        %3051 = vmatprep.subr.mxu0 0.0
        %3052 = vmatpush2.msra.mxu0 %v2900
        %3053 = vmatprep.subr.mxu0 0.0
        %3054 = vmatpush2.msra.mxu0 %v2899
        %3055 = vmatprep.subr.mxu0 0.0
        %3056 = vmatpush2.msra.mxu0 %v2898
        %3057 = vmatprep.subr.mxu0 0.0
        %3058 = vmatpush2.msra.mxu0 %v2897
        %3059 = vmatprep.mubr.f32.mxu0 %v2844
        %3060 = vmatmul.mubr.f32.gmra.mxu0 %v2843
        %v3061 = vpop.f32.mrf.mxu0
        %v3062 = vadd.f32 %v2987, %v3061
        %v3063 = vpop.f32.mrf.mxu0
        %3064 = vmatprep.mubr.f32.mxu0 %v2848
        %3065 = vmatmul.mubr.f32.gmra.mxu0 %v2847
        %v3066 = vpop.f32.mrf.mxu0
        %v3067 = vadd.f32 %v2992, %v3066
        %v3068 = vpop.f32.mrf.mxu0
        %3069 = vdwg.mxu0
        %v3070 = vadd.f32 %v1681, %v3062
        %v3071 = vadd.f32 %v1682, %v3067
        %v3072 = vmul.f32 %v3070, %v3070
        %v3073 = vmul.f32 %v3071, %v3071
        %v3074 = vmul.f32 %v3070, %v3072
        %v3075 = vmul.f32 %v3071, %v3073
        %v3076 = vmul.f32 %v3074, 0.044715
        %v3077 = vmul.f32 %v3075, 0.044715
        %v3078 = vadd.f32 %v3070, %v3076
        %v3079 = vadd.f32 %v3071, %v3077
        %v3080 = vmul.f32 %v3078, 0.7978846
        %v3081 = vmul.f32 %v3079, 0.7978846
        %v3082 = vtanh.pop %v3080
        %v3083 = vtanh.pop %v3081
        %v3084 = vadd.f32 %v3082, 1.0
        %v3085 = vadd.f32 %v3083, 1.0
        %v3086 = vmul.f32 %v3084, 0.5
        %v3087 = vmul.f32 %v3085, 0.5
        %v3088 = vmul.f32 %v3070, %v3086
        %v3089 = vmul.f32 %v3071, %v3087
        %3090 = vst [vmem:[%s827] sm:$0xff] %v3088
        %3091 = vst [vmem:[%s827 + $0x8] sm:$0xff] %v3089
        %s3092 = sand.u32 %s504, 1
        %s3093 = scalar_lea.sflag [#allocation4], %s3092
        %s3094 = sand.u32 %s504, 1
        %s3095 = smul.addr %s3094, 16
        %s3096 = scalar_lea.vmem [#allocation19], %s3095
        // Predicated region
        $region145: #{tpu_custom_call.1} parent=103 // pred_check
          %p3097 = pneg %p514
        $region146: #{tpu_custom_call.1} parent=103 // pred_check_branch
          %3099 = sbr.rel (%p3097) target = $region148
        $region147: #{tpu_custom_call.1} parent=103 // pred_region
          %s3101 = ssub.s32 256, 256
          %3102 = vsyncadd %s3093, %s3101
          %s3103 = smul.addr %s45, 2
          %s3104 = smul.addr %s3103, 128
          %s3105 = scalar_lea.hbm %s21, %s3104
          %s3106 = sshll.u32 %s3096, 4
          %s3107 = int_to_ptr.vmem [resolvable:$true] %s3106
          %3112 = dma.vmem_to_hbm [thread:$0]  %s3107, 256, %s3105, %s3093, 128, 128, 8
        $region148: #{tpu_custom_call.1} parent=103 // pred_fallthru
          _
      $region104: #{tpu_custom_call.1} parent=5 // pred_fallthru
        _
      %p3113 = scmp.le.s32.totalorder 2, %s40
      // Predicated region
      $region149: #{tpu_custom_call.1} parent=5 // pred_check
        %p3114 = pneg %p3113
      $region150: #{tpu_custom_call.1} parent=5 // pred_check_branch
        %3116 = sbr.rel (%p3114) target = $region152
      $region151: #{tpu_custom_call.1} parent=5 // pred_region
        %s3117 = ssub.s32 %s40, 2
        // Predicated region
        $region153: #{tpu_custom_call.1} parent=151 // pred_check
          %p3118 = pneg %p520
        $region154: #{tpu_custom_call.1} parent=151 // pred_check_branch
          %3120 = sbr.rel (%p3118) target = $region156
        $region155: #{tpu_custom_call.1} parent=151 // pred_region
          %s3121 = sand.u32 %s505, 1
          %s3122 = scalar_lea.sflag [#allocation4], %s3121
          %s3123 = sand.u32 %s505, 1
          %s3124 = smul.addr %s3123, 16
          %s3125 = scalar_lea.vmem [#allocation19], %s3124
          %3126 = dma.done %s3122, 256
        $region156: #{tpu_custom_call.1} parent=151 // pred_fallthru
          _
      $region152: #{tpu_custom_call.1} parent=5 // pred_fallthru
        _
    $region6: #{tpu_custom_call.1} parent=1 // loop_footer
      %s44 = sadd.s32 1, %s40
    $region7: #{tpu_custom_call.1} parent=1 // loop_footer_branch
      %39 = sbr.rel target = $region3
    $region8: #{tpu_custom_call.1} parent=1 // loop_exit
      _
    %3127 = vsyncpa [#allocation3], 1
    %s3128 = scalar_lea.sflag [#allocation3], 1
    %3129 = vsyncpa %s3128, 1
    %3130 = vsyncpa [#allocation6], 1
    %s3131 = scalar_lea.sflag [#allocation6], 1
    %3132 = vsyncpa %s3131, 1
    %3133 = vsyncpa [#allocation9], 1
    %3134 = vsyncpa [#allocation12], 1
    %3135 = vsyncpa [#allocation15], 1
    %3136 = vsyncpa [#allocation18], 1
    %3137 = vsyncpa [#allocation4], 1
    %s3138 = scalar_lea.sflag [#allocation4], 1
    %3139 = vsyncpa %s3138, 1

</llo_original>
